<compile_context>
chip_gen: v7x
topology: tpu7x:2x2x1
jax: 0.10.0
libtpu: 0.0.40
codegen_flags: <defaults>
</compile_context>

<pallas_src>
import functools

import jax
import jax.numpy as jnp
from jax import lax
from jax.experimental import pallas as pl
from jax.experimental.pallas import tpu as pltpu

KSIZE = 3                       # kernel_size
DILATION = 2                    # dilation
PAD = DILATION * (KSIZE // 2)   # = 2 -> "same" spatial size for odd kernel
NTAPS = KSIZE * KSIZE           # 9


def _tap_offsets():
    offs = []
    for t in range(NTAPS):
        ky, kx = divmod(t, KSIZE)
        offs.append(((ky - KSIZE // 2) * DILATION, (kx - KSIZE // 2) * DILATION))
    return offs


def _dblock_inv2_kernel(x_ref, mask_ref, w1_ref, b1_ref, w2_ref, b2_ref, o_ref,
                        *, H, W, C):
    """Fused ReLU(conv2(ReLU(conv1(x)))) for one batch element.

    x_ref   : (1, C, H*W)      input tile (spatial plane on lanes)
    mask_ref: (9, 1, H*W) f32  per-tap "same"-padding validity masks (1.0/0.0)
    w1_ref  : (9*C*C,) f32     conv1 weights in SMEM, index ((t*C+ci)*C+co)
    b1_ref  : (C,)     f32     conv1 bias in SMEM
    w2_ref  : (9*C*C,) f32     conv2 weights in SMEM
    b2_ref  : (C,)     f32     conv2 bias in SMEM
    o_ref   : (1, C, H*W)      output tile (lane-dense stores)
    """
    HW = H * W
    offs = _tap_offsets()

    # Hoist the 9 small mask rows once.
    masks = [mask_ref[t] for t in range(NTAPS)]          # each (1, HW)

    def conv_relu(rows, w_ref, b_ref):
        # rows: list of C values of shape (1, HW), f32, live in vregs.
        acc = [jnp.zeros((1, HW), dtype=jnp.float32) for _ in range(C)]
        for t, (dy, dx) in enumerate(offs):              # static, unrolled
            shift = (-(dy * W + dx)) % HW                # gather x[p + dy*W + dx]
            m_t = masks[t]
            for c_in in range(C):
                r = rows[c_in]
                if shift != 0:
                    r = pltpu.roll(r, shift, 1)          # XLU lane roll
                r = r * m_t                              # zero the OOB taps
                base = (t * C + c_in) * C
                for c_out in range(C):
                    # scalar weight from SMEM, broadcast-MAC on the VPU
                    acc[c_out] = acc[c_out] + w_ref[base + c_out] * r
        return [jnp.maximum(acc[c] + b_ref[c], 0.0) for c in range(C)]

    # Input rows: one (1, HW) lane-dense row per channel.
    x_rows = [x_ref[0, c:c + 1, :].astype(jnp.float32) for c in range(C)]

    act1_rows = conv_relu(x_rows, w1_ref, b1_ref)        # stays in vregs
    out_rows = conv_relu(act1_rows, w2_ref, b2_ref)

    for c in range(C):                                   # lane-dense stores
        o_ref[0, c:c + 1, :] = out_rows[c].astype(o_ref.dtype)


def dblock_inv2_forward(x_nchw, params):
    """Forward pass of DBlock_inv2 on NCHW input, returns NCHW output."""
    N, C, H, W = x_nchw.shape
    HW = H * W
    w1, b1 = params["w1"], params["b1"]
    w2, b2 = params["w2"], params["b2"]
    C_out = w1.shape[0]
    # The two stacked convs of DBlock_inv2 only compose if in == out channels.
    assert C_out == C and w2.shape[0] == C and w2.shape[1] == C

    # Free (row-major) reshape NCHW -> (N, C, H*W): spatial plane on lanes.
    x_flat = x_nchw.reshape(N, C, HW)

    # Host-side repack (tiny): weights flattened (ky, kx, c_in, c_out) so the
    # kernel reads scalar ((t*C + c_in)*C + c_out) from SMEM.
    w1_flat = jnp.transpose(w1, (2, 3, 1, 0)).reshape(-1).astype(jnp.float32)
    w2_flat = jnp.transpose(w2, (2, 3, 1, 0)).reshape(-1).astype(jnp.float32)
    b1_s = b1.astype(jnp.float32)
    b2_s = b2.astype(jnp.float32)

    # Static per-tap validity masks implementing the "same" zero padding for
    # the lane-rolled taps (built once on host; no in-kernel iota/div).
    h_idx = jnp.arange(H)[:, None]
    w_idx = jnp.arange(W)[None, :]
    mask_rows = []
    for t in range(NTAPS):
        ky, kx = divmod(t, KSIZE)
        dy = (ky - KSIZE // 2) * DILATION
        dx = (kx - KSIZE // 2) * DILATION
        valid = ((h_idx + dy >= 0) & (h_idx + dy < H) &
                 (w_idx + dx >= 0) & (w_idx + dx < W))
        mask_rows.append(valid.reshape(1, HW))
    mask_arr = jnp.stack(mask_rows, axis=0).astype(jnp.float32)   # (9, 1, HW)

    kernel = functools.partial(_dblock_inv2_kernel, H=H, W=W, C=C)

    itemsize = jnp.dtype(x_nchw.dtype).itemsize
    flops = 2 * (2 * N * HW * NTAPS * C * C_out)          # two dilated convs
    bytes_accessed = (x_nchw.size + N * C_out * HW) * itemsize \
        + (w1_flat.size + w2_flat.size + b1.size + b2.size + mask_arr.size) * 4

    out_flat = pl.pallas_call(
        kernel,
        out_shape=jax.ShapeDtypeStruct((N, C_out, HW), x_nchw.dtype),
        grid_spec=pltpu.PrefetchScalarGridSpec(
            num_scalar_prefetch=0,
            grid=(N,),
            in_specs=[
                pl.BlockSpec((1, C, HW), lambda n: (n, 0, 0)),
                pl.BlockSpec((NTAPS, 1, HW), lambda n: (0, 0, 0)),
                pl.BlockSpec(memory_space=pltpu.MemorySpace.SMEM),
                pl.BlockSpec(memory_space=pltpu.MemorySpace.SMEM),
                pl.BlockSpec(memory_space=pltpu.MemorySpace.SMEM),
                pl.BlockSpec(memory_space=pltpu.MemorySpace.SMEM),
            ],
            out_specs=pl.BlockSpec((1, C_out, HW), lambda n: (n, 0, 0)),
        ),
        compiler_params=pltpu.CompilerParams(
            dimension_semantics=("parallel",)),
        cost_estimate=pl.CostEstimate(
            flops=flops, transcendentals=0, bytes_accessed=bytes_accessed),
    )(x_flat, mask_arr, w1_flat, b1_s, w2_flat, b2_s)

    # Free (row-major compatible) reshape: (N, C, H*W) -> (N, C, H, W).
    return out_flat.reshape(N, C_out, H, W)


def _reference_forward(x_nchw, params):
    """Pure-JAX reference using lax.conv_general_dilated."""
    def conv(x, w, b):
        y = lax.conv_general_dilated(
            x, w, window_strides=(1, 1),
            padding=((PAD, PAD), (PAD, PAD)),
            rhs_dilation=(DILATION, DILATION),
            dimension_numbers=("NCHW", "OIHW", "NCHW"))
        return jnp.maximum(y + b[None, :, None, None], 0.0)
    x = conv(x_nchw, params["w1"], params["b1"])
    x = conv(x, params["w2"], params["b2"])
    return x


if __name__ == "__main__":
    N, C, H, W = 2, 4, 16, 16
    key = jax.random.PRNGKey(0)
    kx, k1, k2, k3, k4 = jax.random.split(key, 5)

    x = jax.random.normal(kx, (N, C, H, W), dtype=jnp.float32)
    params = {
        "w1": 0.1 * jax.random.normal(k1, (C, C, KSIZE, KSIZE), dtype=jnp.float32),
        "b1": 0.1 * jax.random.normal(k2, (C,), dtype=jnp.float32),
        "w2": 0.1 * jax.random.normal(k3, (C, C, KSIZE, KSIZE), dtype=jnp.float32),
        "b2": 0.1 * jax.random.normal(k4, (C,), dtype=jnp.float32),
    }

    out = jax.block_until_ready(dblock_inv2_forward(x, params))
    ref = jax.block_until_ready(_reference_forward(x, params))

    assert out.shape == (N, C, H, W)
    assert jnp.allclose(out, ref, atol=1e-4, rtol=1e-4), "mismatch vs reference conv"
    print("KERNEL_OK")
</pallas_src>

<mosaic_0001>
module attributes {stable_mosaic.version = 11 : i64} {
  func.func @_dblock_inv2_kernel(%arg0: i32, %arg1: memref<1x4x256xf32, #tpu.memory_space<vmem>>, %arg2: memref<9x1x256xf32, #tpu.memory_space<vmem>>, %arg3: memref<144xf32, #tpu.memory_space<smem>>, %arg4: memref<4xf32, #tpu.memory_space<smem>>, %arg5: memref<144xf32, #tpu.memory_space<smem>>, %arg6: memref<4xf32, #tpu.memory_space<smem>>, %arg7: memref<1x4x256xf32, #tpu.memory_space<vmem>>) attributes {dimension_semantics = [#tpu.dimension_semantics<parallel>], iteration_bounds = array<i64: 2>, scalar_prefetch = 0 : i64, scratch_operands = 0 : i64, tpu.core_type = #tpu.core_type<tc>, window_params = [{transform_indices = @transform_0, window_bounds = array<i64: 1, 4, 256>}, {pipeline_mode = #tpu.pipeline_mode<synchronous>, transform_indices = @transform_1, window_bounds = array<i64: 9, 1, 256>}, {transform_indices = @transform_2, window_bounds = array<i64: 144>}, {transform_indices = @transform_3, window_bounds = array<i64: 4>}, {transform_indices = @transform_4, window_bounds = array<i64: 144>}, {transform_indices = @transform_5, window_bounds = array<i64: 4>}, {transform_indices = @transform_6, window_bounds = array<i64: 1, 4, 256>}]} {
    %c0 = arith.constant 0 : index
    %c0_0 = arith.constant 0 : index
    %c0_1 = arith.constant 0 : index
    %0 = vector.load %arg2[%c0, %c0_0, %c0_1] : memref<9x1x256xf32, #tpu.memory_space<vmem>>, vector<1x1x256xf32>
    %1 = vector.shape_cast %0 : vector<1x1x256xf32> to vector<1x256xf32>
    %c1 = arith.constant 1 : index
    %c0_2 = arith.constant 0 : index
    %c0_3 = arith.constant 0 : index
    %2 = vector.load %arg2[%c1, %c0_2, %c0_3] : memref<9x1x256xf32, #tpu.memory_space<vmem>>, vector<1x1x256xf32>
    %3 = vector.shape_cast %2 : vector<1x1x256xf32> to vector<1x256xf32>
    %c2 = arith.constant 2 : index
    %c0_4 = arith.constant 0 : index
    %c0_5 = arith.constant 0 : index
    %4 = vector.load %arg2[%c2, %c0_4, %c0_5] : memref<9x1x256xf32, #tpu.memory_space<vmem>>, vector<1x1x256xf32>
    %5 = vector.shape_cast %4 : vector<1x1x256xf32> to vector<1x256xf32>
    %c3 = arith.constant 3 : index
    %c0_6 = arith.constant 0 : index
    %c0_7 = arith.constant 0 : index
    %6 = vector.load %arg2[%c3, %c0_6, %c0_7] : memref<9x1x256xf32, #tpu.memory_space<vmem>>, vector<1x1x256xf32>
    %7 = vector.shape_cast %6 : vector<1x1x256xf32> to vector<1x256xf32>
    %c4 = arith.constant 4 : index
    %c0_8 = arith.constant 0 : index
    %c0_9 = arith.constant 0 : index
    %8 = vector.load %arg2[%c4, %c0_8, %c0_9] : memref<9x1x256xf32, #tpu.memory_space<vmem>>, vector<1x1x256xf32>
    %9 = vector.shape_cast %8 : vector<1x1x256xf32> to vector<1x256xf32>
    %c5 = arith.constant 5 : index
    %c0_10 = arith.constant 0 : index
    %c0_11 = arith.constant 0 : index
    %10 = vector.load %arg2[%c5, %c0_10, %c0_11] : memref<9x1x256xf32, #tpu.memory_space<vmem>>, vector<1x1x256xf32>
    %11 = vector.shape_cast %10 : vector<1x1x256xf32> to vector<1x256xf32>
    %c6 = arith.constant 6 : index
    %c0_12 = arith.constant 0 : index
    %c0_13 = arith.constant 0 : index
    %12 = vector.load %arg2[%c6, %c0_12, %c0_13] : memref<9x1x256xf32, #tpu.memory_space<vmem>>, vector<1x1x256xf32>
    %13 = vector.shape_cast %12 : vector<1x1x256xf32> to vector<1x256xf32>
    %c7 = arith.constant 7 : index
    %c0_14 = arith.constant 0 : index
    %c0_15 = arith.constant 0 : index
    %14 = vector.load %arg2[%c7, %c0_14, %c0_15] : memref<9x1x256xf32, #tpu.memory_space<vmem>>, vector<1x1x256xf32>
    %15 = vector.shape_cast %14 : vector<1x1x256xf32> to vector<1x256xf32>
    %c8 = arith.constant 8 : index
    %c0_16 = arith.constant 0 : index
    %c0_17 = arith.constant 0 : index
    %16 = vector.load %arg2[%c8, %c0_16, %c0_17] : memref<9x1x256xf32, #tpu.memory_space<vmem>>, vector<1x1x256xf32>
    %17 = vector.shape_cast %16 : vector<1x1x256xf32> to vector<1x256xf32>
    %c0_18 = arith.constant 0 : index
    %c0_19 = arith.constant 0 : index
    %c0_20 = arith.constant 0 : index
    %18 = vector.load %arg1[%c0_18, %c0_19, %c0_20] : memref<1x4x256xf32, #tpu.memory_space<vmem>>, vector<1x1x256xf32>
    %19 = vector.shape_cast %18 : vector<1x1x256xf32> to vector<1x256xf32>
    %c0_21 = arith.constant 0 : index
    %c1_22 = arith.constant 1 : index
    %c0_23 = arith.constant 0 : index
    %20 = vector.load %arg1[%c0_21, %c1_22, %c0_23] : memref<1x4x256xf32, #tpu.memory_space<vmem>>, vector<1x1x256xf32>
    %21 = vector.shape_cast %20 : vector<1x1x256xf32> to vector<1x256xf32>
    %c0_24 = arith.constant 0 : index
    %c2_25 = arith.constant 2 : index
    %c0_26 = arith.constant 0 : index
    %22 = vector.load %arg1[%c0_24, %c2_25, %c0_26] : memref<1x4x256xf32, #tpu.memory_space<vmem>>, vector<1x1x256xf32>
    %23 = vector.shape_cast %22 : vector<1x1x256xf32> to vector<1x256xf32>
    %c0_27 = arith.constant 0 : index
    %c3_28 = arith.constant 3 : index
    %c0_29 = arith.constant 0 : index
    %24 = vector.load %arg1[%c0_27, %c3_28, %c0_29] : memref<1x4x256xf32, #tpu.memory_space<vmem>>, vector<1x1x256xf32>
    %25 = vector.shape_cast %24 : vector<1x1x256xf32> to vector<1x256xf32>
    %cst = arith.constant 0.000000e+00 : f32
    %26 = vector.broadcast %cst : f32 to vector<1x256xf32>
    %cst_30 = arith.constant 0.000000e+00 : f32
    %27 = vector.broadcast %cst_30 : f32 to vector<1x256xf32>
    %cst_31 = arith.constant 0.000000e+00 : f32
    %28 = vector.broadcast %cst_31 : f32 to vector<1x256xf32>
    %cst_32 = arith.constant 0.000000e+00 : f32
    %29 = vector.broadcast %cst_32 : f32 to vector<1x256xf32>
    %c34_i32 = arith.constant 34 : i32
    %30 = tpu.dynamic_rotate %19 by %c34_i32 dim 1 : vector<1x256xf32>, i32 -> vector<1x256xf32>
    %31 = arith.mulf %30, %1 : vector<1x256xf32>
    %c0_33 = arith.constant 0 : index
    %32 = memref.load %arg3[%c0_33] : memref<144xf32, #tpu.memory_space<smem>>
    %33 = vector.broadcast %32 : f32 to vector<1x256xf32>
    %34 = arith.mulf %33, %31 : vector<1x256xf32>
    %35 = arith.addf %26, %34 : vector<1x256xf32>
    %c1_34 = arith.constant 1 : index
    %36 = memref.load %arg3[%c1_34] : memref<144xf32, #tpu.memory_space<smem>>
    %37 = vector.broadcast %36 : f32 to vector<1x256xf32>
    %38 = arith.mulf %37, %31 : vector<1x256xf32>
    %39 = arith.addf %27, %38 : vector<1x256xf32>
    %c2_35 = arith.constant 2 : index
    %40 = memref.load %arg3[%c2_35] : memref<144xf32, #tpu.memory_space<smem>>
    %41 = vector.broadcast %40 : f32 to vector<1x256xf32>
    %42 = arith.mulf %41, %31 : vector<1x256xf32>
    %43 = arith.addf %28, %42 : vector<1x256xf32>
    %c3_36 = arith.constant 3 : index
    %44 = memref.load %arg3[%c3_36] : memref<144xf32, #tpu.memory_space<smem>>
    %45 = vector.broadcast %44 : f32 to vector<1x256xf32>
    %46 = arith.mulf %45, %31 : vector<1x256xf32>
    %47 = arith.addf %29, %46 : vector<1x256xf32>
    %c34_i32_37 = arith.constant 34 : i32
    %48 = tpu.dynamic_rotate %21 by %c34_i32_37 dim 1 : vector<1x256xf32>, i32 -> vector<1x256xf32>
    %49 = arith.mulf %48, %1 : vector<1x256xf32>
    %c4_38 = arith.constant 4 : index
    %50 = memref.load %arg3[%c4_38] : memref<144xf32, #tpu.memory_space<smem>>
    %51 = vector.broadcast %50 : f32 to vector<1x256xf32>
    %52 = arith.mulf %51, %49 : vector<1x256xf32>
    %53 = arith.addf %35, %52 : vector<1x256xf32>
    %c5_39 = arith.constant 5 : index
    %54 = memref.load %arg3[%c5_39] : memref<144xf32, #tpu.memory_space<smem>>
    %55 = vector.broadcast %54 : f32 to vector<1x256xf32>
    %56 = arith.mulf %55, %49 : vector<1x256xf32>
    %57 = arith.addf %39, %56 : vector<1x256xf32>
    %c6_40 = arith.constant 6 : index
    %58 = memref.load %arg3[%c6_40] : memref<144xf32, #tpu.memory_space<smem>>
    %59 = vector.broadcast %58 : f32 to vector<1x256xf32>
    %60 = arith.mulf %59, %49 : vector<1x256xf32>
    %61 = arith.addf %43, %60 : vector<1x256xf32>
    %c7_41 = arith.constant 7 : index
    %62 = memref.load %arg3[%c7_41] : memref<144xf32, #tpu.memory_space<smem>>
    %63 = vector.broadcast %62 : f32 to vector<1x256xf32>
    %64 = arith.mulf %63, %49 : vector<1x256xf32>
    %65 = arith.addf %47, %64 : vector<1x256xf32>
    %c34_i32_42 = arith.constant 34 : i32
    %66 = tpu.dynamic_rotate %23 by %c34_i32_42 dim 1 : vector<1x256xf32>, i32 -> vector<1x256xf32>
    %67 = arith.mulf %66, %1 : vector<1x256xf32>
    %c8_43 = arith.constant 8 : index
    %68 = memref.load %arg3[%c8_43] : memref<144xf32, #tpu.memory_space<smem>>
    %69 = vector.broadcast %68 : f32 to vector<1x256xf32>
    %70 = arith.mulf %69, %67 : vector<1x256xf32>
    %71 = arith.addf %53, %70 : vector<1x256xf32>
    %c9 = arith.constant 9 : index
    %72 = memref.load %arg3[%c9] : memref<144xf32, #tpu.memory_space<smem>>
    %73 = vector.broadcast %72 : f32 to vector<1x256xf32>
    %74 = arith.mulf %73, %67 : vector<1x256xf32>
    %75 = arith.addf %57, %74 : vector<1x256xf32>
    %c10 = arith.constant 10 : index
    %76 = memref.load %arg3[%c10] : memref<144xf32, #tpu.memory_space<smem>>
    %77 = vector.broadcast %76 : f32 to vector<1x256xf32>
    %78 = arith.mulf %77, %67 : vector<1x256xf32>
    %79 = arith.addf %61, %78 : vector<1x256xf32>
    %c11 = arith.constant 11 : index
    %80 = memref.load %arg3[%c11] : memref<144xf32, #tpu.memory_space<smem>>
    %81 = vector.broadcast %80 : f32 to vector<1x256xf32>
    %82 = arith.mulf %81, %67 : vector<1x256xf32>
    %83 = arith.addf %65, %82 : vector<1x256xf32>
    %c34_i32_44 = arith.constant 34 : i32
    %84 = tpu.dynamic_rotate %25 by %c34_i32_44 dim 1 : vector<1x256xf32>, i32 -> vector<1x256xf32>
    %85 = arith.mulf %84, %1 : vector<1x256xf32>
    %c12 = arith.constant 12 : index
    %86 = memref.load %arg3[%c12] : memref<144xf32, #tpu.memory_space<smem>>
    %87 = vector.broadcast %86 : f32 to vector<1x256xf32>
    %88 = arith.mulf %87, %85 : vector<1x256xf32>
    %89 = arith.addf %71, %88 : vector<1x256xf32>
    %c13 = arith.constant 13 : index
    %90 = memref.load %arg3[%c13] : memref<144xf32, #tpu.memory_space<smem>>
    %91 = vector.broadcast %90 : f32 to vector<1x256xf32>
    %92 = arith.mulf %91, %85 : vector<1x256xf32>
    %93 = arith.addf %75, %92 : vector<1x256xf32>
    %c14 = arith.constant 14 : index
    %94 = memref.load %arg3[%c14] : memref<144xf32, #tpu.memory_space<smem>>
    %95 = vector.broadcast %94 : f32 to vector<1x256xf32>
    %96 = arith.mulf %95, %85 : vector<1x256xf32>
    %97 = arith.addf %79, %96 : vector<1x256xf32>
    %c15 = arith.constant 15 : index
    %98 = memref.load %arg3[%c15] : memref<144xf32, #tpu.memory_space<smem>>
    %99 = vector.broadcast %98 : f32 to vector<1x256xf32>
    %100 = arith.mulf %99, %85 : vector<1x256xf32>
    %101 = arith.addf %83, %100 : vector<1x256xf32>
    %c32_i32 = arith.constant 32 : i32
    %102 = tpu.dynamic_rotate %19 by %c32_i32 dim 1 : vector<1x256xf32>, i32 -> vector<1x256xf32>
    %103 = arith.mulf %102, %3 : vector<1x256xf32>
    %c16 = arith.constant 16 : index
    %104 = memref.load %arg3[%c16] : memref<144xf32, #tpu.memory_space<smem>>
    %105 = vector.broadcast %104 : f32 to vector<1x256xf32>
    %106 = arith.mulf %105, %103 : vector<1x256xf32>
    %107 = arith.addf %89, %106 : vector<1x256xf32>
    %c17 = arith.constant 17 : index
    %108 = memref.load %arg3[%c17] : memref<144xf32, #tpu.memory_space<smem>>
    %109 = vector.broadcast %108 : f32 to vector<1x256xf32>
    %110 = arith.mulf %109, %103 : vector<1x256xf32>
    %111 = arith.addf %93, %110 : vector<1x256xf32>
    %c18 = arith.constant 18 : index
    %112 = memref.load %arg3[%c18] : memref<144xf32, #tpu.memory_space<smem>>
    %113 = vector.broadcast %112 : f32 to vector<1x256xf32>
    %114 = arith.mulf %113, %103 : vector<1x256xf32>
    %115 = arith.addf %97, %114 : vector<1x256xf32>
    %c19 = arith.constant 19 : index
    %116 = memref.load %arg3[%c19] : memref<144xf32, #tpu.memory_space<smem>>
    %117 = vector.broadcast %116 : f32 to vector<1x256xf32>
    %118 = arith.mulf %117, %103 : vector<1x256xf32>
    %119 = arith.addf %101, %118 : vector<1x256xf32>
    %c32_i32_45 = arith.constant 32 : i32
    %120 = tpu.dynamic_rotate %21 by %c32_i32_45 dim 1 : vector<1x256xf32>, i32 -> vector<1x256xf32>
    %121 = arith.mulf %120, %3 : vector<1x256xf32>
    %c20 = arith.constant 20 : index
    %122 = memref.load %arg3[%c20] : memref<144xf32, #tpu.memory_space<smem>>
    %123 = vector.broadcast %122 : f32 to vector<1x256xf32>
    %124 = arith.mulf %123, %121 : vector<1x256xf32>
    %125 = arith.addf %107, %124 : vector<1x256xf32>
    %c21 = arith.constant 21 : index
    %126 = memref.load %arg3[%c21] : memref<144xf32, #tpu.memory_space<smem>>
    %127 = vector.broadcast %126 : f32 to vector<1x256xf32>
    %128 = arith.mulf %127, %121 : vector<1x256xf32>
    %129 = arith.addf %111, %128 : vector<1x256xf32>
    %c22 = arith.constant 22 : index
    %130 = memref.load %arg3[%c22] : memref<144xf32, #tpu.memory_space<smem>>
    %131 = vector.broadcast %130 : f32 to vector<1x256xf32>
    %132 = arith.mulf %131, %121 : vector<1x256xf32>
    %133 = arith.addf %115, %132 : vector<1x256xf32>
    %c23 = arith.constant 23 : index
    %134 = memref.load %arg3[%c23] : memref<144xf32, #tpu.memory_space<smem>>
    %135 = vector.broadcast %134 : f32 to vector<1x256xf32>
    %136 = arith.mulf %135, %121 : vector<1x256xf32>
    %137 = arith.addf %119, %136 : vector<1x256xf32>
    %c32_i32_46 = arith.constant 32 : i32
    %138 = tpu.dynamic_rotate %23 by %c32_i32_46 dim 1 : vector<1x256xf32>, i32 -> vector<1x256xf32>
    %139 = arith.mulf %138, %3 : vector<1x256xf32>
    %c24 = arith.constant 24 : index
    %140 = memref.load %arg3[%c24] : memref<144xf32, #tpu.memory_space<smem>>
    %141 = vector.broadcast %140 : f32 to vector<1x256xf32>
    %142 = arith.mulf %141, %139 : vector<1x256xf32>
    %143 = arith.addf %125, %142 : vector<1x256xf32>
    %c25 = arith.constant 25 : index
    %144 = memref.load %arg3[%c25] : memref<144xf32, #tpu.memory_space<smem>>
    %145 = vector.broadcast %144 : f32 to vector<1x256xf32>
    %146 = arith.mulf %145, %139 : vector<1x256xf32>
    %147 = arith.addf %129, %146 : vector<1x256xf32>
    %c26 = arith.constant 26 : index
    %148 = memref.load %arg3[%c26] : memref<144xf32, #tpu.memory_space<smem>>
    %149 = vector.broadcast %148 : f32 to vector<1x256xf32>
    %150 = arith.mulf %149, %139 : vector<1x256xf32>
    %151 = arith.addf %133, %150 : vector<1x256xf32>
    %c27 = arith.constant 27 : index
    %152 = memref.load %arg3[%c27] : memref<144xf32, #tpu.memory_space<smem>>
    %153 = vector.broadcast %152 : f32 to vector<1x256xf32>
    %154 = arith.mulf %153, %139 : vector<1x256xf32>
    %155 = arith.addf %137, %154 : vector<1x256xf32>
    %c32_i32_47 = arith.constant 32 : i32
    %156 = tpu.dynamic_rotate %25 by %c32_i32_47 dim 1 : vector<1x256xf32>, i32 -> vector<1x256xf32>
    %157 = arith.mulf %156, %3 : vector<1x256xf32>
    %c28 = arith.constant 28 : index
    %158 = memref.load %arg3[%c28] : memref<144xf32, #tpu.memory_space<smem>>
    %159 = vector.broadcast %158 : f32 to vector<1x256xf32>
    %160 = arith.mulf %159, %157 : vector<1x256xf32>
    %161 = arith.addf %143, %160 : vector<1x256xf32>
    %c29 = arith.constant 29 : index
    %162 = memref.load %arg3[%c29] : memref<144xf32, #tpu.memory_space<smem>>
    %163 = vector.broadcast %162 : f32 to vector<1x256xf32>
    %164 = arith.mulf %163, %157 : vector<1x256xf32>
    %165 = arith.addf %147, %164 : vector<1x256xf32>
    %c30 = arith.constant 30 : index
    %166 = memref.load %arg3[%c30] : memref<144xf32, #tpu.memory_space<smem>>
    %167 = vector.broadcast %166 : f32 to vector<1x256xf32>
    %168 = arith.mulf %167, %157 : vector<1x256xf32>
    %169 = arith.addf %151, %168 : vector<1x256xf32>
    %c31 = arith.constant 31 : index
    %170 = memref.load %arg3[%c31] : memref<144xf32, #tpu.memory_space<smem>>
    %171 = vector.broadcast %170 : f32 to vector<1x256xf32>
    %172 = arith.mulf %171, %157 : vector<1x256xf32>
    %173 = arith.addf %155, %172 : vector<1x256xf32>
    %c30_i32 = arith.constant 30 : i32
    %174 = tpu.dynamic_rotate %19 by %c30_i32 dim 1 : vector<1x256xf32>, i32 -> vector<1x256xf32>
    %175 = arith.mulf %174, %5 : vector<1x256xf32>
    %c32 = arith.constant 32 : index
    %176 = memref.load %arg3[%c32] : memref<144xf32, #tpu.memory_space<smem>>
    %177 = vector.broadcast %176 : f32 to vector<1x256xf32>
    %178 = arith.mulf %177, %175 : vector<1x256xf32>
    %179 = arith.addf %161, %178 : vector<1x256xf32>
    %c33 = arith.constant 33 : index
    %180 = memref.load %arg3[%c33] : memref<144xf32, #tpu.memory_space<smem>>
    %181 = vector.broadcast %180 : f32 to vector<1x256xf32>
    %182 = arith.mulf %181, %175 : vector<1x256xf32>
    %183 = arith.addf %165, %182 : vector<1x256xf32>
    %c34 = arith.constant 34 : index
    %184 = memref.load %arg3[%c34] : memref<144xf32, #tpu.memory_space<smem>>
    %185 = vector.broadcast %184 : f32 to vector<1x256xf32>
    %186 = arith.mulf %185, %175 : vector<1x256xf32>
    %187 = arith.addf %169, %186 : vector<1x256xf32>
    %c35 = arith.constant 35 : index
    %188 = memref.load %arg3[%c35] : memref<144xf32, #tpu.memory_space<smem>>
    %189 = vector.broadcast %188 : f32 to vector<1x256xf32>
    %190 = arith.mulf %189, %175 : vector<1x256xf32>
    %191 = arith.addf %173, %190 : vector<1x256xf32>
    %c30_i32_48 = arith.constant 30 : i32
    %192 = tpu.dynamic_rotate %21 by %c30_i32_48 dim 1 : vector<1x256xf32>, i32 -> vector<1x256xf32>
    %193 = arith.mulf %192, %5 : vector<1x256xf32>
    %c36 = arith.constant 36 : index
    %194 = memref.load %arg3[%c36] : memref<144xf32, #tpu.memory_space<smem>>
    %195 = vector.broadcast %194 : f32 to vector<1x256xf32>
    %196 = arith.mulf %195, %193 : vector<1x256xf32>
    %197 = arith.addf %179, %196 : vector<1x256xf32>
    %c37 = arith.constant 37 : index
    %198 = memref.load %arg3[%c37] : memref<144xf32, #tpu.memory_space<smem>>
    %199 = vector.broadcast %198 : f32 to vector<1x256xf32>
    %200 = arith.mulf %199, %193 : vector<1x256xf32>
    %201 = arith.addf %183, %200 : vector<1x256xf32>
    %c38 = arith.constant 38 : index
    %202 = memref.load %arg3[%c38] : memref<144xf32, #tpu.memory_space<smem>>
    %203 = vector.broadcast %202 : f32 to vector<1x256xf32>
    %204 = arith.mulf %203, %193 : vector<1x256xf32>
    %205 = arith.addf %187, %204 : vector<1x256xf32>
    %c39 = arith.constant 39 : index
    %206 = memref.load %arg3[%c39] : memref<144xf32, #tpu.memory_space<smem>>
    %207 = vector.broadcast %206 : f32 to vector<1x256xf32>
    %208 = arith.mulf %207, %193 : vector<1x256xf32>
    %209 = arith.addf %191, %208 : vector<1x256xf32>
    %c30_i32_49 = arith.constant 30 : i32
    %210 = tpu.dynamic_rotate %23 by %c30_i32_49 dim 1 : vector<1x256xf32>, i32 -> vector<1x256xf32>
    %211 = arith.mulf %210, %5 : vector<1x256xf32>
    %c40 = arith.constant 40 : index
    %212 = memref.load %arg3[%c40] : memref<144xf32, #tpu.memory_space<smem>>
    %213 = vector.broadcast %212 : f32 to vector<1x256xf32>
    %214 = arith.mulf %213, %211 : vector<1x256xf32>
    %215 = arith.addf %197, %214 : vector<1x256xf32>
    %c41 = arith.constant 41 : index
    %216 = memref.load %arg3[%c41] : memref<144xf32, #tpu.memory_space<smem>>
    %217 = vector.broadcast %216 : f32 to vector<1x256xf32>
    %218 = arith.mulf %217, %211 : vector<1x256xf32>
    %219 = arith.addf %201, %218 : vector<1x256xf32>
    %c42 = arith.constant 42 : index
    %220 = memref.load %arg3[%c42] : memref<144xf32, #tpu.memory_space<smem>>
    %221 = vector.broadcast %220 : f32 to vector<1x256xf32>
    %222 = arith.mulf %221, %211 : vector<1x256xf32>
    %223 = arith.addf %205, %222 : vector<1x256xf32>
    %c43 = arith.constant 43 : index
    %224 = memref.load %arg3[%c43] : memref<144xf32, #tpu.memory_space<smem>>
    %225 = vector.broadcast %224 : f32 to vector<1x256xf32>
    %226 = arith.mulf %225, %211 : vector<1x256xf32>
    %227 = arith.addf %209, %226 : vector<1x256xf32>
    %c30_i32_50 = arith.constant 30 : i32
    %228 = tpu.dynamic_rotate %25 by %c30_i32_50 dim 1 : vector<1x256xf32>, i32 -> vector<1x256xf32>
    %229 = arith.mulf %228, %5 : vector<1x256xf32>
    %c44 = arith.constant 44 : index
    %230 = memref.load %arg3[%c44] : memref<144xf32, #tpu.memory_space<smem>>
    %231 = vector.broadcast %230 : f32 to vector<1x256xf32>
    %232 = arith.mulf %231, %229 : vector<1x256xf32>
    %233 = arith.addf %215, %232 : vector<1x256xf32>
    %c45 = arith.constant 45 : index
    %234 = memref.load %arg3[%c45] : memref<144xf32, #tpu.memory_space<smem>>
    %235 = vector.broadcast %234 : f32 to vector<1x256xf32>
    %236 = arith.mulf %235, %229 : vector<1x256xf32>
    %237 = arith.addf %219, %236 : vector<1x256xf32>
    %c46 = arith.constant 46 : index
    %238 = memref.load %arg3[%c46] : memref<144xf32, #tpu.memory_space<smem>>
    %239 = vector.broadcast %238 : f32 to vector<1x256xf32>
    %240 = arith.mulf %239, %229 : vector<1x256xf32>
    %241 = arith.addf %223, %240 : vector<1x256xf32>
    %c47 = arith.constant 47 : index
    %242 = memref.load %arg3[%c47] : memref<144xf32, #tpu.memory_space<smem>>
    %243 = vector.broadcast %242 : f32 to vector<1x256xf32>
    %244 = arith.mulf %243, %229 : vector<1x256xf32>
    %245 = arith.addf %227, %244 : vector<1x256xf32>
    %c2_i32 = arith.constant 2 : i32
    %246 = tpu.dynamic_rotate %19 by %c2_i32 dim 1 : vector<1x256xf32>, i32 -> vector<1x256xf32>
    %247 = arith.mulf %246, %7 : vector<1x256xf32>
    %c48 = arith.constant 48 : index
    %248 = memref.load %arg3[%c48] : memref<144xf32, #tpu.memory_space<smem>>
    %249 = vector.broadcast %248 : f32 to vector<1x256xf32>
    %250 = arith.mulf %249, %247 : vector<1x256xf32>
    %251 = arith.addf %233, %250 : vector<1x256xf32>
    %c49 = arith.constant 49 : index
    %252 = memref.load %arg3[%c49] : memref<144xf32, #tpu.memory_space<smem>>
    %253 = vector.broadcast %252 : f32 to vector<1x256xf32>
    %254 = arith.mulf %253, %247 : vector<1x256xf32>
    %255 = arith.addf %237, %254 : vector<1x256xf32>
    %c50 = arith.constant 50 : index
    %256 = memref.load %arg3[%c50] : memref<144xf32, #tpu.memory_space<smem>>
    %257 = vector.broadcast %256 : f32 to vector<1x256xf32>
    %258 = arith.mulf %257, %247 : vector<1x256xf32>
    %259 = arith.addf %241, %258 : vector<1x256xf32>
    %c51 = arith.constant 51 : index
    %260 = memref.load %arg3[%c51] : memref<144xf32, #tpu.memory_space<smem>>
    %261 = vector.broadcast %260 : f32 to vector<1x256xf32>
    %262 = arith.mulf %261, %247 : vector<1x256xf32>
    %263 = arith.addf %245, %262 : vector<1x256xf32>
    %c2_i32_51 = arith.constant 2 : i32
    %264 = tpu.dynamic_rotate %21 by %c2_i32_51 dim 1 : vector<1x256xf32>, i32 -> vector<1x256xf32>
    %265 = arith.mulf %264, %7 : vector<1x256xf32>
    %c52 = arith.constant 52 : index
    %266 = memref.load %arg3[%c52] : memref<144xf32, #tpu.memory_space<smem>>
    %267 = vector.broadcast %266 : f32 to vector<1x256xf32>
    %268 = arith.mulf %267, %265 : vector<1x256xf32>
    %269 = arith.addf %251, %268 : vector<1x256xf32>
    %c53 = arith.constant 53 : index
    %270 = memref.load %arg3[%c53] : memref<144xf32, #tpu.memory_space<smem>>
    %271 = vector.broadcast %270 : f32 to vector<1x256xf32>
    %272 = arith.mulf %271, %265 : vector<1x256xf32>
    %273 = arith.addf %255, %272 : vector<1x256xf32>
    %c54 = arith.constant 54 : index
    %274 = memref.load %arg3[%c54] : memref<144xf32, #tpu.memory_space<smem>>
    %275 = vector.broadcast %274 : f32 to vector<1x256xf32>
    %276 = arith.mulf %275, %265 : vector<1x256xf32>
    %277 = arith.addf %259, %276 : vector<1x256xf32>
    %c55 = arith.constant 55 : index
    %278 = memref.load %arg3[%c55] : memref<144xf32, #tpu.memory_space<smem>>
    %279 = vector.broadcast %278 : f32 to vector<1x256xf32>
    %280 = arith.mulf %279, %265 : vector<1x256xf32>
    %281 = arith.addf %263, %280 : vector<1x256xf32>
    %c2_i32_52 = arith.constant 2 : i32
    %282 = tpu.dynamic_rotate %23 by %c2_i32_52 dim 1 : vector<1x256xf32>, i32 -> vector<1x256xf32>
    %283 = arith.mulf %282, %7 : vector<1x256xf32>
    %c56 = arith.constant 56 : index
    %284 = memref.load %arg3[%c56] : memref<144xf32, #tpu.memory_space<smem>>
    %285 = vector.broadcast %284 : f32 to vector<1x256xf32>
    %286 = arith.mulf %285, %283 : vector<1x256xf32>
    %287 = arith.addf %269, %286 : vector<1x256xf32>
    %c57 = arith.constant 57 : index
    %288 = memref.load %arg3[%c57] : memref<144xf32, #tpu.memory_space<smem>>
    %289 = vector.broadcast %288 : f32 to vector<1x256xf32>
    %290 = arith.mulf %289, %283 : vector<1x256xf32>
    %291 = arith.addf %273, %290 : vector<1x256xf32>
    %c58 = arith.constant 58 : index
    %292 = memref.load %arg3[%c58] : memref<144xf32, #tpu.memory_space<smem>>
    %293 = vector.broadcast %292 : f32 to vector<1x256xf32>
    %294 = arith.mulf %293, %283 : vector<1x256xf32>
    %295 = arith.addf %277, %294 : vector<1x256xf32>
    %c59 = arith.constant 59 : index
    %296 = memref.load %arg3[%c59] : memref<144xf32, #tpu.memory_space<smem>>
    %297 = vector.broadcast %296 : f32 to vector<1x256xf32>
    %298 = arith.mulf %297, %283 : vector<1x256xf32>
    %299 = arith.addf %281, %298 : vector<1x256xf32>
    %c2_i32_53 = arith.constant 2 : i32
    %300 = tpu.dynamic_rotate %25 by %c2_i32_53 dim 1 : vector<1x256xf32>, i32 -> vector<1x256xf32>
    %301 = arith.mulf %300, %7 : vector<1x256xf32>
    %c60 = arith.constant 60 : index
    %302 = memref.load %arg3[%c60] : memref<144xf32, #tpu.memory_space<smem>>
    %303 = vector.broadcast %302 : f32 to vector<1x256xf32>
    %304 = arith.mulf %303, %301 : vector<1x256xf32>
    %305 = arith.addf %287, %304 : vector<1x256xf32>
    %c61 = arith.constant 61 : index
    %306 = memref.load %arg3[%c61] : memref<144xf32, #tpu.memory_space<smem>>
    %307 = vector.broadcast %306 : f32 to vector<1x256xf32>
    %308 = arith.mulf %307, %301 : vector<1x256xf32>
    %309 = arith.addf %291, %308 : vector<1x256xf32>
    %c62 = arith.constant 62 : index
    %310 = memref.load %arg3[%c62] : memref<144xf32, #tpu.memory_space<smem>>
    %311 = vector.broadcast %310 : f32 to vector<1x256xf32>
    %312 = arith.mulf %311, %301 : vector<1x256xf32>
    %313 = arith.addf %295, %312 : vector<1x256xf32>
    %c63 = arith.constant 63 : index
    %314 = memref.load %arg3[%c63] : memref<144xf32, #tpu.memory_space<smem>>
    %315 = vector.broadcast %314 : f32 to vector<1x256xf32>
    %316 = arith.mulf %315, %301 : vector<1x256xf32>
    %317 = arith.addf %299, %316 : vector<1x256xf32>
    %318 = arith.mulf %19, %9 : vector<1x256xf32>
    %c64 = arith.constant 64 : index
    %319 = memref.load %arg3[%c64] : memref<144xf32, #tpu.memory_space<smem>>
    %320 = vector.broadcast %319 : f32 to vector<1x256xf32>
    %321 = arith.mulf %320, %318 : vector<1x256xf32>
    %322 = arith.addf %305, %321 : vector<1x256xf32>
    %c65 = arith.constant 65 : index
    %323 = memref.load %arg3[%c65] : memref<144xf32, #tpu.memory_space<smem>>
    %324 = vector.broadcast %323 : f32 to vector<1x256xf32>
    %325 = arith.mulf %324, %318 : vector<1x256xf32>
    %326 = arith.addf %309, %325 : vector<1x256xf32>
    %c66 = arith.constant 66 : index
    %327 = memref.load %arg3[%c66] : memref<144xf32, #tpu.memory_space<smem>>
    %328 = vector.broadcast %327 : f32 to vector<1x256xf32>
    %329 = arith.mulf %328, %318 : vector<1x256xf32>
    %330 = arith.addf %313, %329 : vector<1x256xf32>
    %c67 = arith.constant 67 : index
    %331 = memref.load %arg3[%c67] : memref<144xf32, #tpu.memory_space<smem>>
    %332 = vector.broadcast %331 : f32 to vector<1x256xf32>
    %333 = arith.mulf %332, %318 : vector<1x256xf32>
    %334 = arith.addf %317, %333 : vector<1x256xf32>
    %335 = arith.mulf %21, %9 : vector<1x256xf32>
    %c68 = arith.constant 68 : index
    %336 = memref.load %arg3[%c68] : memref<144xf32, #tpu.memory_space<smem>>
    %337 = vector.broadcast %336 : f32 to vector<1x256xf32>
    %338 = arith.mulf %337, %335 : vector<1x256xf32>
    %339 = arith.addf %322, %338 : vector<1x256xf32>
    %c69 = arith.constant 69 : index
    %340 = memref.load %arg3[%c69] : memref<144xf32, #tpu.memory_space<smem>>
    %341 = vector.broadcast %340 : f32 to vector<1x256xf32>
    %342 = arith.mulf %341, %335 : vector<1x256xf32>
    %343 = arith.addf %326, %342 : vector<1x256xf32>
    %c70 = arith.constant 70 : index
    %344 = memref.load %arg3[%c70] : memref<144xf32, #tpu.memory_space<smem>>
    %345 = vector.broadcast %344 : f32 to vector<1x256xf32>
    %346 = arith.mulf %345, %335 : vector<1x256xf32>
    %347 = arith.addf %330, %346 : vector<1x256xf32>
    %c71 = arith.constant 71 : index
    %348 = memref.load %arg3[%c71] : memref<144xf32, #tpu.memory_space<smem>>
    %349 = vector.broadcast %348 : f32 to vector<1x256xf32>
    %350 = arith.mulf %349, %335 : vector<1x256xf32>
    %351 = arith.addf %334, %350 : vector<1x256xf32>
    %352 = arith.mulf %23, %9 : vector<1x256xf32>
    %c72 = arith.constant 72 : index
    %353 = memref.load %arg3[%c72] : memref<144xf32, #tpu.memory_space<smem>>
    %354 = vector.broadcast %353 : f32 to vector<1x256xf32>
    %355 = arith.mulf %354, %352 : vector<1x256xf32>
    %356 = arith.addf %339, %355 : vector<1x256xf32>
    %c73 = arith.constant 73 : index
    %357 = memref.load %arg3[%c73] : memref<144xf32, #tpu.memory_space<smem>>
    %358 = vector.broadcast %357 : f32 to vector<1x256xf32>
    %359 = arith.mulf %358, %352 : vector<1x256xf32>
    %360 = arith.addf %343, %359 : vector<1x256xf32>
    %c74 = arith.constant 74 : index
    %361 = memref.load %arg3[%c74] : memref<144xf32, #tpu.memory_space<smem>>
    %362 = vector.broadcast %361 : f32 to vector<1x256xf32>
    %363 = arith.mulf %362, %352 : vector<1x256xf32>
    %364 = arith.addf %347, %363 : vector<1x256xf32>
    %c75 = arith.constant 75 : index
    %365 = memref.load %arg3[%c75] : memref<144xf32, #tpu.memory_space<smem>>
    %366 = vector.broadcast %365 : f32 to vector<1x256xf32>
    %367 = arith.mulf %366, %352 : vector<1x256xf32>
    %368 = arith.addf %351, %367 : vector<1x256xf32>
    %369 = arith.mulf %25, %9 : vector<1x256xf32>
    %c76 = arith.constant 76 : index
    %370 = memref.load %arg3[%c76] : memref<144xf32, #tpu.memory_space<smem>>
    %371 = vector.broadcast %370 : f32 to vector<1x256xf32>
    %372 = arith.mulf %371, %369 : vector<1x256xf32>
    %373 = arith.addf %356, %372 : vector<1x256xf32>
    %c77 = arith.constant 77 : index
    %374 = memref.load %arg3[%c77] : memref<144xf32, #tpu.memory_space<smem>>
    %375 = vector.broadcast %374 : f32 to vector<1x256xf32>
    %376 = arith.mulf %375, %369 : vector<1x256xf32>
    %377 = arith.addf %360, %376 : vector<1x256xf32>
    %c78 = arith.constant 78 : index
    %378 = memref.load %arg3[%c78] : memref<144xf32, #tpu.memory_space<smem>>
    %379 = vector.broadcast %378 : f32 to vector<1x256xf32>
    %380 = arith.mulf %379, %369 : vector<1x256xf32>
    %381 = arith.addf %364, %380 : vector<1x256xf32>
    %c79 = arith.constant 79 : index
    %382 = memref.load %arg3[%c79] : memref<144xf32, #tpu.memory_space<smem>>
    %383 = vector.broadcast %382 : f32 to vector<1x256xf32>
    %384 = arith.mulf %383, %369 : vector<1x256xf32>
    %385 = arith.addf %368, %384 : vector<1x256xf32>
    %c254_i32 = arith.constant 254 : i32
    %386 = tpu.dynamic_rotate %19 by %c254_i32 dim 1 : vector<1x256xf32>, i32 -> vector<1x256xf32>
    %387 = arith.mulf %386, %11 : vector<1x256xf32>
    %c80 = arith.constant 80 : index
    %388 = memref.load %arg3[%c80] : memref<144xf32, #tpu.memory_space<smem>>
    %389 = vector.broadcast %388 : f32 to vector<1x256xf32>
    %390 = arith.mulf %389, %387 : vector<1x256xf32>
    %391 = arith.addf %373, %390 : vector<1x256xf32>
    %c81 = arith.constant 81 : index
    %392 = memref.load %arg3[%c81] : memref<144xf32, #tpu.memory_space<smem>>
    %393 = vector.broadcast %392 : f32 to vector<1x256xf32>
    %394 = arith.mulf %393, %387 : vector<1x256xf32>
    %395 = arith.addf %377, %394 : vector<1x256xf32>
    %c82 = arith.constant 82 : index
    %396 = memref.load %arg3[%c82] : memref<144xf32, #tpu.memory_space<smem>>
    %397 = vector.broadcast %396 : f32 to vector<1x256xf32>
    %398 = arith.mulf %397, %387 : vector<1x256xf32>
    %399 = arith.addf %381, %398 : vector<1x256xf32>
    %c83 = arith.constant 83 : index
    %400 = memref.load %arg3[%c83] : memref<144xf32, #tpu.memory_space<smem>>
    %401 = vector.broadcast %400 : f32 to vector<1x256xf32>
    %402 = arith.mulf %401, %387 : vector<1x256xf32>
    %403 = arith.addf %385, %402 : vector<1x256xf32>
    %c254_i32_54 = arith.constant 254 : i32
    %404 = tpu.dynamic_rotate %21 by %c254_i32_54 dim 1 : vector<1x256xf32>, i32 -> vector<1x256xf32>
    %405 = arith.mulf %404, %11 : vector<1x256xf32>
    %c84 = arith.constant 84 : index
    %406 = memref.load %arg3[%c84] : memref<144xf32, #tpu.memory_space<smem>>
    %407 = vector.broadcast %406 : f32 to vector<1x256xf32>
    %408 = arith.mulf %407, %405 : vector<1x256xf32>
    %409 = arith.addf %391, %408 : vector<1x256xf32>
    %c85 = arith.constant 85 : index
    %410 = memref.load %arg3[%c85] : memref<144xf32, #tpu.memory_space<smem>>
    %411 = vector.broadcast %410 : f32 to vector<1x256xf32>
    %412 = arith.mulf %411, %405 : vector<1x256xf32>
    %413 = arith.addf %395, %412 : vector<1x256xf32>
    %c86 = arith.constant 86 : index
    %414 = memref.load %arg3[%c86] : memref<144xf32, #tpu.memory_space<smem>>
    %415 = vector.broadcast %414 : f32 to vector<1x256xf32>
    %416 = arith.mulf %415, %405 : vector<1x256xf32>
    %417 = arith.addf %399, %416 : vector<1x256xf32>
    %c87 = arith.constant 87 : index
    %418 = memref.load %arg3[%c87] : memref<144xf32, #tpu.memory_space<smem>>
    %419 = vector.broadcast %418 : f32 to vector<1x256xf32>
    %420 = arith.mulf %419, %405 : vector<1x256xf32>
    %421 = arith.addf %403, %420 : vector<1x256xf32>
    %c254_i32_55 = arith.constant 254 : i32
    %422 = tpu.dynamic_rotate %23 by %c254_i32_55 dim 1 : vector<1x256xf32>, i32 -> vector<1x256xf32>
    %423 = arith.mulf %422, %11 : vector<1x256xf32>
    %c88 = arith.constant 88 : index
    %424 = memref.load %arg3[%c88] : memref<144xf32, #tpu.memory_space<smem>>
    %425 = vector.broadcast %424 : f32 to vector<1x256xf32>
    %426 = arith.mulf %425, %423 : vector<1x256xf32>
    %427 = arith.addf %409, %426 : vector<1x256xf32>
    %c89 = arith.constant 89 : index
    %428 = memref.load %arg3[%c89] : memref<144xf32, #tpu.memory_space<smem>>
    %429 = vector.broadcast %428 : f32 to vector<1x256xf32>
    %430 = arith.mulf %429, %423 : vector<1x256xf32>
    %431 = arith.addf %413, %430 : vector<1x256xf32>
    %c90 = arith.constant 90 : index
    %432 = memref.load %arg3[%c90] : memref<144xf32, #tpu.memory_space<smem>>
    %433 = vector.broadcast %432 : f32 to vector<1x256xf32>
    %434 = arith.mulf %433, %423 : vector<1x256xf32>
    %435 = arith.addf %417, %434 : vector<1x256xf32>
    %c91 = arith.constant 91 : index
    %436 = memref.load %arg3[%c91] : memref<144xf32, #tpu.memory_space<smem>>
    %437 = vector.broadcast %436 : f32 to vector<1x256xf32>
    %438 = arith.mulf %437, %423 : vector<1x256xf32>
    %439 = arith.addf %421, %438 : vector<1x256xf32>
    %c254_i32_56 = arith.constant 254 : i32
    %440 = tpu.dynamic_rotate %25 by %c254_i32_56 dim 1 : vector<1x256xf32>, i32 -> vector<1x256xf32>
    %441 = arith.mulf %440, %11 : vector<1x256xf32>
    %c92 = arith.constant 92 : index
    %442 = memref.load %arg3[%c92] : memref<144xf32, #tpu.memory_space<smem>>
    %443 = vector.broadcast %442 : f32 to vector<1x256xf32>
    %444 = arith.mulf %443, %441 : vector<1x256xf32>
    %445 = arith.addf %427, %444 : vector<1x256xf32>
    %c93 = arith.constant 93 : index
    %446 = memref.load %arg3[%c93] : memref<144xf32, #tpu.memory_space<smem>>
    %447 = vector.broadcast %446 : f32 to vector<1x256xf32>
    %448 = arith.mulf %447, %441 : vector<1x256xf32>
    %449 = arith.addf %431, %448 : vector<1x256xf32>
    %c94 = arith.constant 94 : index
    %450 = memref.load %arg3[%c94] : memref<144xf32, #tpu.memory_space<smem>>
    %451 = vector.broadcast %450 : f32 to vector<1x256xf32>
    %452 = arith.mulf %451, %441 : vector<1x256xf32>
    %453 = arith.addf %435, %452 : vector<1x256xf32>
    %c95 = arith.constant 95 : index
    %454 = memref.load %arg3[%c95] : memref<144xf32, #tpu.memory_space<smem>>
    %455 = vector.broadcast %454 : f32 to vector<1x256xf32>
    %456 = arith.mulf %455, %441 : vector<1x256xf32>
    %457 = arith.addf %439, %456 : vector<1x256xf32>
    %c226_i32 = arith.constant 226 : i32
    %458 = tpu.dynamic_rotate %19 by %c226_i32 dim 1 : vector<1x256xf32>, i32 -> vector<1x256xf32>
    %459 = arith.mulf %458, %13 : vector<1x256xf32>
    %c96 = arith.constant 96 : index
    %460 = memref.load %arg3[%c96] : memref<144xf32, #tpu.memory_space<smem>>
    %461 = vector.broadcast %460 : f32 to vector<1x256xf32>
    %462 = arith.mulf %461, %459 : vector<1x256xf32>
    %463 = arith.addf %445, %462 : vector<1x256xf32>
    %c97 = arith.constant 97 : index
    %464 = memref.load %arg3[%c97] : memref<144xf32, #tpu.memory_space<smem>>
    %465 = vector.broadcast %464 : f32 to vector<1x256xf32>
    %466 = arith.mulf %465, %459 : vector<1x256xf32>
    %467 = arith.addf %449, %466 : vector<1x256xf32>
    %c98 = arith.constant 98 : index
    %468 = memref.load %arg3[%c98] : memref<144xf32, #tpu.memory_space<smem>>
    %469 = vector.broadcast %468 : f32 to vector<1x256xf32>
    %470 = arith.mulf %469, %459 : vector<1x256xf32>
    %471 = arith.addf %453, %470 : vector<1x256xf32>
    %c99 = arith.constant 99 : index
    %472 = memref.load %arg3[%c99] : memref<144xf32, #tpu.memory_space<smem>>
    %473 = vector.broadcast %472 : f32 to vector<1x256xf32>
    %474 = arith.mulf %473, %459 : vector<1x256xf32>
    %475 = arith.addf %457, %474 : vector<1x256xf32>
    %c226_i32_57 = arith.constant 226 : i32
    %476 = tpu.dynamic_rotate %21 by %c226_i32_57 dim 1 : vector<1x256xf32>, i32 -> vector<1x256xf32>
    %477 = arith.mulf %476, %13 : vector<1x256xf32>
    %c100 = arith.constant 100 : index
    %478 = memref.load %arg3[%c100] : memref<144xf32, #tpu.memory_space<smem>>
    %479 = vector.broadcast %478 : f32 to vector<1x256xf32>
    %480 = arith.mulf %479, %477 : vector<1x256xf32>
    %481 = arith.addf %463, %480 : vector<1x256xf32>
    %c101 = arith.constant 101 : index
    %482 = memref.load %arg3[%c101] : memref<144xf32, #tpu.memory_space<smem>>
    %483 = vector.broadcast %482 : f32 to vector<1x256xf32>
    %484 = arith.mulf %483, %477 : vector<1x256xf32>
    %485 = arith.addf %467, %484 : vector<1x256xf32>
    %c102 = arith.constant 102 : index
    %486 = memref.load %arg3[%c102] : memref<144xf32, #tpu.memory_space<smem>>
    %487 = vector.broadcast %486 : f32 to vector<1x256xf32>
    %488 = arith.mulf %487, %477 : vector<1x256xf32>
    %489 = arith.addf %471, %488 : vector<1x256xf32>
    %c103 = arith.constant 103 : index
    %490 = memref.load %arg3[%c103] : memref<144xf32, #tpu.memory_space<smem>>
    %491 = vector.broadcast %490 : f32 to vector<1x256xf32>
    %492 = arith.mulf %491, %477 : vector<1x256xf32>
    %493 = arith.addf %475, %492 : vector<1x256xf32>
    %c226_i32_58 = arith.constant 226 : i32
    %494 = tpu.dynamic_rotate %23 by %c226_i32_58 dim 1 : vector<1x256xf32>, i32 -> vector<1x256xf32>
    %495 = arith.mulf %494, %13 : vector<1x256xf32>
    %c104 = arith.constant 104 : index
    %496 = memref.load %arg3[%c104] : memref<144xf32, #tpu.memory_space<smem>>
    %497 = vector.broadcast %496 : f32 to vector<1x256xf32>
    %498 = arith.mulf %497, %495 : vector<1x256xf32>
    %499 = arith.addf %481, %498 : vector<1x256xf32>
    %c105 = arith.constant 105 : index
    %500 = memref.load %arg3[%c105] : memref<144xf32, #tpu.memory_space<smem>>
    %501 = vector.broadcast %500 : f32 to vector<1x256xf32>
    %502 = arith.mulf %501, %495 : vector<1x256xf32>
    %503 = arith.addf %485, %502 : vector<1x256xf32>
    %c106 = arith.constant 106 : index
    %504 = memref.load %arg3[%c106] : memref<144xf32, #tpu.memory_space<smem>>
    %505 = vector.broadcast %504 : f32 to vector<1x256xf32>
    %506 = arith.mulf %505, %495 : vector<1x256xf32>
    %507 = arith.addf %489, %506 : vector<1x256xf32>
    %c107 = arith.constant 107 : index
    %508 = memref.load %arg3[%c107] : memref<144xf32, #tpu.memory_space<smem>>
    %509 = vector.broadcast %508 : f32 to vector<1x256xf32>
    %510 = arith.mulf %509, %495 : vector<1x256xf32>
    %511 = arith.addf %493, %510 : vector<1x256xf32>
    %c226_i32_59 = arith.constant 226 : i32
    %512 = tpu.dynamic_rotate %25 by %c226_i32_59 dim 1 : vector<1x256xf32>, i32 -> vector<1x256xf32>
    %513 = arith.mulf %512, %13 : vector<1x256xf32>
    %c108 = arith.constant 108 : index
    %514 = memref.load %arg3[%c108] : memref<144xf32, #tpu.memory_space<smem>>
    %515 = vector.broadcast %514 : f32 to vector<1x256xf32>
    %516 = arith.mulf %515, %513 : vector<1x256xf32>
    %517 = arith.addf %499, %516 : vector<1x256xf32>
    %c109 = arith.constant 109 : index
    %518 = memref.load %arg3[%c109] : memref<144xf32, #tpu.memory_space<smem>>
    %519 = vector.broadcast %518 : f32 to vector<1x256xf32>
    %520 = arith.mulf %519, %513 : vector<1x256xf32>
    %521 = arith.addf %503, %520 : vector<1x256xf32>
    %c110 = arith.constant 110 : index
    %522 = memref.load %arg3[%c110] : memref<144xf32, #tpu.memory_space<smem>>
    %523 = vector.broadcast %522 : f32 to vector<1x256xf32>
    %524 = arith.mulf %523, %513 : vector<1x256xf32>
    %525 = arith.addf %507, %524 : vector<1x256xf32>
    %c111 = arith.constant 111 : index
    %526 = memref.load %arg3[%c111] : memref<144xf32, #tpu.memory_space<smem>>
    %527 = vector.broadcast %526 : f32 to vector<1x256xf32>
    %528 = arith.mulf %527, %513 : vector<1x256xf32>
    %529 = arith.addf %511, %528 : vector<1x256xf32>
    %c224_i32 = arith.constant 224 : i32
    %530 = tpu.dynamic_rotate %19 by %c224_i32 dim 1 : vector<1x256xf32>, i32 -> vector<1x256xf32>
    %531 = arith.mulf %530, %15 : vector<1x256xf32>
    %c112 = arith.constant 112 : index
    %532 = memref.load %arg3[%c112] : memref<144xf32, #tpu.memory_space<smem>>
    %533 = vector.broadcast %532 : f32 to vector<1x256xf32>
    %534 = arith.mulf %533, %531 : vector<1x256xf32>
    %535 = arith.addf %517, %534 : vector<1x256xf32>
    %c113 = arith.constant 113 : index
    %536 = memref.load %arg3[%c113] : memref<144xf32, #tpu.memory_space<smem>>
    %537 = vector.broadcast %536 : f32 to vector<1x256xf32>
    %538 = arith.mulf %537, %531 : vector<1x256xf32>
    %539 = arith.addf %521, %538 : vector<1x256xf32>
    %c114 = arith.constant 114 : index
    %540 = memref.load %arg3[%c114] : memref<144xf32, #tpu.memory_space<smem>>
    %541 = vector.broadcast %540 : f32 to vector<1x256xf32>
    %542 = arith.mulf %541, %531 : vector<1x256xf32>
    %543 = arith.addf %525, %542 : vector<1x256xf32>
    %c115 = arith.constant 115 : index
    %544 = memref.load %arg3[%c115] : memref<144xf32, #tpu.memory_space<smem>>
    %545 = vector.broadcast %544 : f32 to vector<1x256xf32>
    %546 = arith.mulf %545, %531 : vector<1x256xf32>
    %547 = arith.addf %529, %546 : vector<1x256xf32>
    %c224_i32_60 = arith.constant 224 : i32
    %548 = tpu.dynamic_rotate %21 by %c224_i32_60 dim 1 : vector<1x256xf32>, i32 -> vector<1x256xf32>
    %549 = arith.mulf %548, %15 : vector<1x256xf32>
    %c116 = arith.constant 116 : index
    %550 = memref.load %arg3[%c116] : memref<144xf32, #tpu.memory_space<smem>>
    %551 = vector.broadcast %550 : f32 to vector<1x256xf32>
    %552 = arith.mulf %551, %549 : vector<1x256xf32>
    %553 = arith.addf %535, %552 : vector<1x256xf32>
    %c117 = arith.constant 117 : index
    %554 = memref.load %arg3[%c117] : memref<144xf32, #tpu.memory_space<smem>>
    %555 = vector.broadcast %554 : f32 to vector<1x256xf32>
    %556 = arith.mulf %555, %549 : vector<1x256xf32>
    %557 = arith.addf %539, %556 : vector<1x256xf32>
    %c118 = arith.constant 118 : index
    %558 = memref.load %arg3[%c118] : memref<144xf32, #tpu.memory_space<smem>>
    %559 = vector.broadcast %558 : f32 to vector<1x256xf32>
    %560 = arith.mulf %559, %549 : vector<1x256xf32>
    %561 = arith.addf %543, %560 : vector<1x256xf32>
    %c119 = arith.constant 119 : index
    %562 = memref.load %arg3[%c119] : memref<144xf32, #tpu.memory_space<smem>>
    %563 = vector.broadcast %562 : f32 to vector<1x256xf32>
    %564 = arith.mulf %563, %549 : vector<1x256xf32>
    %565 = arith.addf %547, %564 : vector<1x256xf32>
    %c224_i32_61 = arith.constant 224 : i32
    %566 = tpu.dynamic_rotate %23 by %c224_i32_61 dim 1 : vector<1x256xf32>, i32 -> vector<1x256xf32>
    %567 = arith.mulf %566, %15 : vector<1x256xf32>
    %c120 = arith.constant 120 : index
    %568 = memref.load %arg3[%c120] : memref<144xf32, #tpu.memory_space<smem>>
    %569 = vector.broadcast %568 : f32 to vector<1x256xf32>
    %570 = arith.mulf %569, %567 : vector<1x256xf32>
    %571 = arith.addf %553, %570 : vector<1x256xf32>
    %c121 = arith.constant 121 : index
    %572 = memref.load %arg3[%c121] : memref<144xf32, #tpu.memory_space<smem>>
    %573 = vector.broadcast %572 : f32 to vector<1x256xf32>
    %574 = arith.mulf %573, %567 : vector<1x256xf32>
    %575 = arith.addf %557, %574 : vector<1x256xf32>
    %c122 = arith.constant 122 : index
    %576 = memref.load %arg3[%c122] : memref<144xf32, #tpu.memory_space<smem>>
    %577 = vector.broadcast %576 : f32 to vector<1x256xf32>
    %578 = arith.mulf %577, %567 : vector<1x256xf32>
    %579 = arith.addf %561, %578 : vector<1x256xf32>
    %c123 = arith.constant 123 : index
    %580 = memref.load %arg3[%c123] : memref<144xf32, #tpu.memory_space<smem>>
    %581 = vector.broadcast %580 : f32 to vector<1x256xf32>
    %582 = arith.mulf %581, %567 : vector<1x256xf32>
    %583 = arith.addf %565, %582 : vector<1x256xf32>
    %c224_i32_62 = arith.constant 224 : i32
    %584 = tpu.dynamic_rotate %25 by %c224_i32_62 dim 1 : vector<1x256xf32>, i32 -> vector<1x256xf32>
    %585 = arith.mulf %584, %15 : vector<1x256xf32>
    %c124 = arith.constant 124 : index
    %586 = memref.load %arg3[%c124] : memref<144xf32, #tpu.memory_space<smem>>
    %587 = vector.broadcast %586 : f32 to vector<1x256xf32>
    %588 = arith.mulf %587, %585 : vector<1x256xf32>
    %589 = arith.addf %571, %588 : vector<1x256xf32>
    %c125 = arith.constant 125 : index
    %590 = memref.load %arg3[%c125] : memref<144xf32, #tpu.memory_space<smem>>
    %591 = vector.broadcast %590 : f32 to vector<1x256xf32>
    %592 = arith.mulf %591, %585 : vector<1x256xf32>
    %593 = arith.addf %575, %592 : vector<1x256xf32>
    %c126 = arith.constant 126 : index
    %594 = memref.load %arg3[%c126] : memref<144xf32, #tpu.memory_space<smem>>
    %595 = vector.broadcast %594 : f32 to vector<1x256xf32>
    %596 = arith.mulf %595, %585 : vector<1x256xf32>
    %597 = arith.addf %579, %596 : vector<1x256xf32>
    %c127 = arith.constant 127 : index
    %598 = memref.load %arg3[%c127] : memref<144xf32, #tpu.memory_space<smem>>
    %599 = vector.broadcast %598 : f32 to vector<1x256xf32>
    %600 = arith.mulf %599, %585 : vector<1x256xf32>
    %601 = arith.addf %583, %600 : vector<1x256xf32>
    %c222_i32 = arith.constant 222 : i32
    %602 = tpu.dynamic_rotate %19 by %c222_i32 dim 1 : vector<1x256xf32>, i32 -> vector<1x256xf32>
    %603 = arith.mulf %602, %17 : vector<1x256xf32>
    %c128 = arith.constant 128 : index
    %604 = memref.load %arg3[%c128] : memref<144xf32, #tpu.memory_space<smem>>
    %605 = vector.broadcast %604 : f32 to vector<1x256xf32>
    %606 = arith.mulf %605, %603 : vector<1x256xf32>
    %607 = arith.addf %589, %606 : vector<1x256xf32>
    %c129 = arith.constant 129 : index
    %608 = memref.load %arg3[%c129] : memref<144xf32, #tpu.memory_space<smem>>
    %609 = vector.broadcast %608 : f32 to vector<1x256xf32>
    %610 = arith.mulf %609, %603 : vector<1x256xf32>
    %611 = arith.addf %593, %610 : vector<1x256xf32>
    %c130 = arith.constant 130 : index
    %612 = memref.load %arg3[%c130] : memref<144xf32, #tpu.memory_space<smem>>
    %613 = vector.broadcast %612 : f32 to vector<1x256xf32>
    %614 = arith.mulf %613, %603 : vector<1x256xf32>
    %615 = arith.addf %597, %614 : vector<1x256xf32>
    %c131 = arith.constant 131 : index
    %616 = memref.load %arg3[%c131] : memref<144xf32, #tpu.memory_space<smem>>
    %617 = vector.broadcast %616 : f32 to vector<1x256xf32>
    %618 = arith.mulf %617, %603 : vector<1x256xf32>
    %619 = arith.addf %601, %618 : vector<1x256xf32>
    %c222_i32_63 = arith.constant 222 : i32
    %620 = tpu.dynamic_rotate %21 by %c222_i32_63 dim 1 : vector<1x256xf32>, i32 -> vector<1x256xf32>
    %621 = arith.mulf %620, %17 : vector<1x256xf32>
    %c132 = arith.constant 132 : index
    %622 = memref.load %arg3[%c132] : memref<144xf32, #tpu.memory_space<smem>>
    %623 = vector.broadcast %622 : f32 to vector<1x256xf32>
    %624 = arith.mulf %623, %621 : vector<1x256xf32>
    %625 = arith.addf %607, %624 : vector<1x256xf32>
    %c133 = arith.constant 133 : index
    %626 = memref.load %arg3[%c133] : memref<144xf32, #tpu.memory_space<smem>>
    %627 = vector.broadcast %626 : f32 to vector<1x256xf32>
    %628 = arith.mulf %627, %621 : vector<1x256xf32>
    %629 = arith.addf %611, %628 : vector<1x256xf32>
    %c134 = arith.constant 134 : index
    %630 = memref.load %arg3[%c134] : memref<144xf32, #tpu.memory_space<smem>>
    %631 = vector.broadcast %630 : f32 to vector<1x256xf32>
    %632 = arith.mulf %631, %621 : vector<1x256xf32>
    %633 = arith.addf %615, %632 : vector<1x256xf32>
    %c135 = arith.constant 135 : index
    %634 = memref.load %arg3[%c135] : memref<144xf32, #tpu.memory_space<smem>>
    %635 = vector.broadcast %634 : f32 to vector<1x256xf32>
    %636 = arith.mulf %635, %621 : vector<1x256xf32>
    %637 = arith.addf %619, %636 : vector<1x256xf32>
    %c222_i32_64 = arith.constant 222 : i32
    %638 = tpu.dynamic_rotate %23 by %c222_i32_64 dim 1 : vector<1x256xf32>, i32 -> vector<1x256xf32>
    %639 = arith.mulf %638, %17 : vector<1x256xf32>
    %c136 = arith.constant 136 : index
    %640 = memref.load %arg3[%c136] : memref<144xf32, #tpu.memory_space<smem>>
    %641 = vector.broadcast %640 : f32 to vector<1x256xf32>
    %642 = arith.mulf %641, %639 : vector<1x256xf32>
    %643 = arith.addf %625, %642 : vector<1x256xf32>
    %c137 = arith.constant 137 : index
    %644 = memref.load %arg3[%c137] : memref<144xf32, #tpu.memory_space<smem>>
    %645 = vector.broadcast %644 : f32 to vector<1x256xf32>
    %646 = arith.mulf %645, %639 : vector<1x256xf32>
    %647 = arith.addf %629, %646 : vector<1x256xf32>
    %c138 = arith.constant 138 : index
    %648 = memref.load %arg3[%c138] : memref<144xf32, #tpu.memory_space<smem>>
    %649 = vector.broadcast %648 : f32 to vector<1x256xf32>
    %650 = arith.mulf %649, %639 : vector<1x256xf32>
    %651 = arith.addf %633, %650 : vector<1x256xf32>
    %c139 = arith.constant 139 : index
    %652 = memref.load %arg3[%c139] : memref<144xf32, #tpu.memory_space<smem>>
    %653 = vector.broadcast %652 : f32 to vector<1x256xf32>
    %654 = arith.mulf %653, %639 : vector<1x256xf32>
    %655 = arith.addf %637, %654 : vector<1x256xf32>
    %c222_i32_65 = arith.constant 222 : i32
    %656 = tpu.dynamic_rotate %25 by %c222_i32_65 dim 1 : vector<1x256xf32>, i32 -> vector<1x256xf32>
    %657 = arith.mulf %656, %17 : vector<1x256xf32>
    %c140 = arith.constant 140 : index
    %658 = memref.load %arg3[%c140] : memref<144xf32, #tpu.memory_space<smem>>
    %659 = vector.broadcast %658 : f32 to vector<1x256xf32>
    %660 = arith.mulf %659, %657 : vector<1x256xf32>
    %661 = arith.addf %643, %660 : vector<1x256xf32>
    %c141 = arith.constant 141 : index
    %662 = memref.load %arg3[%c141] : memref<144xf32, #tpu.memory_space<smem>>
    %663 = vector.broadcast %662 : f32 to vector<1x256xf32>
    %664 = arith.mulf %663, %657 : vector<1x256xf32>
    %665 = arith.addf %647, %664 : vector<1x256xf32>
    %c142 = arith.constant 142 : index
    %666 = memref.load %arg3[%c142] : memref<144xf32, #tpu.memory_space<smem>>
    %667 = vector.broadcast %666 : f32 to vector<1x256xf32>
    %668 = arith.mulf %667, %657 : vector<1x256xf32>
    %669 = arith.addf %651, %668 : vector<1x256xf32>
    %c143 = arith.constant 143 : index
    %670 = memref.load %arg3[%c143] : memref<144xf32, #tpu.memory_space<smem>>
    %671 = vector.broadcast %670 : f32 to vector<1x256xf32>
    %672 = arith.mulf %671, %657 : vector<1x256xf32>
    %673 = arith.addf %655, %672 : vector<1x256xf32>
    %c0_66 = arith.constant 0 : index
    %674 = memref.load %arg4[%c0_66] : memref<4xf32, #tpu.memory_space<smem>>
    %675 = vector.broadcast %674 : f32 to vector<1x256xf32>
    %676 = arith.addf %661, %675 : vector<1x256xf32>
    %cst_67 = arith.constant 0.000000e+00 : f32
    %677 = vector.broadcast %cst_67 : f32 to vector<1x256xf32>
    %678 = arith.maximumf %676, %677 : vector<1x256xf32>
    %c1_68 = arith.constant 1 : index
    %679 = memref.load %arg4[%c1_68] : memref<4xf32, #tpu.memory_space<smem>>
    %680 = vector.broadcast %679 : f32 to vector<1x256xf32>
    %681 = arith.addf %665, %680 : vector<1x256xf32>
    %cst_69 = arith.constant 0.000000e+00 : f32
    %682 = vector.broadcast %cst_69 : f32 to vector<1x256xf32>
    %683 = arith.maximumf %681, %682 : vector<1x256xf32>
    %c2_70 = arith.constant 2 : index
    %684 = memref.load %arg4[%c2_70] : memref<4xf32, #tpu.memory_space<smem>>
    %685 = vector.broadcast %684 : f32 to vector<1x256xf32>
    %686 = arith.addf %669, %685 : vector<1x256xf32>
    %cst_71 = arith.constant 0.000000e+00 : f32
    %687 = vector.broadcast %cst_71 : f32 to vector<1x256xf32>
    %688 = arith.maximumf %686, %687 : vector<1x256xf32>
    %c3_72 = arith.constant 3 : index
    %689 = memref.load %arg4[%c3_72] : memref<4xf32, #tpu.memory_space<smem>>
    %690 = vector.broadcast %689 : f32 to vector<1x256xf32>
    %691 = arith.addf %673, %690 : vector<1x256xf32>
    %cst_73 = arith.constant 0.000000e+00 : f32
    %692 = vector.broadcast %cst_73 : f32 to vector<1x256xf32>
    %693 = arith.maximumf %691, %692 : vector<1x256xf32>
    %cst_74 = arith.constant 0.000000e+00 : f32
    %694 = vector.broadcast %cst_74 : f32 to vector<1x256xf32>
    %cst_75 = arith.constant 0.000000e+00 : f32
    %695 = vector.broadcast %cst_75 : f32 to vector<1x256xf32>
    %cst_76 = arith.constant 0.000000e+00 : f32
    %696 = vector.broadcast %cst_76 : f32 to vector<1x256xf32>
    %cst_77 = arith.constant 0.000000e+00 : f32
    %697 = vector.broadcast %cst_77 : f32 to vector<1x256xf32>
    %c34_i32_78 = arith.constant 34 : i32
    %698 = tpu.dynamic_rotate %678 by %c34_i32_78 dim 1 : vector<1x256xf32>, i32 -> vector<1x256xf32>
    %699 = arith.mulf %698, %1 : vector<1x256xf32>
    %c0_79 = arith.constant 0 : index
    %700 = memref.load %arg5[%c0_79] : memref<144xf32, #tpu.memory_space<smem>>
    %701 = vector.broadcast %700 : f32 to vector<1x256xf32>
    %702 = arith.mulf %701, %699 : vector<1x256xf32>
    %703 = arith.addf %694, %702 : vector<1x256xf32>
    %c1_80 = arith.constant 1 : index
    %704 = memref.load %arg5[%c1_80] : memref<144xf32, #tpu.memory_space<smem>>
    %705 = vector.broadcast %704 : f32 to vector<1x256xf32>
    %706 = arith.mulf %705, %699 : vector<1x256xf32>
    %707 = arith.addf %695, %706 : vector<1x256xf32>
    %c2_81 = arith.constant 2 : index
    %708 = memref.load %arg5[%c2_81] : memref<144xf32, #tpu.memory_space<smem>>
    %709 = vector.broadcast %708 : f32 to vector<1x256xf32>
    %710 = arith.mulf %709, %699 : vector<1x256xf32>
    %711 = arith.addf %696, %710 : vector<1x256xf32>
    %c3_82 = arith.constant 3 : index
    %712 = memref.load %arg5[%c3_82] : memref<144xf32, #tpu.memory_space<smem>>
    %713 = vector.broadcast %712 : f32 to vector<1x256xf32>
    %714 = arith.mulf %713, %699 : vector<1x256xf32>
    %715 = arith.addf %697, %714 : vector<1x256xf32>
    %c34_i32_83 = arith.constant 34 : i32
    %716 = tpu.dynamic_rotate %683 by %c34_i32_83 dim 1 : vector<1x256xf32>, i32 -> vector<1x256xf32>
    %717 = arith.mulf %716, %1 : vector<1x256xf32>
    %c4_84 = arith.constant 4 : index
    %718 = memref.load %arg5[%c4_84] : memref<144xf32, #tpu.memory_space<smem>>
    %719 = vector.broadcast %718 : f32 to vector<1x256xf32>
    %720 = arith.mulf %719, %717 : vector<1x256xf32>
    %721 = arith.addf %703, %720 : vector<1x256xf32>
    %c5_85 = arith.constant 5 : index
    %722 = memref.load %arg5[%c5_85] : memref<144xf32, #tpu.memory_space<smem>>
    %723 = vector.broadcast %722 : f32 to vector<1x256xf32>
    %724 = arith.mulf %723, %717 : vector<1x256xf32>
    %725 = arith.addf %707, %724 : vector<1x256xf32>
    %c6_86 = arith.constant 6 : index
    %726 = memref.load %arg5[%c6_86] : memref<144xf32, #tpu.memory_space<smem>>
    %727 = vector.broadcast %726 : f32 to vector<1x256xf32>
    %728 = arith.mulf %727, %717 : vector<1x256xf32>
    %729 = arith.addf %711, %728 : vector<1x256xf32>
    %c7_87 = arith.constant 7 : index
    %730 = memref.load %arg5[%c7_87] : memref<144xf32, #tpu.memory_space<smem>>
    %731 = vector.broadcast %730 : f32 to vector<1x256xf32>
    %732 = arith.mulf %731, %717 : vector<1x256xf32>
    %733 = arith.addf %715, %732 : vector<1x256xf32>
    %c34_i32_88 = arith.constant 34 : i32
    %734 = tpu.dynamic_rotate %688 by %c34_i32_88 dim 1 : vector<1x256xf32>, i32 -> vector<1x256xf32>
    %735 = arith.mulf %734, %1 : vector<1x256xf32>
    %c8_89 = arith.constant 8 : index
    %736 = memref.load %arg5[%c8_89] : memref<144xf32, #tpu.memory_space<smem>>
    %737 = vector.broadcast %736 : f32 to vector<1x256xf32>
    %738 = arith.mulf %737, %735 : vector<1x256xf32>
    %739 = arith.addf %721, %738 : vector<1x256xf32>
    %c9_90 = arith.constant 9 : index
    %740 = memref.load %arg5[%c9_90] : memref<144xf32, #tpu.memory_space<smem>>
    %741 = vector.broadcast %740 : f32 to vector<1x256xf32>
    %742 = arith.mulf %741, %735 : vector<1x256xf32>
    %743 = arith.addf %725, %742 : vector<1x256xf32>
    %c10_91 = arith.constant 10 : index
    %744 = memref.load %arg5[%c10_91] : memref<144xf32, #tpu.memory_space<smem>>
    %745 = vector.broadcast %744 : f32 to vector<1x256xf32>
    %746 = arith.mulf %745, %735 : vector<1x256xf32>
    %747 = arith.addf %729, %746 : vector<1x256xf32>
    %c11_92 = arith.constant 11 : index
    %748 = memref.load %arg5[%c11_92] : memref<144xf32, #tpu.memory_space<smem>>
    %749 = vector.broadcast %748 : f32 to vector<1x256xf32>
    %750 = arith.mulf %749, %735 : vector<1x256xf32>
    %751 = arith.addf %733, %750 : vector<1x256xf32>
    %c34_i32_93 = arith.constant 34 : i32
    %752 = tpu.dynamic_rotate %693 by %c34_i32_93 dim 1 : vector<1x256xf32>, i32 -> vector<1x256xf32>
    %753 = arith.mulf %752, %1 : vector<1x256xf32>
    %c12_94 = arith.constant 12 : index
    %754 = memref.load %arg5[%c12_94] : memref<144xf32, #tpu.memory_space<smem>>
    %755 = vector.broadcast %754 : f32 to vector<1x256xf32>
    %756 = arith.mulf %755, %753 : vector<1x256xf32>
    %757 = arith.addf %739, %756 : vector<1x256xf32>
    %c13_95 = arith.constant 13 : index
    %758 = memref.load %arg5[%c13_95] : memref<144xf32, #tpu.memory_space<smem>>
    %759 = vector.broadcast %758 : f32 to vector<1x256xf32>
    %760 = arith.mulf %759, %753 : vector<1x256xf32>
    %761 = arith.addf %743, %760 : vector<1x256xf32>
    %c14_96 = arith.constant 14 : index
    %762 = memref.load %arg5[%c14_96] : memref<144xf32, #tpu.memory_space<smem>>
    %763 = vector.broadcast %762 : f32 to vector<1x256xf32>
    %764 = arith.mulf %763, %753 : vector<1x256xf32>
    %765 = arith.addf %747, %764 : vector<1x256xf32>
    %c15_97 = arith.constant 15 : index
    %766 = memref.load %arg5[%c15_97] : memref<144xf32, #tpu.memory_space<smem>>
    %767 = vector.broadcast %766 : f32 to vector<1x256xf32>
    %768 = arith.mulf %767, %753 : vector<1x256xf32>
    %769 = arith.addf %751, %768 : vector<1x256xf32>
    %c32_i32_98 = arith.constant 32 : i32
    %770 = tpu.dynamic_rotate %678 by %c32_i32_98 dim 1 : vector<1x256xf32>, i32 -> vector<1x256xf32>
    %771 = arith.mulf %770, %3 : vector<1x256xf32>
    %c16_99 = arith.constant 16 : index
    %772 = memref.load %arg5[%c16_99] : memref<144xf32, #tpu.memory_space<smem>>
    %773 = vector.broadcast %772 : f32 to vector<1x256xf32>
    %774 = arith.mulf %773, %771 : vector<1x256xf32>
    %775 = arith.addf %757, %774 : vector<1x256xf32>
    %c17_100 = arith.constant 17 : index
    %776 = memref.load %arg5[%c17_100] : memref<144xf32, #tpu.memory_space<smem>>
    %777 = vector.broadcast %776 : f32 to vector<1x256xf32>
    %778 = arith.mulf %777, %771 : vector<1x256xf32>
    %779 = arith.addf %761, %778 : vector<1x256xf32>
    %c18_101 = arith.constant 18 : index
    %780 = memref.load %arg5[%c18_101] : memref<144xf32, #tpu.memory_space<smem>>
    %781 = vector.broadcast %780 : f32 to vector<1x256xf32>
    %782 = arith.mulf %781, %771 : vector<1x256xf32>
    %783 = arith.addf %765, %782 : vector<1x256xf32>
    %c19_102 = arith.constant 19 : index
    %784 = memref.load %arg5[%c19_102] : memref<144xf32, #tpu.memory_space<smem>>
    %785 = vector.broadcast %784 : f32 to vector<1x256xf32>
    %786 = arith.mulf %785, %771 : vector<1x256xf32>
    %787 = arith.addf %769, %786 : vector<1x256xf32>
    %c32_i32_103 = arith.constant 32 : i32
    %788 = tpu.dynamic_rotate %683 by %c32_i32_103 dim 1 : vector<1x256xf32>, i32 -> vector<1x256xf32>
    %789 = arith.mulf %788, %3 : vector<1x256xf32>
    %c20_104 = arith.constant 20 : index
    %790 = memref.load %arg5[%c20_104] : memref<144xf32, #tpu.memory_space<smem>>
    %791 = vector.broadcast %790 : f32 to vector<1x256xf32>
    %792 = arith.mulf %791, %789 : vector<1x256xf32>
    %793 = arith.addf %775, %792 : vector<1x256xf32>
    %c21_105 = arith.constant 21 : index
    %794 = memref.load %arg5[%c21_105] : memref<144xf32, #tpu.memory_space<smem>>
    %795 = vector.broadcast %794 : f32 to vector<1x256xf32>
    %796 = arith.mulf %795, %789 : vector<1x256xf32>
    %797 = arith.addf %779, %796 : vector<1x256xf32>
    %c22_106 = arith.constant 22 : index
    %798 = memref.load %arg5[%c22_106] : memref<144xf32, #tpu.memory_space<smem>>
    %799 = vector.broadcast %798 : f32 to vector<1x256xf32>
    %800 = arith.mulf %799, %789 : vector<1x256xf32>
    %801 = arith.addf %783, %800 : vector<1x256xf32>
    %c23_107 = arith.constant 23 : index
    %802 = memref.load %arg5[%c23_107] : memref<144xf32, #tpu.memory_space<smem>>
    %803 = vector.broadcast %802 : f32 to vector<1x256xf32>
    %804 = arith.mulf %803, %789 : vector<1x256xf32>
    %805 = arith.addf %787, %804 : vector<1x256xf32>
    %c32_i32_108 = arith.constant 32 : i32
    %806 = tpu.dynamic_rotate %688 by %c32_i32_108 dim 1 : vector<1x256xf32>, i32 -> vector<1x256xf32>
    %807 = arith.mulf %806, %3 : vector<1x256xf32>
    %c24_109 = arith.constant 24 : index
    %808 = memref.load %arg5[%c24_109] : memref<144xf32, #tpu.memory_space<smem>>
    %809 = vector.broadcast %808 : f32 to vector<1x256xf32>
    %810 = arith.mulf %809, %807 : vector<1x256xf32>
    %811 = arith.addf %793, %810 : vector<1x256xf32>
    %c25_110 = arith.constant 25 : index
    %812 = memref.load %arg5[%c25_110] : memref<144xf32, #tpu.memory_space<smem>>
    %813 = vector.broadcast %812 : f32 to vector<1x256xf32>
    %814 = arith.mulf %813, %807 : vector<1x256xf32>
    %815 = arith.addf %797, %814 : vector<1x256xf32>
    %c26_111 = arith.constant 26 : index
    %816 = memref.load %arg5[%c26_111] : memref<144xf32, #tpu.memory_space<smem>>
    %817 = vector.broadcast %816 : f32 to vector<1x256xf32>
    %818 = arith.mulf %817, %807 : vector<1x256xf32>
    %819 = arith.addf %801, %818 : vector<1x256xf32>
    %c27_112 = arith.constant 27 : index
    %820 = memref.load %arg5[%c27_112] : memref<144xf32, #tpu.memory_space<smem>>
    %821 = vector.broadcast %820 : f32 to vector<1x256xf32>
    %822 = arith.mulf %821, %807 : vector<1x256xf32>
    %823 = arith.addf %805, %822 : vector<1x256xf32>
    %c32_i32_113 = arith.constant 32 : i32
    %824 = tpu.dynamic_rotate %693 by %c32_i32_113 dim 1 : vector<1x256xf32>, i32 -> vector<1x256xf32>
    %825 = arith.mulf %824, %3 : vector<1x256xf32>
    %c28_114 = arith.constant 28 : index
    %826 = memref.load %arg5[%c28_114] : memref<144xf32, #tpu.memory_space<smem>>
    %827 = vector.broadcast %826 : f32 to vector<1x256xf32>
    %828 = arith.mulf %827, %825 : vector<1x256xf32>
    %829 = arith.addf %811, %828 : vector<1x256xf32>
    %c29_115 = arith.constant 29 : index
    %830 = memref.load %arg5[%c29_115] : memref<144xf32, #tpu.memory_space<smem>>
    %831 = vector.broadcast %830 : f32 to vector<1x256xf32>
    %832 = arith.mulf %831, %825 : vector<1x256xf32>
    %833 = arith.addf %815, %832 : vector<1x256xf32>
    %c30_116 = arith.constant 30 : index
    %834 = memref.load %arg5[%c30_116] : memref<144xf32, #tpu.memory_space<smem>>
    %835 = vector.broadcast %834 : f32 to vector<1x256xf32>
    %836 = arith.mulf %835, %825 : vector<1x256xf32>
    %837 = arith.addf %819, %836 : vector<1x256xf32>
    %c31_117 = arith.constant 31 : index
    %838 = memref.load %arg5[%c31_117] : memref<144xf32, #tpu.memory_space<smem>>
    %839 = vector.broadcast %838 : f32 to vector<1x256xf32>
    %840 = arith.mulf %839, %825 : vector<1x256xf32>
    %841 = arith.addf %823, %840 : vector<1x256xf32>
    %c30_i32_118 = arith.constant 30 : i32
    %842 = tpu.dynamic_rotate %678 by %c30_i32_118 dim 1 : vector<1x256xf32>, i32 -> vector<1x256xf32>
    %843 = arith.mulf %842, %5 : vector<1x256xf32>
    %c32_119 = arith.constant 32 : index
    %844 = memref.load %arg5[%c32_119] : memref<144xf32, #tpu.memory_space<smem>>
    %845 = vector.broadcast %844 : f32 to vector<1x256xf32>
    %846 = arith.mulf %845, %843 : vector<1x256xf32>
    %847 = arith.addf %829, %846 : vector<1x256xf32>
    %c33_120 = arith.constant 33 : index
    %848 = memref.load %arg5[%c33_120] : memref<144xf32, #tpu.memory_space<smem>>
    %849 = vector.broadcast %848 : f32 to vector<1x256xf32>
    %850 = arith.mulf %849, %843 : vector<1x256xf32>
    %851 = arith.addf %833, %850 : vector<1x256xf32>
    %c34_121 = arith.constant 34 : index
    %852 = memref.load %arg5[%c34_121] : memref<144xf32, #tpu.memory_space<smem>>
    %853 = vector.broadcast %852 : f32 to vector<1x256xf32>
    %854 = arith.mulf %853, %843 : vector<1x256xf32>
    %855 = arith.addf %837, %854 : vector<1x256xf32>
    %c35_122 = arith.constant 35 : index
    %856 = memref.load %arg5[%c35_122] : memref<144xf32, #tpu.memory_space<smem>>
    %857 = vector.broadcast %856 : f32 to vector<1x256xf32>
    %858 = arith.mulf %857, %843 : vector<1x256xf32>
    %859 = arith.addf %841, %858 : vector<1x256xf32>
    %c30_i32_123 = arith.constant 30 : i32
    %860 = tpu.dynamic_rotate %683 by %c30_i32_123 dim 1 : vector<1x256xf32>, i32 -> vector<1x256xf32>
    %861 = arith.mulf %860, %5 : vector<1x256xf32>
    %c36_124 = arith.constant 36 : index
    %862 = memref.load %arg5[%c36_124] : memref<144xf32, #tpu.memory_space<smem>>
    %863 = vector.broadcast %862 : f32 to vector<1x256xf32>
    %864 = arith.mulf %863, %861 : vector<1x256xf32>
    %865 = arith.addf %847, %864 : vector<1x256xf32>
    %c37_125 = arith.constant 37 : index
    %866 = memref.load %arg5[%c37_125] : memref<144xf32, #tpu.memory_space<smem>>
    %867 = vector.broadcast %866 : f32 to vector<1x256xf32>
    %868 = arith.mulf %867, %861 : vector<1x256xf32>
    %869 = arith.addf %851, %868 : vector<1x256xf32>
    %c38_126 = arith.constant 38 : index
    %870 = memref.load %arg5[%c38_126] : memref<144xf32, #tpu.memory_space<smem>>
    %871 = vector.broadcast %870 : f32 to vector<1x256xf32>
    %872 = arith.mulf %871, %861 : vector<1x256xf32>
    %873 = arith.addf %855, %872 : vector<1x256xf32>
    %c39_127 = arith.constant 39 : index
    %874 = memref.load %arg5[%c39_127] : memref<144xf32, #tpu.memory_space<smem>>
    %875 = vector.broadcast %874 : f32 to vector<1x256xf32>
    %876 = arith.mulf %875, %861 : vector<1x256xf32>
    %877 = arith.addf %859, %876 : vector<1x256xf32>
    %c30_i32_128 = arith.constant 30 : i32
    %878 = tpu.dynamic_rotate %688 by %c30_i32_128 dim 1 : vector<1x256xf32>, i32 -> vector<1x256xf32>
    %879 = arith.mulf %878, %5 : vector<1x256xf32>
    %c40_129 = arith.constant 40 : index
    %880 = memref.load %arg5[%c40_129] : memref<144xf32, #tpu.memory_space<smem>>
    %881 = vector.broadcast %880 : f32 to vector<1x256xf32>
    %882 = arith.mulf %881, %879 : vector<1x256xf32>
    %883 = arith.addf %865, %882 : vector<1x256xf32>
    %c41_130 = arith.constant 41 : index
    %884 = memref.load %arg5[%c41_130] : memref<144xf32, #tpu.memory_space<smem>>
    %885 = vector.broadcast %884 : f32 to vector<1x256xf32>
    %886 = arith.mulf %885, %879 : vector<1x256xf32>
    %887 = arith.addf %869, %886 : vector<1x256xf32>
    %c42_131 = arith.constant 42 : index
    %888 = memref.load %arg5[%c42_131] : memref<144xf32, #tpu.memory_space<smem>>
    %889 = vector.broadcast %888 : f32 to vector<1x256xf32>
    %890 = arith.mulf %889, %879 : vector<1x256xf32>
    %891 = arith.addf %873, %890 : vector<1x256xf32>
    %c43_132 = arith.constant 43 : index
    %892 = memref.load %arg5[%c43_132] : memref<144xf32, #tpu.memory_space<smem>>
    %893 = vector.broadcast %892 : f32 to vector<1x256xf32>
    %894 = arith.mulf %893, %879 : vector<1x256xf32>
    %895 = arith.addf %877, %894 : vector<1x256xf32>
    %c30_i32_133 = arith.constant 30 : i32
    %896 = tpu.dynamic_rotate %693 by %c30_i32_133 dim 1 : vector<1x256xf32>, i32 -> vector<1x256xf32>
    %897 = arith.mulf %896, %5 : vector<1x256xf32>
    %c44_134 = arith.constant 44 : index
    %898 = memref.load %arg5[%c44_134] : memref<144xf32, #tpu.memory_space<smem>>
    %899 = vector.broadcast %898 : f32 to vector<1x256xf32>
    %900 = arith.mulf %899, %897 : vector<1x256xf32>
    %901 = arith.addf %883, %900 : vector<1x256xf32>
    %c45_135 = arith.constant 45 : index
    %902 = memref.load %arg5[%c45_135] : memref<144xf32, #tpu.memory_space<smem>>
    %903 = vector.broadcast %902 : f32 to vector<1x256xf32>
    %904 = arith.mulf %903, %897 : vector<1x256xf32>
    %905 = arith.addf %887, %904 : vector<1x256xf32>
    %c46_136 = arith.constant 46 : index
    %906 = memref.load %arg5[%c46_136] : memref<144xf32, #tpu.memory_space<smem>>
    %907 = vector.broadcast %906 : f32 to vector<1x256xf32>
    %908 = arith.mulf %907, %897 : vector<1x256xf32>
    %909 = arith.addf %891, %908 : vector<1x256xf32>
    %c47_137 = arith.constant 47 : index
    %910 = memref.load %arg5[%c47_137] : memref<144xf32, #tpu.memory_space<smem>>
    %911 = vector.broadcast %910 : f32 to vector<1x256xf32>
    %912 = arith.mulf %911, %897 : vector<1x256xf32>
    %913 = arith.addf %895, %912 : vector<1x256xf32>
    %c2_i32_138 = arith.constant 2 : i32
    %914 = tpu.dynamic_rotate %678 by %c2_i32_138 dim 1 : vector<1x256xf32>, i32 -> vector<1x256xf32>
    %915 = arith.mulf %914, %7 : vector<1x256xf32>
    %c48_139 = arith.constant 48 : index
    %916 = memref.load %arg5[%c48_139] : memref<144xf32, #tpu.memory_space<smem>>
    %917 = vector.broadcast %916 : f32 to vector<1x256xf32>
    %918 = arith.mulf %917, %915 : vector<1x256xf32>
    %919 = arith.addf %901, %918 : vector<1x256xf32>
    %c49_140 = arith.constant 49 : index
    %920 = memref.load %arg5[%c49_140] : memref<144xf32, #tpu.memory_space<smem>>
    %921 = vector.broadcast %920 : f32 to vector<1x256xf32>
    %922 = arith.mulf %921, %915 : vector<1x256xf32>
    %923 = arith.addf %905, %922 : vector<1x256xf32>
    %c50_141 = arith.constant 50 : index
    %924 = memref.load %arg5[%c50_141] : memref<144xf32, #tpu.memory_space<smem>>
    %925 = vector.broadcast %924 : f32 to vector<1x256xf32>
    %926 = arith.mulf %925, %915 : vector<1x256xf32>
    %927 = arith.addf %909, %926 : vector<1x256xf32>
    %c51_142 = arith.constant 51 : index
    %928 = memref.load %arg5[%c51_142] : memref<144xf32, #tpu.memory_space<smem>>
    %929 = vector.broadcast %928 : f32 to vector<1x256xf32>
    %930 = arith.mulf %929, %915 : vector<1x256xf32>
    %931 = arith.addf %913, %930 : vector<1x256xf32>
    %c2_i32_143 = arith.constant 2 : i32
    %932 = tpu.dynamic_rotate %683 by %c2_i32_143 dim 1 : vector<1x256xf32>, i32 -> vector<1x256xf32>
    %933 = arith.mulf %932, %7 : vector<1x256xf32>
    %c52_144 = arith.constant 52 : index
    %934 = memref.load %arg5[%c52_144] : memref<144xf32, #tpu.memory_space<smem>>
    %935 = vector.broadcast %934 : f32 to vector<1x256xf32>
    %936 = arith.mulf %935, %933 : vector<1x256xf32>
    %937 = arith.addf %919, %936 : vector<1x256xf32>
    %c53_145 = arith.constant 53 : index
    %938 = memref.load %arg5[%c53_145] : memref<144xf32, #tpu.memory_space<smem>>
    %939 = vector.broadcast %938 : f32 to vector<1x256xf32>
    %940 = arith.mulf %939, %933 : vector<1x256xf32>
    %941 = arith.addf %923, %940 : vector<1x256xf32>
    %c54_146 = arith.constant 54 : index
    %942 = memref.load %arg5[%c54_146] : memref<144xf32, #tpu.memory_space<smem>>
    %943 = vector.broadcast %942 : f32 to vector<1x256xf32>
    %944 = arith.mulf %943, %933 : vector<1x256xf32>
    %945 = arith.addf %927, %944 : vector<1x256xf32>
    %c55_147 = arith.constant 55 : index
    %946 = memref.load %arg5[%c55_147] : memref<144xf32, #tpu.memory_space<smem>>
    %947 = vector.broadcast %946 : f32 to vector<1x256xf32>
    %948 = arith.mulf %947, %933 : vector<1x256xf32>
    %949 = arith.addf %931, %948 : vector<1x256xf32>
    %c2_i32_148 = arith.constant 2 : i32
    %950 = tpu.dynamic_rotate %688 by %c2_i32_148 dim 1 : vector<1x256xf32>, i32 -> vector<1x256xf32>
    %951 = arith.mulf %950, %7 : vector<1x256xf32>
    %c56_149 = arith.constant 56 : index
    %952 = memref.load %arg5[%c56_149] : memref<144xf32, #tpu.memory_space<smem>>
    %953 = vector.broadcast %952 : f32 to vector<1x256xf32>
    %954 = arith.mulf %953, %951 : vector<1x256xf32>
    %955 = arith.addf %937, %954 : vector<1x256xf32>
    %c57_150 = arith.constant 57 : index
    %956 = memref.load %arg5[%c57_150] : memref<144xf32, #tpu.memory_space<smem>>
    %957 = vector.broadcast %956 : f32 to vector<1x256xf32>
    %958 = arith.mulf %957, %951 : vector<1x256xf32>
    %959 = arith.addf %941, %958 : vector<1x256xf32>
    %c58_151 = arith.constant 58 : index
    %960 = memref.load %arg5[%c58_151] : memref<144xf32, #tpu.memory_space<smem>>
    %961 = vector.broadcast %960 : f32 to vector<1x256xf32>
    %962 = arith.mulf %961, %951 : vector<1x256xf32>
    %963 = arith.addf %945, %962 : vector<1x256xf32>
    %c59_152 = arith.constant 59 : index
    %964 = memref.load %arg5[%c59_152] : memref<144xf32, #tpu.memory_space<smem>>
    %965 = vector.broadcast %964 : f32 to vector<1x256xf32>
    %966 = arith.mulf %965, %951 : vector<1x256xf32>
    %967 = arith.addf %949, %966 : vector<1x256xf32>
    %c2_i32_153 = arith.constant 2 : i32
    %968 = tpu.dynamic_rotate %693 by %c2_i32_153 dim 1 : vector<1x256xf32>, i32 -> vector<1x256xf32>
    %969 = arith.mulf %968, %7 : vector<1x256xf32>
    %c60_154 = arith.constant 60 : index
    %970 = memref.load %arg5[%c60_154] : memref<144xf32, #tpu.memory_space<smem>>
    %971 = vector.broadcast %970 : f32 to vector<1x256xf32>
    %972 = arith.mulf %971, %969 : vector<1x256xf32>
    %973 = arith.addf %955, %972 : vector<1x256xf32>
    %c61_155 = arith.constant 61 : index
    %974 = memref.load %arg5[%c61_155] : memref<144xf32, #tpu.memory_space<smem>>
    %975 = vector.broadcast %974 : f32 to vector<1x256xf32>
    %976 = arith.mulf %975, %969 : vector<1x256xf32>
    %977 = arith.addf %959, %976 : vector<1x256xf32>
    %c62_156 = arith.constant 62 : index
    %978 = memref.load %arg5[%c62_156] : memref<144xf32, #tpu.memory_space<smem>>
    %979 = vector.broadcast %978 : f32 to vector<1x256xf32>
    %980 = arith.mulf %979, %969 : vector<1x256xf32>
    %981 = arith.addf %963, %980 : vector<1x256xf32>
    %c63_157 = arith.constant 63 : index
    %982 = memref.load %arg5[%c63_157] : memref<144xf32, #tpu.memory_space<smem>>
    %983 = vector.broadcast %982 : f32 to vector<1x256xf32>
    %984 = arith.mulf %983, %969 : vector<1x256xf32>
    %985 = arith.addf %967, %984 : vector<1x256xf32>
    %986 = arith.mulf %678, %9 : vector<1x256xf32>
    %c64_158 = arith.constant 64 : index
    %987 = memref.load %arg5[%c64_158] : memref<144xf32, #tpu.memory_space<smem>>
    %988 = vector.broadcast %987 : f32 to vector<1x256xf32>
    %989 = arith.mulf %988, %986 : vector<1x256xf32>
    %990 = arith.addf %973, %989 : vector<1x256xf32>
    %c65_159 = arith.constant 65 : index
    %991 = memref.load %arg5[%c65_159] : memref<144xf32, #tpu.memory_space<smem>>
    %992 = vector.broadcast %991 : f32 to vector<1x256xf32>
    %993 = arith.mulf %992, %986 : vector<1x256xf32>
    %994 = arith.addf %977, %993 : vector<1x256xf32>
    %c66_160 = arith.constant 66 : index
    %995 = memref.load %arg5[%c66_160] : memref<144xf32, #tpu.memory_space<smem>>
    %996 = vector.broadcast %995 : f32 to vector<1x256xf32>
    %997 = arith.mulf %996, %986 : vector<1x256xf32>
    %998 = arith.addf %981, %997 : vector<1x256xf32>
    %c67_161 = arith.constant 67 : index
    %999 = memref.load %arg5[%c67_161] : memref<144xf32, #tpu.memory_space<smem>>
    %1000 = vector.broadcast %999 : f32 to vector<1x256xf32>
    %1001 = arith.mulf %1000, %986 : vector<1x256xf32>
    %1002 = arith.addf %985, %1001 : vector<1x256xf32>
    %1003 = arith.mulf %683, %9 : vector<1x256xf32>
    %c68_162 = arith.constant 68 : index
    %1004 = memref.load %arg5[%c68_162] : memref<144xf32, #tpu.memory_space<smem>>
    %1005 = vector.broadcast %1004 : f32 to vector<1x256xf32>
    %1006 = arith.mulf %1005, %1003 : vector<1x256xf32>
    %1007 = arith.addf %990, %1006 : vector<1x256xf32>
    %c69_163 = arith.constant 69 : index
    %1008 = memref.load %arg5[%c69_163] : memref<144xf32, #tpu.memory_space<smem>>
    %1009 = vector.broadcast %1008 : f32 to vector<1x256xf32>
    %1010 = arith.mulf %1009, %1003 : vector<1x256xf32>
    %1011 = arith.addf %994, %1010 : vector<1x256xf32>
    %c70_164 = arith.constant 70 : index
    %1012 = memref.load %arg5[%c70_164] : memref<144xf32, #tpu.memory_space<smem>>
    %1013 = vector.broadcast %1012 : f32 to vector<1x256xf32>
    %1014 = arith.mulf %1013, %1003 : vector<1x256xf32>
    %1015 = arith.addf %998, %1014 : vector<1x256xf32>
    %c71_165 = arith.constant 71 : index
    %1016 = memref.load %arg5[%c71_165] : memref<144xf32, #tpu.memory_space<smem>>
    %1017 = vector.broadcast %1016 : f32 to vector<1x256xf32>
    %1018 = arith.mulf %1017, %1003 : vector<1x256xf32>
    %1019 = arith.addf %1002, %1018 : vector<1x256xf32>
    %1020 = arith.mulf %688, %9 : vector<1x256xf32>
    %c72_166 = arith.constant 72 : index
    %1021 = memref.load %arg5[%c72_166] : memref<144xf32, #tpu.memory_space<smem>>
    %1022 = vector.broadcast %1021 : f32 to vector<1x256xf32>
    %1023 = arith.mulf %1022, %1020 : vector<1x256xf32>
    %1024 = arith.addf %1007, %1023 : vector<1x256xf32>
    %c73_167 = arith.constant 73 : index
    %1025 = memref.load %arg5[%c73_167] : memref<144xf32, #tpu.memory_space<smem>>
    %1026 = vector.broadcast %1025 : f32 to vector<1x256xf32>
    %1027 = arith.mulf %1026, %1020 : vector<1x256xf32>
    %1028 = arith.addf %1011, %1027 : vector<1x256xf32>
    %c74_168 = arith.constant 74 : index
    %1029 = memref.load %arg5[%c74_168] : memref<144xf32, #tpu.memory_space<smem>>
    %1030 = vector.broadcast %1029 : f32 to vector<1x256xf32>
    %1031 = arith.mulf %1030, %1020 : vector<1x256xf32>
    %1032 = arith.addf %1015, %1031 : vector<1x256xf32>
    %c75_169 = arith.constant 75 : index
    %1033 = memref.load %arg5[%c75_169] : memref<144xf32, #tpu.memory_space<smem>>
    %1034 = vector.broadcast %1033 : f32 to vector<1x256xf32>
    %1035 = arith.mulf %1034, %1020 : vector<1x256xf32>
    %1036 = arith.addf %1019, %1035 : vector<1x256xf32>
    %1037 = arith.mulf %693, %9 : vector<1x256xf32>
    %c76_170 = arith.constant 76 : index
    %1038 = memref.load %arg5[%c76_170] : memref<144xf32, #tpu.memory_space<smem>>
    %1039 = vector.broadcast %1038 : f32 to vector<1x256xf32>
    %1040 = arith.mulf %1039, %1037 : vector<1x256xf32>
    %1041 = arith.addf %1024, %1040 : vector<1x256xf32>
    %c77_171 = arith.constant 77 : index
    %1042 = memref.load %arg5[%c77_171] : memref<144xf32, #tpu.memory_space<smem>>
    %1043 = vector.broadcast %1042 : f32 to vector<1x256xf32>
    %1044 = arith.mulf %1043, %1037 : vector<1x256xf32>
    %1045 = arith.addf %1028, %1044 : vector<1x256xf32>
    %c78_172 = arith.constant 78 : index
    %1046 = memref.load %arg5[%c78_172] : memref<144xf32, #tpu.memory_space<smem>>
    %1047 = vector.broadcast %1046 : f32 to vector<1x256xf32>
    %1048 = arith.mulf %1047, %1037 : vector<1x256xf32>
    %1049 = arith.addf %1032, %1048 : vector<1x256xf32>
    %c79_173 = arith.constant 79 : index
    %1050 = memref.load %arg5[%c79_173] : memref<144xf32, #tpu.memory_space<smem>>
    %1051 = vector.broadcast %1050 : f32 to vector<1x256xf32>
    %1052 = arith.mulf %1051, %1037 : vector<1x256xf32>
    %1053 = arith.addf %1036, %1052 : vector<1x256xf32>
    %c254_i32_174 = arith.constant 254 : i32
    %1054 = tpu.dynamic_rotate %678 by %c254_i32_174 dim 1 : vector<1x256xf32>, i32 -> vector<1x256xf32>
    %1055 = arith.mulf %1054, %11 : vector<1x256xf32>
    %c80_175 = arith.constant 80 : index
    %1056 = memref.load %arg5[%c80_175] : memref<144xf32, #tpu.memory_space<smem>>
    %1057 = vector.broadcast %1056 : f32 to vector<1x256xf32>
    %1058 = arith.mulf %1057, %1055 : vector<1x256xf32>
    %1059 = arith.addf %1041, %1058 : vector<1x256xf32>
    %c81_176 = arith.constant 81 : index
    %1060 = memref.load %arg5[%c81_176] : memref<144xf32, #tpu.memory_space<smem>>
    %1061 = vector.broadcast %1060 : f32 to vector<1x256xf32>
    %1062 = arith.mulf %1061, %1055 : vector<1x256xf32>
    %1063 = arith.addf %1045, %1062 : vector<1x256xf32>
    %c82_177 = arith.constant 82 : index
    %1064 = memref.load %arg5[%c82_177] : memref<144xf32, #tpu.memory_space<smem>>
    %1065 = vector.broadcast %1064 : f32 to vector<1x256xf32>
    %1066 = arith.mulf %1065, %1055 : vector<1x256xf32>
    %1067 = arith.addf %1049, %1066 : vector<1x256xf32>
    %c83_178 = arith.constant 83 : index
    %1068 = memref.load %arg5[%c83_178] : memref<144xf32, #tpu.memory_space<smem>>
    %1069 = vector.broadcast %1068 : f32 to vector<1x256xf32>
    %1070 = arith.mulf %1069, %1055 : vector<1x256xf32>
    %1071 = arith.addf %1053, %1070 : vector<1x256xf32>
    %c254_i32_179 = arith.constant 254 : i32
    %1072 = tpu.dynamic_rotate %683 by %c254_i32_179 dim 1 : vector<1x256xf32>, i32 -> vector<1x256xf32>
    %1073 = arith.mulf %1072, %11 : vector<1x256xf32>
    %c84_180 = arith.constant 84 : index
    %1074 = memref.load %arg5[%c84_180] : memref<144xf32, #tpu.memory_space<smem>>
    %1075 = vector.broadcast %1074 : f32 to vector<1x256xf32>
    %1076 = arith.mulf %1075, %1073 : vector<1x256xf32>
    %1077 = arith.addf %1059, %1076 : vector<1x256xf32>
    %c85_181 = arith.constant 85 : index
    %1078 = memref.load %arg5[%c85_181] : memref<144xf32, #tpu.memory_space<smem>>
    %1079 = vector.broadcast %1078 : f32 to vector<1x256xf32>
    %1080 = arith.mulf %1079, %1073 : vector<1x256xf32>
    %1081 = arith.addf %1063, %1080 : vector<1x256xf32>
    %c86_182 = arith.constant 86 : index
    %1082 = memref.load %arg5[%c86_182] : memref<144xf32, #tpu.memory_space<smem>>
    %1083 = vector.broadcast %1082 : f32 to vector<1x256xf32>
    %1084 = arith.mulf %1083, %1073 : vector<1x256xf32>
    %1085 = arith.addf %1067, %1084 : vector<1x256xf32>
    %c87_183 = arith.constant 87 : index
    %1086 = memref.load %arg5[%c87_183] : memref<144xf32, #tpu.memory_space<smem>>
    %1087 = vector.broadcast %1086 : f32 to vector<1x256xf32>
    %1088 = arith.mulf %1087, %1073 : vector<1x256xf32>
    %1089 = arith.addf %1071, %1088 : vector<1x256xf32>
    %c254_i32_184 = arith.constant 254 : i32
    %1090 = tpu.dynamic_rotate %688 by %c254_i32_184 dim 1 : vector<1x256xf32>, i32 -> vector<1x256xf32>
    %1091 = arith.mulf %1090, %11 : vector<1x256xf32>
    %c88_185 = arith.constant 88 : index
    %1092 = memref.load %arg5[%c88_185] : memref<144xf32, #tpu.memory_space<smem>>
    %1093 = vector.broadcast %1092 : f32 to vector<1x256xf32>
    %1094 = arith.mulf %1093, %1091 : vector<1x256xf32>
    %1095 = arith.addf %1077, %1094 : vector<1x256xf32>
    %c89_186 = arith.constant 89 : index
    %1096 = memref.load %arg5[%c89_186] : memref<144xf32, #tpu.memory_space<smem>>
    %1097 = vector.broadcast %1096 : f32 to vector<1x256xf32>
    %1098 = arith.mulf %1097, %1091 : vector<1x256xf32>
    %1099 = arith.addf %1081, %1098 : vector<1x256xf32>
    %c90_187 = arith.constant 90 : index
    %1100 = memref.load %arg5[%c90_187] : memref<144xf32, #tpu.memory_space<smem>>
    %1101 = vector.broadcast %1100 : f32 to vector<1x256xf32>
    %1102 = arith.mulf %1101, %1091 : vector<1x256xf32>
    %1103 = arith.addf %1085, %1102 : vector<1x256xf32>
    %c91_188 = arith.constant 91 : index
    %1104 = memref.load %arg5[%c91_188] : memref<144xf32, #tpu.memory_space<smem>>
    %1105 = vector.broadcast %1104 : f32 to vector<1x256xf32>
    %1106 = arith.mulf %1105, %1091 : vector<1x256xf32>
    %1107 = arith.addf %1089, %1106 : vector<1x256xf32>
    %c254_i32_189 = arith.constant 254 : i32
    %1108 = tpu.dynamic_rotate %693 by %c254_i32_189 dim 1 : vector<1x256xf32>, i32 -> vector<1x256xf32>
    %1109 = arith.mulf %1108, %11 : vector<1x256xf32>
    %c92_190 = arith.constant 92 : index
    %1110 = memref.load %arg5[%c92_190] : memref<144xf32, #tpu.memory_space<smem>>
    %1111 = vector.broadcast %1110 : f32 to vector<1x256xf32>
    %1112 = arith.mulf %1111, %1109 : vector<1x256xf32>
    %1113 = arith.addf %1095, %1112 : vector<1x256xf32>
    %c93_191 = arith.constant 93 : index
    %1114 = memref.load %arg5[%c93_191] : memref<144xf32, #tpu.memory_space<smem>>
    %1115 = vector.broadcast %1114 : f32 to vector<1x256xf32>
    %1116 = arith.mulf %1115, %1109 : vector<1x256xf32>
    %1117 = arith.addf %1099, %1116 : vector<1x256xf32>
    %c94_192 = arith.constant 94 : index
    %1118 = memref.load %arg5[%c94_192] : memref<144xf32, #tpu.memory_space<smem>>
    %1119 = vector.broadcast %1118 : f32 to vector<1x256xf32>
    %1120 = arith.mulf %1119, %1109 : vector<1x256xf32>
    %1121 = arith.addf %1103, %1120 : vector<1x256xf32>
    %c95_193 = arith.constant 95 : index
    %1122 = memref.load %arg5[%c95_193] : memref<144xf32, #tpu.memory_space<smem>>
    %1123 = vector.broadcast %1122 : f32 to vector<1x256xf32>
    %1124 = arith.mulf %1123, %1109 : vector<1x256xf32>
    %1125 = arith.addf %1107, %1124 : vector<1x256xf32>
    %c226_i32_194 = arith.constant 226 : i32
    %1126 = tpu.dynamic_rotate %678 by %c226_i32_194 dim 1 : vector<1x256xf32>, i32 -> vector<1x256xf32>
    %1127 = arith.mulf %1126, %13 : vector<1x256xf32>
    %c96_195 = arith.constant 96 : index
    %1128 = memref.load %arg5[%c96_195] : memref<144xf32, #tpu.memory_space<smem>>
    %1129 = vector.broadcast %1128 : f32 to vector<1x256xf32>
    %1130 = arith.mulf %1129, %1127 : vector<1x256xf32>
    %1131 = arith.addf %1113, %1130 : vector<1x256xf32>
    %c97_196 = arith.constant 97 : index
    %1132 = memref.load %arg5[%c97_196] : memref<144xf32, #tpu.memory_space<smem>>
    %1133 = vector.broadcast %1132 : f32 to vector<1x256xf32>
    %1134 = arith.mulf %1133, %1127 : vector<1x256xf32>
    %1135 = arith.addf %1117, %1134 : vector<1x256xf32>
    %c98_197 = arith.constant 98 : index
    %1136 = memref.load %arg5[%c98_197] : memref<144xf32, #tpu.memory_space<smem>>
    %1137 = vector.broadcast %1136 : f32 to vector<1x256xf32>
    %1138 = arith.mulf %1137, %1127 : vector<1x256xf32>
    %1139 = arith.addf %1121, %1138 : vector<1x256xf32>
    %c99_198 = arith.constant 99 : index
    %1140 = memref.load %arg5[%c99_198] : memref<144xf32, #tpu.memory_space<smem>>
    %1141 = vector.broadcast %1140 : f32 to vector<1x256xf32>
    %1142 = arith.mulf %1141, %1127 : vector<1x256xf32>
    %1143 = arith.addf %1125, %1142 : vector<1x256xf32>
    %c226_i32_199 = arith.constant 226 : i32
    %1144 = tpu.dynamic_rotate %683 by %c226_i32_199 dim 1 : vector<1x256xf32>, i32 -> vector<1x256xf32>
    %1145 = arith.mulf %1144, %13 : vector<1x256xf32>
    %c100_200 = arith.constant 100 : index
    %1146 = memref.load %arg5[%c100_200] : memref<144xf32, #tpu.memory_space<smem>>
    %1147 = vector.broadcast %1146 : f32 to vector<1x256xf32>
    %1148 = arith.mulf %1147, %1145 : vector<1x256xf32>
    %1149 = arith.addf %1131, %1148 : vector<1x256xf32>
    %c101_201 = arith.constant 101 : index
    %1150 = memref.load %arg5[%c101_201] : memref<144xf32, #tpu.memory_space<smem>>
    %1151 = vector.broadcast %1150 : f32 to vector<1x256xf32>
    %1152 = arith.mulf %1151, %1145 : vector<1x256xf32>
    %1153 = arith.addf %1135, %1152 : vector<1x256xf32>
    %c102_202 = arith.constant 102 : index
    %1154 = memref.load %arg5[%c102_202] : memref<144xf32, #tpu.memory_space<smem>>
    %1155 = vector.broadcast %1154 : f32 to vector<1x256xf32>
    %1156 = arith.mulf %1155, %1145 : vector<1x256xf32>
    %1157 = arith.addf %1139, %1156 : vector<1x256xf32>
    %c103_203 = arith.constant 103 : index
    %1158 = memref.load %arg5[%c103_203] : memref<144xf32, #tpu.memory_space<smem>>
    %1159 = vector.broadcast %1158 : f32 to vector<1x256xf32>
    %1160 = arith.mulf %1159, %1145 : vector<1x256xf32>
    %1161 = arith.addf %1143, %1160 : vector<1x256xf32>
    %c226_i32_204 = arith.constant 226 : i32
    %1162 = tpu.dynamic_rotate %688 by %c226_i32_204 dim 1 : vector<1x256xf32>, i32 -> vector<1x256xf32>
    %1163 = arith.mulf %1162, %13 : vector<1x256xf32>
    %c104_205 = arith.constant 104 : index
    %1164 = memref.load %arg5[%c104_205] : memref<144xf32, #tpu.memory_space<smem>>
    %1165 = vector.broadcast %1164 : f32 to vector<1x256xf32>
    %1166 = arith.mulf %1165, %1163 : vector<1x256xf32>
    %1167 = arith.addf %1149, %1166 : vector<1x256xf32>
    %c105_206 = arith.constant 105 : index
    %1168 = memref.load %arg5[%c105_206] : memref<144xf32, #tpu.memory_space<smem>>
    %1169 = vector.broadcast %1168 : f32 to vector<1x256xf32>
    %1170 = arith.mulf %1169, %1163 : vector<1x256xf32>
    %1171 = arith.addf %1153, %1170 : vector<1x256xf32>
    %c106_207 = arith.constant 106 : index
    %1172 = memref.load %arg5[%c106_207] : memref<144xf32, #tpu.memory_space<smem>>
    %1173 = vector.broadcast %1172 : f32 to vector<1x256xf32>
    %1174 = arith.mulf %1173, %1163 : vector<1x256xf32>
    %1175 = arith.addf %1157, %1174 : vector<1x256xf32>
    %c107_208 = arith.constant 107 : index
    %1176 = memref.load %arg5[%c107_208] : memref<144xf32, #tpu.memory_space<smem>>
    %1177 = vector.broadcast %1176 : f32 to vector<1x256xf32>
    %1178 = arith.mulf %1177, %1163 : vector<1x256xf32>
    %1179 = arith.addf %1161, %1178 : vector<1x256xf32>
    %c226_i32_209 = arith.constant 226 : i32
    %1180 = tpu.dynamic_rotate %693 by %c226_i32_209 dim 1 : vector<1x256xf32>, i32 -> vector<1x256xf32>
    %1181 = arith.mulf %1180, %13 : vector<1x256xf32>
    %c108_210 = arith.constant 108 : index
    %1182 = memref.load %arg5[%c108_210] : memref<144xf32, #tpu.memory_space<smem>>
    %1183 = vector.broadcast %1182 : f32 to vector<1x256xf32>
    %1184 = arith.mulf %1183, %1181 : vector<1x256xf32>
    %1185 = arith.addf %1167, %1184 : vector<1x256xf32>
    %c109_211 = arith.constant 109 : index
    %1186 = memref.load %arg5[%c109_211] : memref<144xf32, #tpu.memory_space<smem>>
    %1187 = vector.broadcast %1186 : f32 to vector<1x256xf32>
    %1188 = arith.mulf %1187, %1181 : vector<1x256xf32>
    %1189 = arith.addf %1171, %1188 : vector<1x256xf32>
    %c110_212 = arith.constant 110 : index
    %1190 = memref.load %arg5[%c110_212] : memref<144xf32, #tpu.memory_space<smem>>
    %1191 = vector.broadcast %1190 : f32 to vector<1x256xf32>
    %1192 = arith.mulf %1191, %1181 : vector<1x256xf32>
    %1193 = arith.addf %1175, %1192 : vector<1x256xf32>
    %c111_213 = arith.constant 111 : index
    %1194 = memref.load %arg5[%c111_213] : memref<144xf32, #tpu.memory_space<smem>>
    %1195 = vector.broadcast %1194 : f32 to vector<1x256xf32>
    %1196 = arith.mulf %1195, %1181 : vector<1x256xf32>
    %1197 = arith.addf %1179, %1196 : vector<1x256xf32>
    %c224_i32_214 = arith.constant 224 : i32
    %1198 = tpu.dynamic_rotate %678 by %c224_i32_214 dim 1 : vector<1x256xf32>, i32 -> vector<1x256xf32>
    %1199 = arith.mulf %1198, %15 : vector<1x256xf32>
    %c112_215 = arith.constant 112 : index
    %1200 = memref.load %arg5[%c112_215] : memref<144xf32, #tpu.memory_space<smem>>
    %1201 = vector.broadcast %1200 : f32 to vector<1x256xf32>
    %1202 = arith.mulf %1201, %1199 : vector<1x256xf32>
    %1203 = arith.addf %1185, %1202 : vector<1x256xf32>
    %c113_216 = arith.constant 113 : index
    %1204 = memref.load %arg5[%c113_216] : memref<144xf32, #tpu.memory_space<smem>>
    %1205 = vector.broadcast %1204 : f32 to vector<1x256xf32>
    %1206 = arith.mulf %1205, %1199 : vector<1x256xf32>
    %1207 = arith.addf %1189, %1206 : vector<1x256xf32>
    %c114_217 = arith.constant 114 : index
    %1208 = memref.load %arg5[%c114_217] : memref<144xf32, #tpu.memory_space<smem>>
    %1209 = vector.broadcast %1208 : f32 to vector<1x256xf32>
    %1210 = arith.mulf %1209, %1199 : vector<1x256xf32>
    %1211 = arith.addf %1193, %1210 : vector<1x256xf32>
    %c115_218 = arith.constant 115 : index
    %1212 = memref.load %arg5[%c115_218] : memref<144xf32, #tpu.memory_space<smem>>
    %1213 = vector.broadcast %1212 : f32 to vector<1x256xf32>
    %1214 = arith.mulf %1213, %1199 : vector<1x256xf32>
    %1215 = arith.addf %1197, %1214 : vector<1x256xf32>
    %c224_i32_219 = arith.constant 224 : i32
    %1216 = tpu.dynamic_rotate %683 by %c224_i32_219 dim 1 : vector<1x256xf32>, i32 -> vector<1x256xf32>
    %1217 = arith.mulf %1216, %15 : vector<1x256xf32>
    %c116_220 = arith.constant 116 : index
    %1218 = memref.load %arg5[%c116_220] : memref<144xf32, #tpu.memory_space<smem>>
    %1219 = vector.broadcast %1218 : f32 to vector<1x256xf32>
    %1220 = arith.mulf %1219, %1217 : vector<1x256xf32>
    %1221 = arith.addf %1203, %1220 : vector<1x256xf32>
    %c117_221 = arith.constant 117 : index
    %1222 = memref.load %arg5[%c117_221] : memref<144xf32, #tpu.memory_space<smem>>
    %1223 = vector.broadcast %1222 : f32 to vector<1x256xf32>
    %1224 = arith.mulf %1223, %1217 : vector<1x256xf32>
    %1225 = arith.addf %1207, %1224 : vector<1x256xf32>
    %c118_222 = arith.constant 118 : index
    %1226 = memref.load %arg5[%c118_222] : memref<144xf32, #tpu.memory_space<smem>>
    %1227 = vector.broadcast %1226 : f32 to vector<1x256xf32>
    %1228 = arith.mulf %1227, %1217 : vector<1x256xf32>
    %1229 = arith.addf %1211, %1228 : vector<1x256xf32>
    %c119_223 = arith.constant 119 : index
    %1230 = memref.load %arg5[%c119_223] : memref<144xf32, #tpu.memory_space<smem>>
    %1231 = vector.broadcast %1230 : f32 to vector<1x256xf32>
    %1232 = arith.mulf %1231, %1217 : vector<1x256xf32>
    %1233 = arith.addf %1215, %1232 : vector<1x256xf32>
    %c224_i32_224 = arith.constant 224 : i32
    %1234 = tpu.dynamic_rotate %688 by %c224_i32_224 dim 1 : vector<1x256xf32>, i32 -> vector<1x256xf32>
    %1235 = arith.mulf %1234, %15 : vector<1x256xf32>
    %c120_225 = arith.constant 120 : index
    %1236 = memref.load %arg5[%c120_225] : memref<144xf32, #tpu.memory_space<smem>>
    %1237 = vector.broadcast %1236 : f32 to vector<1x256xf32>
    %1238 = arith.mulf %1237, %1235 : vector<1x256xf32>
    %1239 = arith.addf %1221, %1238 : vector<1x256xf32>
    %c121_226 = arith.constant 121 : index
    %1240 = memref.load %arg5[%c121_226] : memref<144xf32, #tpu.memory_space<smem>>
    %1241 = vector.broadcast %1240 : f32 to vector<1x256xf32>
    %1242 = arith.mulf %1241, %1235 : vector<1x256xf32>
    %1243 = arith.addf %1225, %1242 : vector<1x256xf32>
    %c122_227 = arith.constant 122 : index
    %1244 = memref.load %arg5[%c122_227] : memref<144xf32, #tpu.memory_space<smem>>
    %1245 = vector.broadcast %1244 : f32 to vector<1x256xf32>
    %1246 = arith.mulf %1245, %1235 : vector<1x256xf32>
    %1247 = arith.addf %1229, %1246 : vector<1x256xf32>
    %c123_228 = arith.constant 123 : index
    %1248 = memref.load %arg5[%c123_228] : memref<144xf32, #tpu.memory_space<smem>>
    %1249 = vector.broadcast %1248 : f32 to vector<1x256xf32>
    %1250 = arith.mulf %1249, %1235 : vector<1x256xf32>
    %1251 = arith.addf %1233, %1250 : vector<1x256xf32>
    %c224_i32_229 = arith.constant 224 : i32
    %1252 = tpu.dynamic_rotate %693 by %c224_i32_229 dim 1 : vector<1x256xf32>, i32 -> vector<1x256xf32>
    %1253 = arith.mulf %1252, %15 : vector<1x256xf32>
    %c124_230 = arith.constant 124 : index
    %1254 = memref.load %arg5[%c124_230] : memref<144xf32, #tpu.memory_space<smem>>
    %1255 = vector.broadcast %1254 : f32 to vector<1x256xf32>
    %1256 = arith.mulf %1255, %1253 : vector<1x256xf32>
    %1257 = arith.addf %1239, %1256 : vector<1x256xf32>
    %c125_231 = arith.constant 125 : index
    %1258 = memref.load %arg5[%c125_231] : memref<144xf32, #tpu.memory_space<smem>>
    %1259 = vector.broadcast %1258 : f32 to vector<1x256xf32>
    %1260 = arith.mulf %1259, %1253 : vector<1x256xf32>
    %1261 = arith.addf %1243, %1260 : vector<1x256xf32>
    %c126_232 = arith.constant 126 : index
    %1262 = memref.load %arg5[%c126_232] : memref<144xf32, #tpu.memory_space<smem>>
    %1263 = vector.broadcast %1262 : f32 to vector<1x256xf32>
    %1264 = arith.mulf %1263, %1253 : vector<1x256xf32>
    %1265 = arith.addf %1247, %1264 : vector<1x256xf32>
    %c127_233 = arith.constant 127 : index
    %1266 = memref.load %arg5[%c127_233] : memref<144xf32, #tpu.memory_space<smem>>
    %1267 = vector.broadcast %1266 : f32 to vector<1x256xf32>
    %1268 = arith.mulf %1267, %1253 : vector<1x256xf32>
    %1269 = arith.addf %1251, %1268 : vector<1x256xf32>
    %c222_i32_234 = arith.constant 222 : i32
    %1270 = tpu.dynamic_rotate %678 by %c222_i32_234 dim 1 : vector<1x256xf32>, i32 -> vector<1x256xf32>
    %1271 = arith.mulf %1270, %17 : vector<1x256xf32>
    %c128_235 = arith.constant 128 : index
    %1272 = memref.load %arg5[%c128_235] : memref<144xf32, #tpu.memory_space<smem>>
    %1273 = vector.broadcast %1272 : f32 to vector<1x256xf32>
    %1274 = arith.mulf %1273, %1271 : vector<1x256xf32>
    %1275 = arith.addf %1257, %1274 : vector<1x256xf32>
    %c129_236 = arith.constant 129 : index
    %1276 = memref.load %arg5[%c129_236] : memref<144xf32, #tpu.memory_space<smem>>
    %1277 = vector.broadcast %1276 : f32 to vector<1x256xf32>
    %1278 = arith.mulf %1277, %1271 : vector<1x256xf32>
    %1279 = arith.addf %1261, %1278 : vector<1x256xf32>
    %c130_237 = arith.constant 130 : index
    %1280 = memref.load %arg5[%c130_237] : memref<144xf32, #tpu.memory_space<smem>>
    %1281 = vector.broadcast %1280 : f32 to vector<1x256xf32>
    %1282 = arith.mulf %1281, %1271 : vector<1x256xf32>
    %1283 = arith.addf %1265, %1282 : vector<1x256xf32>
    %c131_238 = arith.constant 131 : index
    %1284 = memref.load %arg5[%c131_238] : memref<144xf32, #tpu.memory_space<smem>>
    %1285 = vector.broadcast %1284 : f32 to vector<1x256xf32>
    %1286 = arith.mulf %1285, %1271 : vector<1x256xf32>
    %1287 = arith.addf %1269, %1286 : vector<1x256xf32>
    %c222_i32_239 = arith.constant 222 : i32
    %1288 = tpu.dynamic_rotate %683 by %c222_i32_239 dim 1 : vector<1x256xf32>, i32 -> vector<1x256xf32>
    %1289 = arith.mulf %1288, %17 : vector<1x256xf32>
    %c132_240 = arith.constant 132 : index
    %1290 = memref.load %arg5[%c132_240] : memref<144xf32, #tpu.memory_space<smem>>
    %1291 = vector.broadcast %1290 : f32 to vector<1x256xf32>
    %1292 = arith.mulf %1291, %1289 : vector<1x256xf32>
    %1293 = arith.addf %1275, %1292 : vector<1x256xf32>
    %c133_241 = arith.constant 133 : index
    %1294 = memref.load %arg5[%c133_241] : memref<144xf32, #tpu.memory_space<smem>>
    %1295 = vector.broadcast %1294 : f32 to vector<1x256xf32>
    %1296 = arith.mulf %1295, %1289 : vector<1x256xf32>
    %1297 = arith.addf %1279, %1296 : vector<1x256xf32>
    %c134_242 = arith.constant 134 : index
    %1298 = memref.load %arg5[%c134_242] : memref<144xf32, #tpu.memory_space<smem>>
    %1299 = vector.broadcast %1298 : f32 to vector<1x256xf32>
    %1300 = arith.mulf %1299, %1289 : vector<1x256xf32>
    %1301 = arith.addf %1283, %1300 : vector<1x256xf32>
    %c135_243 = arith.constant 135 : index
    %1302 = memref.load %arg5[%c135_243] : memref<144xf32, #tpu.memory_space<smem>>
    %1303 = vector.broadcast %1302 : f32 to vector<1x256xf32>
    %1304 = arith.mulf %1303, %1289 : vector<1x256xf32>
    %1305 = arith.addf %1287, %1304 : vector<1x256xf32>
    %c222_i32_244 = arith.constant 222 : i32
    %1306 = tpu.dynamic_rotate %688 by %c222_i32_244 dim 1 : vector<1x256xf32>, i32 -> vector<1x256xf32>
    %1307 = arith.mulf %1306, %17 : vector<1x256xf32>
    %c136_245 = arith.constant 136 : index
    %1308 = memref.load %arg5[%c136_245] : memref<144xf32, #tpu.memory_space<smem>>
    %1309 = vector.broadcast %1308 : f32 to vector<1x256xf32>
    %1310 = arith.mulf %1309, %1307 : vector<1x256xf32>
    %1311 = arith.addf %1293, %1310 : vector<1x256xf32>
    %c137_246 = arith.constant 137 : index
    %1312 = memref.load %arg5[%c137_246] : memref<144xf32, #tpu.memory_space<smem>>
    %1313 = vector.broadcast %1312 : f32 to vector<1x256xf32>
    %1314 = arith.mulf %1313, %1307 : vector<1x256xf32>
    %1315 = arith.addf %1297, %1314 : vector<1x256xf32>
    %c138_247 = arith.constant 138 : index
    %1316 = memref.load %arg5[%c138_247] : memref<144xf32, #tpu.memory_space<smem>>
    %1317 = vector.broadcast %1316 : f32 to vector<1x256xf32>
    %1318 = arith.mulf %1317, %1307 : vector<1x256xf32>
    %1319 = arith.addf %1301, %1318 : vector<1x256xf32>
    %c139_248 = arith.constant 139 : index
    %1320 = memref.load %arg5[%c139_248] : memref<144xf32, #tpu.memory_space<smem>>
    %1321 = vector.broadcast %1320 : f32 to vector<1x256xf32>
    %1322 = arith.mulf %1321, %1307 : vector<1x256xf32>
    %1323 = arith.addf %1305, %1322 : vector<1x256xf32>
    %c222_i32_249 = arith.constant 222 : i32
    %1324 = tpu.dynamic_rotate %693 by %c222_i32_249 dim 1 : vector<1x256xf32>, i32 -> vector<1x256xf32>
    %1325 = arith.mulf %1324, %17 : vector<1x256xf32>
    %c140_250 = arith.constant 140 : index
    %1326 = memref.load %arg5[%c140_250] : memref<144xf32, #tpu.memory_space<smem>>
    %1327 = vector.broadcast %1326 : f32 to vector<1x256xf32>
    %1328 = arith.mulf %1327, %1325 : vector<1x256xf32>
    %1329 = arith.addf %1311, %1328 : vector<1x256xf32>
    %c141_251 = arith.constant 141 : index
    %1330 = memref.load %arg5[%c141_251] : memref<144xf32, #tpu.memory_space<smem>>
    %1331 = vector.broadcast %1330 : f32 to vector<1x256xf32>
    %1332 = arith.mulf %1331, %1325 : vector<1x256xf32>
    %1333 = arith.addf %1315, %1332 : vector<1x256xf32>
    %c142_252 = arith.constant 142 : index
    %1334 = memref.load %arg5[%c142_252] : memref<144xf32, #tpu.memory_space<smem>>
    %1335 = vector.broadcast %1334 : f32 to vector<1x256xf32>
    %1336 = arith.mulf %1335, %1325 : vector<1x256xf32>
    %1337 = arith.addf %1319, %1336 : vector<1x256xf32>
    %c143_253 = arith.constant 143 : index
    %1338 = memref.load %arg5[%c143_253] : memref<144xf32, #tpu.memory_space<smem>>
    %1339 = vector.broadcast %1338 : f32 to vector<1x256xf32>
    %1340 = arith.mulf %1339, %1325 : vector<1x256xf32>
    %1341 = arith.addf %1323, %1340 : vector<1x256xf32>
    %c0_254 = arith.constant 0 : index
    %1342 = memref.load %arg6[%c0_254] : memref<4xf32, #tpu.memory_space<smem>>
    %1343 = vector.broadcast %1342 : f32 to vector<1x256xf32>
    %1344 = arith.addf %1329, %1343 : vector<1x256xf32>
    %cst_255 = arith.constant 0.000000e+00 : f32
    %1345 = vector.broadcast %cst_255 : f32 to vector<1x256xf32>
    %1346 = arith.maximumf %1344, %1345 : vector<1x256xf32>
    %c1_256 = arith.constant 1 : index
    %1347 = memref.load %arg6[%c1_256] : memref<4xf32, #tpu.memory_space<smem>>
    %1348 = vector.broadcast %1347 : f32 to vector<1x256xf32>
    %1349 = arith.addf %1333, %1348 : vector<1x256xf32>
    %cst_257 = arith.constant 0.000000e+00 : f32
    %1350 = vector.broadcast %cst_257 : f32 to vector<1x256xf32>
    %1351 = arith.maximumf %1349, %1350 : vector<1x256xf32>
    %c2_258 = arith.constant 2 : index
    %1352 = memref.load %arg6[%c2_258] : memref<4xf32, #tpu.memory_space<smem>>
    %1353 = vector.broadcast %1352 : f32 to vector<1x256xf32>
    %1354 = arith.addf %1337, %1353 : vector<1x256xf32>
    %cst_259 = arith.constant 0.000000e+00 : f32
    %1355 = vector.broadcast %cst_259 : f32 to vector<1x256xf32>
    %1356 = arith.maximumf %1354, %1355 : vector<1x256xf32>
    %c3_260 = arith.constant 3 : index
    %1357 = memref.load %arg6[%c3_260] : memref<4xf32, #tpu.memory_space<smem>>
    %1358 = vector.broadcast %1357 : f32 to vector<1x256xf32>
    %1359 = arith.addf %1341, %1358 : vector<1x256xf32>
    %cst_261 = arith.constant 0.000000e+00 : f32
    %1360 = vector.broadcast %cst_261 : f32 to vector<1x256xf32>
    %1361 = arith.maximumf %1359, %1360 : vector<1x256xf32>
    %c0_262 = arith.constant 0 : index
    %c0_263 = arith.constant 0 : index
    %c0_264 = arith.constant 0 : index
    %1362 = vector.load %arg7[%c0_262, %c0_263, %c0_264] : memref<1x4x256xf32, #tpu.memory_space<vmem>>, vector<1x1x256xf32>
    %1363 = vector.shape_cast %1362 : vector<1x1x256xf32> to vector<1x256xf32>
    %1364 = vector.shape_cast %1346 : vector<1x256xf32> to vector<1x1x256xf32>
    tpu.vector_store %arg7[%c0_262, %c0_263, %c0_264], %1364 {strides = array<i32>} : memref<1x4x256xf32, #tpu.memory_space<vmem>>, vector<1x1x256xf32>,
    %c0_265 = arith.constant 0 : index
    %c1_266 = arith.constant 1 : index
    %c0_267 = arith.constant 0 : index
    %1365 = vector.load %arg7[%c0_265, %c1_266, %c0_267] : memref<1x4x256xf32, #tpu.memory_space<vmem>>, vector<1x1x256xf32>
    %1366 = vector.shape_cast %1365 : vector<1x1x256xf32> to vector<1x256xf32>
    %1367 = vector.shape_cast %1351 : vector<1x256xf32> to vector<1x1x256xf32>
    tpu.vector_store %arg7[%c0_265, %c1_266, %c0_267], %1367 {strides = array<i32>} : memref<1x4x256xf32, #tpu.memory_space<vmem>>, vector<1x1x256xf32>,
    %c0_268 = arith.constant 0 : index
    %c2_269 = arith.constant 2 : index
    %c0_270 = arith.constant 0 : index
    %1368 = vector.load %arg7[%c0_268, %c2_269, %c0_270] : memref<1x4x256xf32, #tpu.memory_space<vmem>>, vector<1x1x256xf32>
    %1369 = vector.shape_cast %1368 : vector<1x1x256xf32> to vector<1x256xf32>
    %1370 = vector.shape_cast %1356 : vector<1x256xf32> to vector<1x1x256xf32>
    tpu.vector_store %arg7[%c0_268, %c2_269, %c0_270], %1370 {strides = array<i32>} : memref<1x4x256xf32, #tpu.memory_space<vmem>>, vector<1x1x256xf32>,
    %c0_271 = arith.constant 0 : index
    %c3_272 = arith.constant 3 : index
    %c0_273 = arith.constant 0 : index
    %1371 = vector.load %arg7[%c0_271, %c3_272, %c0_273] : memref<1x4x256xf32, #tpu.memory_space<vmem>>, vector<1x1x256xf32>
    %1372 = vector.shape_cast %1371 : vector<1x1x256xf32> to vector<1x256xf32>
    %1373 = vector.shape_cast %1361 : vector<1x256xf32> to vector<1x1x256xf32>
    tpu.vector_store %arg7[%c0_271, %c3_272, %c0_273], %1373 {strides = array<i32>} : memref<1x4x256xf32, #tpu.memory_space<vmem>>, vector<1x1x256xf32>,
    return
  }
  func.func @transform_0(%arg0: i32) -> (i32, i32, i32) {
    %c0_i32 = arith.constant 0 : i32
    %c0_i32_0 = arith.constant 0 : i32
    %c0_i32_1 = arith.constant 0 : i32
    return %arg0, %c0_i32, %c0_i32_0 : i32, i32, i32
  }
  func.func @transform_1(%arg0: i32) -> (i32, i32, i32) {
    %c0_i32 = arith.constant 0 : i32
    %c0_i32_0 = arith.constant 0 : i32
    %c0_i32_1 = arith.constant 0 : i32
    %c0_i32_2 = arith.constant 0 : i32
    return %c0_i32, %c0_i32_0, %c0_i32_1 : i32, i32, i32
  }
  func.func @transform_2(%arg0: i32) -> i32 {
    %c0_i32 = arith.constant 0 : i32
    %c0_i32_0 = arith.constant 0 : i32
    return %c0_i32 : i32
  }
  func.func @transform_3(%arg0: i32) -> i32 {
    %c0_i32 = arith.constant 0 : i32
    %c0_i32_0 = arith.constant 0 : i32
    return %c0_i32 : i32
  }
  func.func @transform_4(%arg0: i32) -> i32 {
    %c0_i32 = arith.constant 0 : i32
    %c0_i32_0 = arith.constant 0 : i32
    return %c0_i32 : i32
  }
  func.func @transform_5(%arg0: i32) -> i32 {
    %c0_i32 = arith.constant 0 : i32
    %c0_i32_0 = arith.constant 0 : i32
    return %c0_i32 : i32
  }
  func.func @transform_6(%arg0: i32) -> (i32, i32, i32) {
    %c0_i32 = arith.constant 0 : i32
    %c0_i32_0 = arith.constant 0 : i32
    %c0_i32_1 = arith.constant 0 : i32
    return %arg0, %c0_i32, %c0_i32_0 : i32, i32, i32
  }
}

</mosaic_0001>

<llo_original>
// kernel: tpu_custom_call.1
$region0: #{tpu_custom_call.1}
  #allocation0 [shape = 'u32[]', space=smem, size = 0x4, offset = 0x4, fixed_abs, tag = 'smem constant byte address 0x4 - core index']
  #allocation1 [shape = 'u32[144,128]{1,0:T(1,128)}', space=vmem, size = 0x12000, scoped, tag = 'internal scratch']
  %s0 = inlined_call_operand.hbm [shape: f32[2,4,256], index: 0, kind: input, shape index: {}]
  %s1 = inlined_call_operand.hbm [shape: f32[9,1,256], index: 1, kind: input, shape index: {}]
  %s2 = inlined_call_operand.vmem [shape: f32[144], index: 2, kind: input, shape index: {}]
  %s3 = inlined_call_operand.vmem [shape: f32[4], index: 3, kind: input, shape index: {}]
  %s4 = inlined_call_operand.vmem [shape: f32[144], index: 4, kind: input, shape index: {}]
  %s5 = inlined_call_operand.vmem [shape: f32[4], index: 5, kind: input, shape index: {}]
  %s6 = inlined_call_operand.hbm [shape: f32[2,4,256], index: 6, kind: output, shape index: {}]
  %s7 = sld [smem:[#allocation0]]
  $region81: #{tpu_custom_call.1} parent=0
    _
  %s9 = ssub.s32 1, %s7
  %s10 = scalar_select 0, %s9, %s7
  $region1: #{tpu_custom_call.1} parent=0
    #allocation2 [shape = 'u8[8192]{0}', space=vmem, size = 0x2000, scoped, tag = 'input window, operand 0']
    #allocation3 [shape = 's32[2]{0}', space=sflag, size = 0x8, scoped, tag = 'scoped memory for tpu_custom_call.1']
    #allocation4 [shape = 's32[2]{0}', space=sflag, size = 0x8, scoped, tag = 'scoped memory for tpu_custom_call.1']
    #allocation5 [shape = 's32[2]{0}', space=sflag, size = 0x8, scoped, tag = 'scoped memory for tpu_custom_call.1']
    #allocation6 [shape = 'u8[9216]{0}', space=vmem, size = 0x2400, scoped, tag = 'input window, operand 1, single buffered']
    #allocation7 [shape = 's32[1]{0}', space=sflag, size = 0x4, scoped, tag = 'scoped memory for tpu_custom_call.1']
    #allocation8 [shape = 'u8[1024]{0}', space=smem, size = 0x400, scoped, tag = 'input window, operand 2, single buffered']
    #allocation9 [shape = 'u8[512]{0}', space=smem, size = 0x200, scoped, tag = 'input window, operand 3, single buffered']
    #allocation10 [shape = 's32[1]{0}', space=sflag, size = 0x4, scoped, tag = 'scoped memory for tpu_custom_call.1']
    #allocation11 [shape = 'u8[1024]{0}', space=smem, size = 0x400, scoped, tag = 'input window, operand 4, single buffered']
    #allocation12 [shape = 'u8[512]{0}', space=smem, size = 0x200, scoped, tag = 'input window, operand 5, single buffered']
    #allocation13 [shape = 's32[1]{0}', space=sflag, size = 0x4, scoped, tag = 'scoped memory for tpu_custom_call.1']
    #allocation14 [shape = 'u8[8192]{0}', space=vmem, size = 0x2000, scoped, tag = 'output window, operand 0']
    %11 = vsyncpa [#allocation3], 0
    %s12 = scalar_lea.sflag [#allocation3], 1
    %13 = vsyncpa %s12, 0
    %14 = vsyncpa [#allocation7], 0
    %15 = vsyncpa [#allocation5], 0
    %16 = vsyncpa [#allocation10], 0
    %17 = vsyncpa [#allocation13], 0
    %18 = vsyncpa [#allocation4], 0
    %s19 = scalar_lea.sflag [#allocation4], 1
    %20 = vsyncpa %s19, 0
    loop: start=0, step=1, limit=4
    $region2: #{tpu_custom_call.1} parent=1 // loop_pre_header
      _
    $region3: #{tpu_custom_call.1} parent=1 // loop_header
      %s22 = sphi 0, %s26
      %p23 = scmp.ge.s32.totalorder %s22, 4
      %s32 = sphi 0, %s34
      %s35 = sphi 0, %s32
      %s36 = sphi 0, %s35
      %s52 = sphi 0, %s36
      %s56 = sphi 0, %s56
      %s58 = sphi 0, %s56
      %s59 = sphi 0, %s58
      %s73 = sphi 0, %s59
      %s77 = sphi 0, %s77
      %s79 = sphi 0, %s77
      %s80 = sphi 0, %s79
      %s94 = sphi 0, %s80
      %s98 = sphi 0, %s98
      %s100 = sphi 0, %s98
      %s101 = sphi 0, %s100
      %s115 = sphi 0, %s101
      %s119 = sphi 0, %s119
      %s121 = sphi 0, %s119
      %s122 = sphi 0, %s121
      %s136 = sphi 0, %s122
      %s140 = sphi 0, %s140
      %s142 = sphi 0, %s140
      %s143 = sphi 0, %s142
      %s157 = sphi 0, %s143
      %s163 = sphi 0, %s165
      %s166 = sphi 0, %s163
      %s167 = sphi 0, %s166
      %s183 = sphi 0, %s167
    $region4: #{tpu_custom_call.1} parent=1 // loop_header_branch
      %25 = sbr.rel (%p23) target = $region8
    $region5: #{tpu_custom_call.1} parent=1 // loop_body
      %s27 = ssub.s32 %s22, 1
      %s28 = ssub.s32 %s22, 2
      %s29 = sadd.s32 %s22, 1
      %s30 = ssub.s32 %s22, %s29
      %p31 = scmp.eq.s32.totalorder %s30, 0
      %s33 = sadd.s32 %s32, 1
      %s34 = scalar_select %p31, %s32, %s33
      %p37 = pneg %p31
      %p38 = scmp.eq.s32.totalorder %s22, 1
      %p39 = por %p37, %p38
      %p40 = scmp.ne.s32.totalorder %s32, %s35
      %p41 = scmp.eq.s32.totalorder %s22, 0
      %p42 = por %p40, %p41
      %p43 = scmp.ne.s32.totalorder %s32, %s35
      %p44 = scmp.eq.s32.totalorder %s27, 1
      %p45 = por %p43, %p44
      %p46 = scmp.ne.s32.totalorder %s35, %s36
      %p47 = scmp.eq.s32.totalorder %s27, 0
      %p48 = por %p46, %p47
      %p49 = scmp.ne.s32.totalorder %s35, %s36
      %p50 = scmp.eq.s32.totalorder %s28, 1
      %p51 = por %p49, %p50
      %p53 = scmp.ne.s32.totalorder %s36, %s52
      %p54 = scmp.eq.s32.totalorder %s28, 0
      %p55 = por %p53, %p54
      %s57 = sadd.s32 %s56, 1
      %p60 = scmp.eq.s32.totalorder %s22, 1
      %p61 = scmp.ne.s32.totalorder %s56, %s58
      %p62 = scmp.eq.s32.totalorder %s22, 0
      %p63 = por %p61, %p62
      %p64 = scmp.ne.s32.totalorder %s56, %s58
      %p65 = scmp.eq.s32.totalorder %s27, 1
      %p66 = por %p64, %p65
      %p67 = scmp.ne.s32.totalorder %s58, %s59
      %p68 = scmp.eq.s32.totalorder %s27, 0
      %p69 = por %p67, %p68
      %p70 = scmp.ne.s32.totalorder %s58, %s59
      %p71 = scmp.eq.s32.totalorder %s28, 1
      %p72 = por %p70, %p71
      %p74 = scmp.ne.s32.totalorder %s59, %s73
      %p75 = scmp.eq.s32.totalorder %s28, 0
      %p76 = por %p74, %p75
      %s78 = sadd.s32 %s77, 1
      %p81 = scmp.eq.s32.totalorder %s22, 1
      %p82 = scmp.ne.s32.totalorder %s77, %s79
      %p83 = scmp.eq.s32.totalorder %s22, 0
      %p84 = por %p82, %p83
      %p85 = scmp.ne.s32.totalorder %s77, %s79
      %p86 = scmp.eq.s32.totalorder %s27, 1
      %p87 = por %p85, %p86
      %p88 = scmp.ne.s32.totalorder %s79, %s80
      %p89 = scmp.eq.s32.totalorder %s27, 0
      %p90 = por %p88, %p89
      %p91 = scmp.ne.s32.totalorder %s79, %s80
      %p92 = scmp.eq.s32.totalorder %s28, 1
      %p93 = por %p91, %p92
      %p95 = scmp.ne.s32.totalorder %s80, %s94
      %p96 = scmp.eq.s32.totalorder %s28, 0
      %p97 = por %p95, %p96
      %s99 = sadd.s32 %s98, 1
      %p102 = scmp.eq.s32.totalorder %s22, 1
      %p103 = scmp.ne.s32.totalorder %s98, %s100
      %p104 = scmp.eq.s32.totalorder %s22, 0
      %p105 = por %p103, %p104
      %p106 = scmp.ne.s32.totalorder %s98, %s100
      %p107 = scmp.eq.s32.totalorder %s27, 1
      %p108 = por %p106, %p107
      %p109 = scmp.ne.s32.totalorder %s100, %s101
      %p110 = scmp.eq.s32.totalorder %s27, 0
      %p111 = por %p109, %p110
      %p112 = scmp.ne.s32.totalorder %s100, %s101
      %p113 = scmp.eq.s32.totalorder %s28, 1
      %p114 = por %p112, %p113
      %p116 = scmp.ne.s32.totalorder %s101, %s115
      %p117 = scmp.eq.s32.totalorder %s28, 0
      %p118 = por %p116, %p117
      %s120 = sadd.s32 %s119, 1
      %p123 = scmp.eq.s32.totalorder %s22, 1
      %p124 = scmp.ne.s32.totalorder %s119, %s121
      %p125 = scmp.eq.s32.totalorder %s22, 0
      %p126 = por %p124, %p125
      %p127 = scmp.ne.s32.totalorder %s119, %s121
      %p128 = scmp.eq.s32.totalorder %s27, 1
      %p129 = por %p127, %p128
      %p130 = scmp.ne.s32.totalorder %s121, %s122
      %p131 = scmp.eq.s32.totalorder %s27, 0
      %p132 = por %p130, %p131
      %p133 = scmp.ne.s32.totalorder %s121, %s122
      %p134 = scmp.eq.s32.totalorder %s28, 1
      %p135 = por %p133, %p134
      %p137 = scmp.ne.s32.totalorder %s122, %s136
      %p138 = scmp.eq.s32.totalorder %s28, 0
      %p139 = por %p137, %p138
      %s141 = sadd.s32 %s140, 1
      %p144 = scmp.eq.s32.totalorder %s22, 1
      %p145 = scmp.ne.s32.totalorder %s140, %s142
      %p146 = scmp.eq.s32.totalorder %s22, 0
      %p147 = por %p145, %p146
      %p148 = scmp.ne.s32.totalorder %s140, %s142
      %p149 = scmp.eq.s32.totalorder %s27, 1
      %p150 = por %p148, %p149
      %p151 = scmp.ne.s32.totalorder %s142, %s143
      %p152 = scmp.eq.s32.totalorder %s27, 0
      %p153 = por %p151, %p152
      %p154 = scmp.ne.s32.totalorder %s142, %s143
      %p155 = scmp.eq.s32.totalorder %s28, 1
      %p156 = por %p154, %p155
      %p158 = scmp.ne.s32.totalorder %s143, %s157
      %p159 = scmp.eq.s32.totalorder %s28, 0
      %p160 = por %p158, %p159
      %s161 = ssub.s32 %s22, %s29
      %p162 = scmp.eq.s32.totalorder %s161, 0
      %s164 = sadd.s32 %s163, 1
      %s165 = scalar_select %p162, %s163, %s164
      %p168 = pneg %p162
      %p169 = scmp.eq.s32.totalorder %s22, 1
      %p170 = por %p168, %p169
      %p171 = scmp.ne.s32.totalorder %s163, %s166
      %p172 = scmp.eq.s32.totalorder %s22, 0
      %p173 = por %p171, %p172
      %p174 = scmp.ne.s32.totalorder %s163, %s166
      %p175 = scmp.eq.s32.totalorder %s27, 1
      %p176 = por %p174, %p175
      %p177 = scmp.ne.s32.totalorder %s166, %s167
      %p178 = scmp.eq.s32.totalorder %s27, 0
      %p179 = por %p177, %p178
      %p180 = scmp.ne.s32.totalorder %s166, %s167
      %p181 = scmp.eq.s32.totalorder %s28, 1
      %p182 = por %p180, %p181
      %p184 = scmp.ne.s32.totalorder %s167, %s183
      %p185 = scmp.eq.s32.totalorder %s28, 0
      %p186 = por %p184, %p185
      %p187 = scmp.le.s32.totalorder 1, %s22
      %p188 = scmp.lt.s32.totalorder %s22, 3
      %p189 = pnand %p187, %p188
      %p190 = pneg %p189
      // Predicated region
      $region9: #{tpu_custom_call.1} parent=5 // pred_check
        _
      $region10: #{tpu_custom_call.1} parent=5 // pred_check_branch
        %192 = sbr.rel (%p189) target = $region12
      $region11: #{tpu_custom_call.1} parent=5 // pred_region
        %s193 = ssub.s32 %s22, 1
        // Predicated region
        $region13: #{tpu_custom_call.1} parent=11 // pred_check
          %p194 = pneg %p69
        $region14: #{tpu_custom_call.1} parent=11 // pred_check_branch
          %196 = sbr.rel (%p194) target = $region16
        $region15: #{tpu_custom_call.1} parent=11 // pred_region
          %s198 = ssub.s32 288, 288
          %199 = vsyncadd [#allocation7], %s198
          %s200 = sshll.u32 [#allocation6], 4
          %s201 = int_to_ptr.vmem [resolvable:$true] %s200
          %206 = dma.hbm_to_vmem [thread:$0]  %s1, 288, %s201, [#allocation7], 32, 32, 2
        $region16: #{tpu_custom_call.1} parent=11 // pred_fallthru
          _
        // Predicated region
        $region17: #{tpu_custom_call.1} parent=11 // pred_check
          %p207 = pneg %p90
        $region18: #{tpu_custom_call.1} parent=11 // pred_check_branch
          %209 = sbr.rel (%p207) target = $region20
        $region19: #{tpu_custom_call.1} parent=11 // pred_region
          %s211 = ssub.s32 32, 32
          %212 = vsyncadd [#allocation5], %s211
          %s214 = sshll.u32 %s2, 4
          %s215 = int_to_ptr.vmem [resolvable:$true] %s214
          %217 = dma.vmem_to_smem %s215, 32, [#allocation8], [#allocation5]
        $region20: #{tpu_custom_call.1} parent=11 // pred_fallthru
          _
        // Predicated region
        $region21: #{tpu_custom_call.1} parent=11 // pred_check
          %p218 = pneg %p111
        $region22: #{tpu_custom_call.1} parent=11 // pred_check_branch
          %220 = sbr.rel (%p218) target = $region24
        $region23: #{tpu_custom_call.1} parent=11 // pred_region
          %s222 = ssub.s32 16, 16
          %223 = vsyncadd [#allocation10], %s222
          %s225 = sshll.u32 %s3, 4
          %s226 = int_to_ptr.vmem [resolvable:$true] %s225
          %228 = dma.vmem_to_smem %s226, 16, [#allocation9], [#allocation10]
        $region24: #{tpu_custom_call.1} parent=11 // pred_fallthru
          _
        // Predicated region
        $region25: #{tpu_custom_call.1} parent=11 // pred_check
          %p229 = pneg %p132
        $region26: #{tpu_custom_call.1} parent=11 // pred_check_branch
          %231 = sbr.rel (%p229) target = $region28
        $region27: #{tpu_custom_call.1} parent=11 // pred_region
          %s233 = ssub.s32 32, 32
          %234 = vsyncadd [#allocation10], %s233
          %s236 = sshll.u32 %s4, 4
          %s237 = int_to_ptr.vmem [resolvable:$true] %s236
          %239 = dma.vmem_to_smem %s237, 32, [#allocation11], [#allocation10]
        $region28: #{tpu_custom_call.1} parent=11 // pred_fallthru
          _
        // Predicated region
        $region29: #{tpu_custom_call.1} parent=11 // pred_check
          %p240 = pneg %p153
        $region30: #{tpu_custom_call.1} parent=11 // pred_check_branch
          %242 = sbr.rel (%p240) target = $region32
        $region31: #{tpu_custom_call.1} parent=11 // pred_region
          %s244 = ssub.s32 16, 16
          %245 = vsyncadd [#allocation13], %s244
          %s247 = sshll.u32 %s5, 4
          %s248 = int_to_ptr.vmem [resolvable:$true] %s247
          %250 = dma.vmem_to_smem %s248, 16, [#allocation12], [#allocation13]
        $region32: #{tpu_custom_call.1} parent=11 // pred_fallthru
          _
      $region12: #{tpu_custom_call.1} parent=5 // pred_fallthru
        _
      %p251 = scmp.lt.s32.totalorder %s22, 2
      // Predicated region
      $region33: #{tpu_custom_call.1} parent=5 // pred_check
        %p252 = pneg %p251
      $region34: #{tpu_custom_call.1} parent=5 // pred_check_branch
        %254 = sbr.rel (%p252) target = $region36
      $region35: #{tpu_custom_call.1} parent=5 // pred_region
        // Predicated region
        $region37: #{tpu_custom_call.1} parent=35 // pred_check
          %p255 = pneg %p42
        $region38: #{tpu_custom_call.1} parent=35 // pred_check_branch
          %257 = sbr.rel (%p255) target = $region40
        $region39: #{tpu_custom_call.1} parent=35 // pred_region
          %s258 = sand.u32 %s32, 1
          %s259 = scalar_lea.sflag [#allocation3], %s258
          %s260 = sand.u32 %s32, 1
          %s261 = smul.addr %s260, 8
          %s262 = scalar_lea.vmem [#allocation2], %s261
          %s264 = ssub.s32 128, 128
          %265 = vsyncadd %s259, %s264
          %s266 = smul.addr %s22, 2
          %s267 = smul.addr %s266, 64
          %s268 = scalar_lea.hbm %s0, %s267
          %s270 = sshll.u32 %s262, 4
          %s271 = int_to_ptr.vmem [resolvable:$true] %s270
          %273 = dma.hbm_to_vmem [thread:$0]  %s268, 128, %s271, %s259
        $region40: #{tpu_custom_call.1} parent=35 // pred_fallthru
          _
      $region36: #{tpu_custom_call.1} parent=5 // pred_fallthru
        _
      %p274 = scmp.le.s32.totalorder 1, %s22
      %p275 = scmp.lt.s32.totalorder %s22, 3
      %p276 = pnand %p274, %p275
      %p277 = pneg %p276
      // Predicated region
      $region41: #{tpu_custom_call.1} parent=5 // pred_check
        _
      $region42: #{tpu_custom_call.1} parent=5 // pred_check_branch
        %279 = sbr.rel (%p276) target = $region44
      $region43: #{tpu_custom_call.1} parent=5 // pred_region
        %s280 = ssub.s32 %s22, 1
        %s281 = sand.u32 %s35, 1
        %s282 = scalar_lea.sflag [#allocation3], %s281
        %s283 = sand.u32 %s35, 1
        %s284 = smul.addr %s283, 8
        %s285 = scalar_lea.vmem [#allocation2], %s284
        // Predicated region
        $region45: #{tpu_custom_call.1} parent=43 // pred_check
          %p286 = pneg %p48
        $region46: #{tpu_custom_call.1} parent=43 // pred_check_branch
          %288 = sbr.rel (%p286) target = $region48
        $region47: #{tpu_custom_call.1} parent=43 // pred_region
          %289 = dma.done %s282, 128
        $region48: #{tpu_custom_call.1} parent=43 // pred_fallthru
          _
        // Predicated region
        $region49: #{tpu_custom_call.1} parent=43 // pred_check
          %p290 = pneg %p69
        $region50: #{tpu_custom_call.1} parent=43 // pred_check_branch
          %292 = sbr.rel (%p290) target = $region52
        $region51: #{tpu_custom_call.1} parent=43 // pred_region
          %293 = dma.done [#allocation7], 288
        $region52: #{tpu_custom_call.1} parent=43 // pred_fallthru
          _
        // Predicated region
        $region53: #{tpu_custom_call.1} parent=43 // pred_check
          %p294 = pneg %p90
        $region54: #{tpu_custom_call.1} parent=43 // pred_check_branch
          %296 = sbr.rel (%p294) target = $region56
        $region55: #{tpu_custom_call.1} parent=43 // pred_region
          %297 = dma.done [#allocation5], 32
        $region56: #{tpu_custom_call.1} parent=43 // pred_fallthru
          _
        // Predicated region
        $region57: #{tpu_custom_call.1} parent=43 // pred_check
          %p298 = pneg %p111
        $region58: #{tpu_custom_call.1} parent=43 // pred_check_branch
          %300 = sbr.rel (%p298) target = $region60
        $region59: #{tpu_custom_call.1} parent=43 // pred_region
          %301 = dma.done [#allocation10], 16
        $region60: #{tpu_custom_call.1} parent=43 // pred_fallthru
          _
        // Predicated region
        $region61: #{tpu_custom_call.1} parent=43 // pred_check
          %p302 = pneg %p132
        $region62: #{tpu_custom_call.1} parent=43 // pred_check_branch
          %304 = sbr.rel (%p302) target = $region64
        $region63: #{tpu_custom_call.1} parent=43 // pred_region
          %305 = dma.done [#allocation10], 32
        $region64: #{tpu_custom_call.1} parent=43 // pred_fallthru
          _
        // Predicated region
        $region65: #{tpu_custom_call.1} parent=43 // pred_check
          %p306 = pneg %p153
        $region66: #{tpu_custom_call.1} parent=43 // pred_check_branch
          %308 = sbr.rel (%p306) target = $region68
        $region67: #{tpu_custom_call.1} parent=43 // pred_region
          %309 = dma.done [#allocation13], 16
        $region68: #{tpu_custom_call.1} parent=43 // pred_fallthru
          _
        %310 = sfence
        %s311 = sand.u32 %s35, 1
        %s312 = scalar_lea.sflag [#allocation3], %s311
        %s313 = sand.u32 %s35, 1
        %s314 = smul.addr %s313, 8
        %s315 = scalar_lea.vmem [#allocation2], %s314
        %p316 = pneg %p48
        %p317 = pneg %p45
        %p318 = pneg %p69
        %p319 = pneg %p66
        %p320 = pneg %p90
        %p321 = pneg %p87
        %p322 = pneg %p111
        %p323 = pneg %p108
        %p324 = pneg %p132
        %p325 = pneg %p129
        %p326 = pneg %p153
        %p327 = pneg %p150
        %p328 = pneg %p179
        %p329 = pneg %p176
        %s330 = sand.u32 %s166, 1
        %s331 = scalar_lea.sflag [#allocation4], %s330
        %s332 = sand.u32 %s166, 1
        %s333 = smul.addr %s332, 8
        %s334 = scalar_lea.vmem [#allocation14], %s333
        %v335 = vld [vmem:[#allocation6] sm:$0x3]
        %s336 = scalar_lea.vmem [#allocation6], 2
        %v337 = vld [vmem:[%s336] sm:$0x3]
        %s338 = scalar_lea.vmem [#allocation6], 4
        %v339 = vld [vmem:[%s338] sm:$0x3]
        %s340 = scalar_lea.vmem [#allocation6], 6
        %v341 = vld [vmem:[%s340] sm:$0x3]
        %s342 = scalar_lea.vmem [#allocation6], 8
        %v343 = vld [vmem:[%s342] sm:$0x3]
        %s344 = scalar_lea.vmem [#allocation6], 10
        %v345 = vld [vmem:[%s344] sm:$0x3]
        %s346 = scalar_lea.vmem [#allocation6], 12
        %v347 = vld [vmem:[%s346] sm:$0x3]
        %s348 = scalar_lea.vmem [#allocation6], 14
        %v349 = vld [vmem:[%s348] sm:$0x3]
        %s350 = scalar_lea.vmem [#allocation6], 16
        %v351 = vld [vmem:[%s350] sm:$0x3]
        %v352 = vld [vmem:[%s285] ss:$4 sm:$0x3]
        %s353 = scalar_lea.vmem %s285, 1 [#allocation2]
        %v354 = vld [vmem:[%s353] ss:$4 sm:$0x3]
        %s355 = scalar_lea.vmem %s285, 2 [#allocation2]
        %v356 = vld [vmem:[%s355] ss:$4 sm:$0x3]
        %s357 = scalar_lea.vmem %s285, 3 [#allocation2]
        %v358 = vld [vmem:[%s357] ss:$4 sm:$0x3]
        %v360 = vlaneseq
        %v361 = vshrl.u32 %v360, 7
        %v362 = vsub.s32 0, %v361
        %v363 = vrot.slane %v352, %v362
        %v364 = vlaneseq
        %v365 = vshrl.u32 %v364, 7
        %v366 = vsub.s32 1, %v365
        %v367 = vrot.slane %v352, %v366
        %370 = vrot.lane.b32.xlu0 %v363, 34
        %v371 = vpop.permute.xlu0 %370
        %372 = vrot.lane.b32.xlu0 %v367, 34
        %v373 = vpop.permute.xlu0 %372
        %v374 = vlaneseq
        %v375 = vand.u32 %v374, 127
        %vm376 = vcmp.lt.s32.totalorder %v375, 34
        %v377 = vsel %vm376, %v371, %v373
        %v378 = vsel %vm376, %v373, %v371
        %v380 = vlaneseq
        %v381 = vshrl.u32 %v380, 7
        %v382 = vsub.s32 0, %v381
        %v383 = vrot.slane %v335, %v382
        %v384 = vlaneseq
        %v385 = vshrl.u32 %v384, 7
        %v386 = vsub.s32 1, %v385
        %v387 = vrot.slane %v335, %v386
        %v390 = vmul.f32 %v378, %v383
        %v391 = vmul.f32 %v377, %v387
        %s392 = sld [smem:[#allocation8]]
        %v393 = vstv %s392
        %v394 = vmul.f32 %v393, %v390
        %v395 = vmul.f32 %v393, %v391
        %v396 = vadd.f32 %v394, 0.0
        %v397 = vadd.f32 %v395, 0.0
        %s398 = sld [smem:[#allocation8 + $0x1]]
        %v399 = vstv %s398
        %v400 = vmul.f32 %v399, %v390
        %v401 = vmul.f32 %v399, %v391
        %v402 = vadd.f32 %v400, 0.0
        %v403 = vadd.f32 %v401, 0.0
        %s404 = sld [smem:[#allocation8 + $0x2]]
        %v405 = vstv %s404
        %v406 = vmul.f32 %v405, %v390
        %v407 = vmul.f32 %v405, %v391
        %v408 = vadd.f32 %v406, 0.0
        %v409 = vadd.f32 %v407, 0.0
        %s410 = sld [smem:[#allocation8 + $0x3]]
        %v411 = vstv %s410
        %v412 = vmul.f32 %v411, %v390
        %v413 = vmul.f32 %v411, %v391
        %v414 = vadd.f32 %v412, 0.0
        %v415 = vadd.f32 %v413, 0.0
        %v417 = vlaneseq
        %v418 = vshrl.u32 %v417, 7
        %v419 = vsub.s32 0, %v418
        %v420 = vrot.slane %v354, %v419
        %v421 = vlaneseq
        %v422 = vshrl.u32 %v421, 7
        %v423 = vsub.s32 1, %v422
        %v424 = vrot.slane %v354, %v423
        %427 = vrot.lane.b32.xlu0 %v420, 34
        %v428 = vpop.permute.xlu0 %427
        %429 = vrot.lane.b32.xlu0 %v424, 34
        %v430 = vpop.permute.xlu0 %429
        %v431 = vsel %vm376, %v428, %v430
        %v432 = vsel %vm376, %v430, %v428
        %v433 = vmul.f32 %v432, %v383
        %v434 = vmul.f32 %v431, %v387
        %s435 = sld [smem:[#allocation8 + $0x4]]
        %v436 = vstv %s435
        %v437 = vmul.f32 %v436, %v433
        %v438 = vmul.f32 %v436, %v434
        %v439 = vadd.f32 %v396, %v437
        %v440 = vadd.f32 %v397, %v438
        %s441 = sld [smem:[#allocation8 + $0x5]]
        %v442 = vstv %s441
        %v443 = vmul.f32 %v442, %v433
        %v444 = vmul.f32 %v442, %v434
        %v445 = vadd.f32 %v402, %v443
        %v446 = vadd.f32 %v403, %v444
        %s447 = sld [smem:[#allocation8 + $0x6]]
        %v448 = vstv %s447
        %v449 = vmul.f32 %v448, %v433
        %v450 = vmul.f32 %v448, %v434
        %v451 = vadd.f32 %v408, %v449
        %v452 = vadd.f32 %v409, %v450
        %s453 = sld [smem:[#allocation8 + $0x7]]
        %v454 = vstv %s453
        %v455 = vmul.f32 %v454, %v433
        %v456 = vmul.f32 %v454, %v434
        %v457 = vadd.f32 %v414, %v455
        %v458 = vadd.f32 %v415, %v456
        %v460 = vlaneseq
        %v461 = vshrl.u32 %v460, 7
        %v462 = vsub.s32 0, %v461
        %v463 = vrot.slane %v356, %v462
        %v464 = vlaneseq
        %v465 = vshrl.u32 %v464, 7
        %v466 = vsub.s32 1, %v465
        %v467 = vrot.slane %v356, %v466
        %470 = vrot.lane.b32.xlu0 %v463, 34
        %v471 = vpop.permute.xlu0 %470
        %472 = vrot.lane.b32.xlu0 %v467, 34
        %v473 = vpop.permute.xlu0 %472
        %v474 = vsel %vm376, %v471, %v473
        %v475 = vsel %vm376, %v473, %v471
        %v476 = vmul.f32 %v475, %v383
        %v477 = vmul.f32 %v474, %v387
        %s478 = sld [smem:[#allocation8 + $0x8]]
        %v479 = vstv %s478
        %v480 = vmul.f32 %v479, %v476
        %v481 = vmul.f32 %v479, %v477
        %v482 = vadd.f32 %v439, %v480
        %v483 = vadd.f32 %v440, %v481
        %s484 = sld [smem:[#allocation8 + $0x9]]
        %v485 = vstv %s484
        %v486 = vmul.f32 %v485, %v476
        %v487 = vmul.f32 %v485, %v477
        %v488 = vadd.f32 %v445, %v486
        %v489 = vadd.f32 %v446, %v487
        %s490 = sld [smem:[#allocation8 + $0xa]]
        %v491 = vstv %s490
        %v492 = vmul.f32 %v491, %v476
        %v493 = vmul.f32 %v491, %v477
        %v494 = vadd.f32 %v451, %v492
        %v495 = vadd.f32 %v452, %v493
        %s496 = sld [smem:[#allocation8 + $0xb]]
        %v497 = vstv %s496
        %v498 = vmul.f32 %v497, %v476
        %v499 = vmul.f32 %v497, %v477
        %v500 = vadd.f32 %v457, %v498
        %v501 = vadd.f32 %v458, %v499
        %v503 = vlaneseq
        %v504 = vshrl.u32 %v503, 7
        %v505 = vsub.s32 0, %v504
        %v506 = vrot.slane %v358, %v505
        %v507 = vlaneseq
        %v508 = vshrl.u32 %v507, 7
        %v509 = vsub.s32 1, %v508
        %v510 = vrot.slane %v358, %v509
        %513 = vrot.lane.b32.xlu0 %v506, 34
        %v514 = vpop.permute.xlu0 %513
        %515 = vrot.lane.b32.xlu0 %v510, 34
        %v516 = vpop.permute.xlu0 %515
        %v517 = vsel %vm376, %v514, %v516
        %v518 = vsel %vm376, %v516, %v514
        %v519 = vmul.f32 %v518, %v383
        %v520 = vmul.f32 %v517, %v387
        %s521 = sld [smem:[#allocation8 + $0xc]]
        %v522 = vstv %s521
        %v523 = vmul.f32 %v522, %v519
        %v524 = vmul.f32 %v522, %v520
        %v525 = vadd.f32 %v482, %v523
        %v526 = vadd.f32 %v483, %v524
        %s527 = sld [smem:[#allocation8 + $0xd]]
        %v528 = vstv %s527
        %v529 = vmul.f32 %v528, %v519
        %v530 = vmul.f32 %v528, %v520
        %v531 = vadd.f32 %v488, %v529
        %v532 = vadd.f32 %v489, %v530
        %s533 = sld [smem:[#allocation8 + $0xe]]
        %v534 = vstv %s533
        %v535 = vmul.f32 %v534, %v519
        %v536 = vmul.f32 %v534, %v520
        %v537 = vadd.f32 %v494, %v535
        %v538 = vadd.f32 %v495, %v536
        %s539 = sld [smem:[#allocation8 + $0xf]]
        %v540 = vstv %s539
        %v541 = vmul.f32 %v540, %v519
        %v542 = vmul.f32 %v540, %v520
        %v543 = vadd.f32 %v500, %v541
        %v544 = vadd.f32 %v501, %v542
        %545 = vrot.lane.b32.xlu0 %v363, 32
        %v546 = vpop.permute.xlu0 %545
        %547 = vrot.lane.b32.xlu0 %v367, 32
        %v548 = vpop.permute.xlu0 %547
        %vm549 = vcmp.lt.s32.totalorder %v375, 32
        %v550 = vsel %vm549, %v546, %v548
        %v551 = vsel %vm549, %v548, %v546
        %v553 = vlaneseq
        %v554 = vshrl.u32 %v553, 7
        %v555 = vsub.s32 0, %v554
        %v556 = vrot.slane %v337, %v555
        %v557 = vlaneseq
        %v558 = vshrl.u32 %v557, 7
        %v559 = vsub.s32 1, %v558
        %v560 = vrot.slane %v337, %v559
        %v563 = vmul.f32 %v551, %v556
        %v564 = vmul.f32 %v550, %v560
        %s565 = sld [smem:[#allocation8 + $0x10]]
        %v566 = vstv %s565
        %v567 = vmul.f32 %v566, %v563
        %v568 = vmul.f32 %v566, %v564
        %v569 = vadd.f32 %v525, %v567
        %v570 = vadd.f32 %v526, %v568
        %s571 = sld [smem:[#allocation8 + $0x11]]
        %v572 = vstv %s571
        %v573 = vmul.f32 %v572, %v563
        %v574 = vmul.f32 %v572, %v564
        %v575 = vadd.f32 %v531, %v573
        %v576 = vadd.f32 %v532, %v574
        %s577 = sld [smem:[#allocation8 + $0x12]]
        %v578 = vstv %s577
        %v579 = vmul.f32 %v578, %v563
        %v580 = vmul.f32 %v578, %v564
        %v581 = vadd.f32 %v537, %v579
        %v582 = vadd.f32 %v538, %v580
        %s583 = sld [smem:[#allocation8 + $0x13]]
        %v584 = vstv %s583
        %v585 = vmul.f32 %v584, %v563
        %v586 = vmul.f32 %v584, %v564
        %v587 = vadd.f32 %v543, %v585
        %v588 = vadd.f32 %v544, %v586
        %589 = vrot.lane.b32.xlu0 %v420, 32
        %v590 = vpop.permute.xlu0 %589
        %591 = vrot.lane.b32.xlu0 %v424, 32
        %v592 = vpop.permute.xlu0 %591
        %v593 = vsel %vm549, %v590, %v592
        %v594 = vsel %vm549, %v592, %v590
        %v595 = vmul.f32 %v594, %v556
        %v596 = vmul.f32 %v593, %v560
        %s597 = sld [smem:[#allocation8 + $0x14]]
        %v598 = vstv %s597
        %v599 = vmul.f32 %v598, %v595
        %v600 = vmul.f32 %v598, %v596
        %v601 = vadd.f32 %v569, %v599
        %v602 = vadd.f32 %v570, %v600
        %s603 = sld [smem:[#allocation8 + $0x15]]
        %v604 = vstv %s603
        %v605 = vmul.f32 %v604, %v595
        %v606 = vmul.f32 %v604, %v596
        %v607 = vadd.f32 %v575, %v605
        %v608 = vadd.f32 %v576, %v606
        %s609 = sld [smem:[#allocation8 + $0x16]]
        %v610 = vstv %s609
        %v611 = vmul.f32 %v610, %v595
        %v612 = vmul.f32 %v610, %v596
        %v613 = vadd.f32 %v581, %v611
        %v614 = vadd.f32 %v582, %v612
        %s615 = sld [smem:[#allocation8 + $0x17]]
        %v616 = vstv %s615
        %v617 = vmul.f32 %v616, %v595
        %v618 = vmul.f32 %v616, %v596
        %v619 = vadd.f32 %v587, %v617
        %v620 = vadd.f32 %v588, %v618
        %621 = vrot.lane.b32.xlu0 %v463, 32
        %v622 = vpop.permute.xlu0 %621
        %623 = vrot.lane.b32.xlu0 %v467, 32
        %v624 = vpop.permute.xlu0 %623
        %v625 = vsel %vm549, %v622, %v624
        %v626 = vsel %vm549, %v624, %v622
        %v627 = vmul.f32 %v626, %v556
        %v628 = vmul.f32 %v625, %v560
        %s629 = sld [smem:[#allocation8 + $0x18]]
        %v630 = vstv %s629
        %v631 = vmul.f32 %v630, %v627
        %v632 = vmul.f32 %v630, %v628
        %v633 = vadd.f32 %v601, %v631
        %v634 = vadd.f32 %v602, %v632
        %s635 = sld [smem:[#allocation8 + $0x19]]
        %v636 = vstv %s635
        %v637 = vmul.f32 %v636, %v627
        %v638 = vmul.f32 %v636, %v628
        %v639 = vadd.f32 %v607, %v637
        %v640 = vadd.f32 %v608, %v638
        %s641 = sld [smem:[#allocation8 + $0x1a]]
        %v642 = vstv %s641
        %v643 = vmul.f32 %v642, %v627
        %v644 = vmul.f32 %v642, %v628
        %v645 = vadd.f32 %v613, %v643
        %v646 = vadd.f32 %v614, %v644
        %s647 = sld [smem:[#allocation8 + $0x1b]]
        %v648 = vstv %s647
        %v649 = vmul.f32 %v648, %v627
        %v650 = vmul.f32 %v648, %v628
        %v651 = vadd.f32 %v619, %v649
        %v652 = vadd.f32 %v620, %v650
        %653 = vrot.lane.b32.xlu0 %v506, 32
        %v654 = vpop.permute.xlu0 %653
        %655 = vrot.lane.b32.xlu0 %v510, 32
        %v656 = vpop.permute.xlu0 %655
        %v657 = vsel %vm549, %v654, %v656
        %v658 = vsel %vm549, %v656, %v654
        %v659 = vmul.f32 %v658, %v556
        %v660 = vmul.f32 %v657, %v560
        %s661 = sld [smem:[#allocation8 + $0x1c]]
        %v662 = vstv %s661
        %v663 = vmul.f32 %v662, %v659
        %v664 = vmul.f32 %v662, %v660
        %v665 = vadd.f32 %v633, %v663
        %v666 = vadd.f32 %v634, %v664
        %s667 = sld [smem:[#allocation8 + $0x1d]]
        %v668 = vstv %s667
        %v669 = vmul.f32 %v668, %v659
        %v670 = vmul.f32 %v668, %v660
        %v671 = vadd.f32 %v639, %v669
        %v672 = vadd.f32 %v640, %v670
        %s673 = sld [smem:[#allocation8 + $0x1e]]
        %v674 = vstv %s673
        %v675 = vmul.f32 %v674, %v659
        %v676 = vmul.f32 %v674, %v660
        %v677 = vadd.f32 %v645, %v675
        %v678 = vadd.f32 %v646, %v676
        %s679 = sld [smem:[#allocation8 + $0x1f]]
        %v680 = vstv %s679
        %v681 = vmul.f32 %v680, %v659
        %v682 = vmul.f32 %v680, %v660
        %v683 = vadd.f32 %v651, %v681
        %v684 = vadd.f32 %v652, %v682
        %685 = vrot.lane.b32.xlu0 %v363, 30
        %v686 = vpop.permute.xlu0 %685
        %687 = vrot.lane.b32.xlu0 %v367, 30
        %v688 = vpop.permute.xlu0 %687
        %vm689 = vcmp.lt.s32.totalorder %v375, 30
        %v690 = vsel %vm689, %v686, %v688
        %v691 = vsel %vm689, %v688, %v686
        %v693 = vlaneseq
        %v694 = vshrl.u32 %v693, 7
        %v695 = vsub.s32 0, %v694
        %v696 = vrot.slane %v339, %v695
        %v697 = vlaneseq
        %v698 = vshrl.u32 %v697, 7
        %v699 = vsub.s32 1, %v698
        %v700 = vrot.slane %v339, %v699
        %v703 = vmul.f32 %v691, %v696
        %v704 = vmul.f32 %v690, %v700
        %s705 = sld [smem:[#allocation8 + $0x20]]
        %v706 = vstv %s705
        %v707 = vmul.f32 %v706, %v703
        %v708 = vmul.f32 %v706, %v704
        %v709 = vadd.f32 %v665, %v707
        %v710 = vadd.f32 %v666, %v708
        %s711 = sld [smem:[#allocation8 + $0x21]]
        %v712 = vstv %s711
        %v713 = vmul.f32 %v712, %v703
        %v714 = vmul.f32 %v712, %v704
        %v715 = vadd.f32 %v671, %v713
        %v716 = vadd.f32 %v672, %v714
        %s717 = sld [smem:[#allocation8 + $0x22]]
        %v718 = vstv %s717
        %v719 = vmul.f32 %v718, %v703
        %v720 = vmul.f32 %v718, %v704
        %v721 = vadd.f32 %v677, %v719
        %v722 = vadd.f32 %v678, %v720
        %s723 = sld [smem:[#allocation8 + $0x23]]
        %v724 = vstv %s723
        %v725 = vmul.f32 %v724, %v703
        %v726 = vmul.f32 %v724, %v704
        %v727 = vadd.f32 %v683, %v725
        %v728 = vadd.f32 %v684, %v726
        %729 = vrot.lane.b32.xlu0 %v420, 30
        %v730 = vpop.permute.xlu0 %729
        %731 = vrot.lane.b32.xlu0 %v424, 30
        %v732 = vpop.permute.xlu0 %731
        %v733 = vsel %vm689, %v730, %v732
        %v734 = vsel %vm689, %v732, %v730
        %v735 = vmul.f32 %v734, %v696
        %v736 = vmul.f32 %v733, %v700
        %s737 = sld [smem:[#allocation8 + $0x24]]
        %v738 = vstv %s737
        %v739 = vmul.f32 %v738, %v735
        %v740 = vmul.f32 %v738, %v736
        %v741 = vadd.f32 %v709, %v739
        %v742 = vadd.f32 %v710, %v740
        %s743 = sld [smem:[#allocation8 + $0x25]]
        %v744 = vstv %s743
        %v745 = vmul.f32 %v744, %v735
        %v746 = vmul.f32 %v744, %v736
        %v747 = vadd.f32 %v715, %v745
        %v748 = vadd.f32 %v716, %v746
        %s749 = sld [smem:[#allocation8 + $0x26]]
        %v750 = vstv %s749
        %v751 = vmul.f32 %v750, %v735
        %v752 = vmul.f32 %v750, %v736
        %v753 = vadd.f32 %v721, %v751
        %v754 = vadd.f32 %v722, %v752
        %s755 = sld [smem:[#allocation8 + $0x27]]
        %v756 = vstv %s755
        %v757 = vmul.f32 %v756, %v735
        %v758 = vmul.f32 %v756, %v736
        %v759 = vadd.f32 %v727, %v757
        %v760 = vadd.f32 %v728, %v758
        %761 = vrot.lane.b32.xlu0 %v463, 30
        %v762 = vpop.permute.xlu0 %761
        %763 = vrot.lane.b32.xlu0 %v467, 30
        %v764 = vpop.permute.xlu0 %763
        %v765 = vsel %vm689, %v762, %v764
        %v766 = vsel %vm689, %v764, %v762
        %v767 = vmul.f32 %v766, %v696
        %v768 = vmul.f32 %v765, %v700
        %s769 = sld [smem:[#allocation8 + $0x28]]
        %v770 = vstv %s769
        %v771 = vmul.f32 %v770, %v767
        %v772 = vmul.f32 %v770, %v768
        %v773 = vadd.f32 %v741, %v771
        %v774 = vadd.f32 %v742, %v772
        %s775 = sld [smem:[#allocation8 + $0x29]]
        %v776 = vstv %s775
        %v777 = vmul.f32 %v776, %v767
        %v778 = vmul.f32 %v776, %v768
        %v779 = vadd.f32 %v747, %v777
        %v780 = vadd.f32 %v748, %v778
        %s781 = sld [smem:[#allocation8 + $0x2a]]
        %v782 = vstv %s781
        %v783 = vmul.f32 %v782, %v767
        %v784 = vmul.f32 %v782, %v768
        %v785 = vadd.f32 %v753, %v783
        %v786 = vadd.f32 %v754, %v784
        %s787 = sld [smem:[#allocation8 + $0x2b]]
        %v788 = vstv %s787
        %v789 = vmul.f32 %v788, %v767
        %v790 = vmul.f32 %v788, %v768
        %v791 = vadd.f32 %v759, %v789
        %v792 = vadd.f32 %v760, %v790
        %793 = vrot.lane.b32.xlu0 %v506, 30
        %v794 = vpop.permute.xlu0 %793
        %795 = vrot.lane.b32.xlu0 %v510, 30
        %v796 = vpop.permute.xlu0 %795
        %v797 = vsel %vm689, %v794, %v796
        %v798 = vsel %vm689, %v796, %v794
        %v799 = vmul.f32 %v798, %v696
        %v800 = vmul.f32 %v797, %v700
        %s801 = sld [smem:[#allocation8 + $0x2c]]
        %v802 = vstv %s801
        %v803 = vmul.f32 %v802, %v799
        %v804 = vmul.f32 %v802, %v800
        %v805 = vadd.f32 %v773, %v803
        %v806 = vadd.f32 %v774, %v804
        %s807 = sld [smem:[#allocation8 + $0x2d]]
        %v808 = vstv %s807
        %v809 = vmul.f32 %v808, %v799
        %v810 = vmul.f32 %v808, %v800
        %v811 = vadd.f32 %v779, %v809
        %v812 = vadd.f32 %v780, %v810
        %s813 = sld [smem:[#allocation8 + $0x2e]]
        %v814 = vstv %s813
        %v815 = vmul.f32 %v814, %v799
        %v816 = vmul.f32 %v814, %v800
        %v817 = vadd.f32 %v785, %v815
        %v818 = vadd.f32 %v786, %v816
        %s819 = sld [smem:[#allocation8 + $0x2f]]
        %v820 = vstv %s819
        %v821 = vmul.f32 %v820, %v799
        %v822 = vmul.f32 %v820, %v800
        %v823 = vadd.f32 %v791, %v821
        %v824 = vadd.f32 %v792, %v822
        %825 = vrot.lane.b32.xlu0 %v363, 2
        %v826 = vpop.permute.xlu0 %825
        %827 = vrot.lane.b32.xlu0 %v367, 2
        %v828 = vpop.permute.xlu0 %827
        %vm829 = vcmp.lt.s32.totalorder %v375, 2
        %v830 = vsel %vm829, %v826, %v828
        %v831 = vsel %vm829, %v828, %v826
        %v833 = vlaneseq
        %v834 = vshrl.u32 %v833, 7
        %v835 = vsub.s32 0, %v834
        %v836 = vrot.slane %v341, %v835
        %v837 = vlaneseq
        %v838 = vshrl.u32 %v837, 7
        %v839 = vsub.s32 1, %v838
        %v840 = vrot.slane %v341, %v839
        %v843 = vmul.f32 %v831, %v836
        %v844 = vmul.f32 %v830, %v840
        %s845 = sld [smem:[#allocation8 + $0x30]]
        %v846 = vstv %s845
        %v847 = vmul.f32 %v846, %v843
        %v848 = vmul.f32 %v846, %v844
        %v849 = vadd.f32 %v805, %v847
        %v850 = vadd.f32 %v806, %v848
        %s851 = sld [smem:[#allocation8 + $0x31]]
        %v852 = vstv %s851
        %v853 = vmul.f32 %v852, %v843
        %v854 = vmul.f32 %v852, %v844
        %v855 = vadd.f32 %v811, %v853
        %v856 = vadd.f32 %v812, %v854
        %s857 = sld [smem:[#allocation8 + $0x32]]
        %v858 = vstv %s857
        %v859 = vmul.f32 %v858, %v843
        %v860 = vmul.f32 %v858, %v844
        %v861 = vadd.f32 %v817, %v859
        %v862 = vadd.f32 %v818, %v860
        %s863 = sld [smem:[#allocation8 + $0x33]]
        %v864 = vstv %s863
        %v865 = vmul.f32 %v864, %v843
        %v866 = vmul.f32 %v864, %v844
        %v867 = vadd.f32 %v823, %v865
        %v868 = vadd.f32 %v824, %v866
        %869 = vrot.lane.b32.xlu0 %v420, 2
        %v870 = vpop.permute.xlu0 %869
        %871 = vrot.lane.b32.xlu0 %v424, 2
        %v872 = vpop.permute.xlu0 %871
        %v873 = vsel %vm829, %v870, %v872
        %v874 = vsel %vm829, %v872, %v870
        %v875 = vmul.f32 %v874, %v836
        %v876 = vmul.f32 %v873, %v840
        %s877 = sld [smem:[#allocation8 + $0x34]]
        %v878 = vstv %s877
        %v879 = vmul.f32 %v878, %v875
        %v880 = vmul.f32 %v878, %v876
        %v881 = vadd.f32 %v849, %v879
        %v882 = vadd.f32 %v850, %v880
        %s883 = sld [smem:[#allocation8 + $0x35]]
        %v884 = vstv %s883
        %v885 = vmul.f32 %v884, %v875
        %v886 = vmul.f32 %v884, %v876
        %v887 = vadd.f32 %v855, %v885
        %v888 = vadd.f32 %v856, %v886
        %s889 = sld [smem:[#allocation8 + $0x36]]
        %v890 = vstv %s889
        %v891 = vmul.f32 %v890, %v875
        %v892 = vmul.f32 %v890, %v876
        %v893 = vadd.f32 %v861, %v891
        %v894 = vadd.f32 %v862, %v892
        %s895 = sld [smem:[#allocation8 + $0x37]]
        %v896 = vstv %s895
        %v897 = vmul.f32 %v896, %v875
        %v898 = vmul.f32 %v896, %v876
        %v899 = vadd.f32 %v867, %v897
        %v900 = vadd.f32 %v868, %v898
        %901 = vrot.lane.b32.xlu0 %v463, 2
        %v902 = vpop.permute.xlu0 %901
        %903 = vrot.lane.b32.xlu0 %v467, 2
        %v904 = vpop.permute.xlu0 %903
        %v905 = vsel %vm829, %v902, %v904
        %v906 = vsel %vm829, %v904, %v902
        %v907 = vmul.f32 %v906, %v836
        %v908 = vmul.f32 %v905, %v840
        %s909 = sld [smem:[#allocation8 + $0x38]]
        %v910 = vstv %s909
        %v911 = vmul.f32 %v910, %v907
        %v912 = vmul.f32 %v910, %v908
        %v913 = vadd.f32 %v881, %v911
        %v914 = vadd.f32 %v882, %v912
        %s915 = sld [smem:[#allocation8 + $0x39]]
        %v916 = vstv %s915
        %v917 = vmul.f32 %v916, %v907
        %v918 = vmul.f32 %v916, %v908
        %v919 = vadd.f32 %v887, %v917
        %v920 = vadd.f32 %v888, %v918
        %s921 = sld [smem:[#allocation8 + $0x3a]]
        %v922 = vstv %s921
        %v923 = vmul.f32 %v922, %v907
        %v924 = vmul.f32 %v922, %v908
        %v925 = vadd.f32 %v893, %v923
        %v926 = vadd.f32 %v894, %v924
        %s927 = sld [smem:[#allocation8 + $0x3b]]
        %v928 = vstv %s927
        %v929 = vmul.f32 %v928, %v907
        %v930 = vmul.f32 %v928, %v908
        %v931 = vadd.f32 %v899, %v929
        %v932 = vadd.f32 %v900, %v930
        %933 = vrot.lane.b32.xlu0 %v506, 2
        %v934 = vpop.permute.xlu0 %933
        %935 = vrot.lane.b32.xlu0 %v510, 2
        %v936 = vpop.permute.xlu0 %935
        %v937 = vsel %vm829, %v934, %v936
        %v938 = vsel %vm829, %v936, %v934
        %v939 = vmul.f32 %v938, %v836
        %v940 = vmul.f32 %v937, %v840
        %s941 = sld [smem:[#allocation8 + $0x3c]]
        %v942 = vstv %s941
        %v943 = vmul.f32 %v942, %v939
        %v944 = vmul.f32 %v942, %v940
        %v945 = vadd.f32 %v913, %v943
        %v946 = vadd.f32 %v914, %v944
        %s947 = sld [smem:[#allocation8 + $0x3d]]
        %v948 = vstv %s947
        %v949 = vmul.f32 %v948, %v939
        %v950 = vmul.f32 %v948, %v940
        %v951 = vadd.f32 %v919, %v949
        %v952 = vadd.f32 %v920, %v950
        %s953 = sld [smem:[#allocation8 + $0x3e]]
        %v954 = vstv %s953
        %v955 = vmul.f32 %v954, %v939
        %v956 = vmul.f32 %v954, %v940
        %v957 = vadd.f32 %v925, %v955
        %v958 = vadd.f32 %v926, %v956
        %s959 = sld [smem:[#allocation8 + $0x3f]]
        %v960 = vstv %s959
        %v961 = vmul.f32 %v960, %v939
        %v962 = vmul.f32 %v960, %v940
        %v963 = vadd.f32 %v931, %v961
        %v964 = vadd.f32 %v932, %v962
        %v965 = vmul.f32 %v352, %v343
        %s966 = sld [smem:[#allocation8 + $0x40]]
        %v967 = vstv %s966
        %v968 = vmul.f32 %v967, %v965
        %v970 = vlaneseq
        %v971 = vshrl.u32 %v970, 7
        %v972 = vsub.s32 0, %v971
        %v973 = vrot.slane %v968, %v972
        %v974 = vlaneseq
        %v975 = vshrl.u32 %v974, 7
        %v976 = vsub.s32 1, %v975
        %v977 = vrot.slane %v968, %v976
        %v980 = vadd.f32 %v945, %v973
        %v981 = vadd.f32 %v946, %v977
        %s982 = sld [smem:[#allocation8 + $0x41]]
        %v983 = vstv %s982
        %v984 = vmul.f32 %v983, %v965
        %v986 = vlaneseq
        %v987 = vshrl.u32 %v986, 7
        %v988 = vsub.s32 0, %v987
        %v989 = vrot.slane %v984, %v988
        %v990 = vlaneseq
        %v991 = vshrl.u32 %v990, 7
        %v992 = vsub.s32 1, %v991
        %v993 = vrot.slane %v984, %v992
        %v996 = vadd.f32 %v951, %v989
        %v997 = vadd.f32 %v952, %v993
        %s998 = sld [smem:[#allocation8 + $0x42]]
        %v999 = vstv %s998
        %v1000 = vmul.f32 %v999, %v965
        %v1002 = vlaneseq
        %v1003 = vshrl.u32 %v1002, 7
        %v1004 = vsub.s32 0, %v1003
        %v1005 = vrot.slane %v1000, %v1004
        %v1006 = vlaneseq
        %v1007 = vshrl.u32 %v1006, 7
        %v1008 = vsub.s32 1, %v1007
        %v1009 = vrot.slane %v1000, %v1008
        %v1012 = vadd.f32 %v957, %v1005
        %v1013 = vadd.f32 %v958, %v1009
        %s1014 = sld [smem:[#allocation8 + $0x43]]
        %v1015 = vstv %s1014
        %v1016 = vmul.f32 %v1015, %v965
        %v1018 = vlaneseq
        %v1019 = vshrl.u32 %v1018, 7
        %v1020 = vsub.s32 0, %v1019
        %v1021 = vrot.slane %v1016, %v1020
        %v1022 = vlaneseq
        %v1023 = vshrl.u32 %v1022, 7
        %v1024 = vsub.s32 1, %v1023
        %v1025 = vrot.slane %v1016, %v1024
        %v1028 = vadd.f32 %v963, %v1021
        %v1029 = vadd.f32 %v964, %v1025
        %v1030 = vmul.f32 %v354, %v343
        %s1031 = sld [smem:[#allocation8 + $0x44]]
        %v1032 = vstv %s1031
        %v1033 = vmul.f32 %v1032, %v1030
        %v1035 = vlaneseq
        %v1036 = vshrl.u32 %v1035, 7
        %v1037 = vsub.s32 0, %v1036
        %v1038 = vrot.slane %v1033, %v1037
        %v1039 = vlaneseq
        %v1040 = vshrl.u32 %v1039, 7
        %v1041 = vsub.s32 1, %v1040
        %v1042 = vrot.slane %v1033, %v1041
        %v1045 = vadd.f32 %v980, %v1038
        %v1046 = vadd.f32 %v981, %v1042
        %s1047 = sld [smem:[#allocation8 + $0x45]]
        %v1048 = vstv %s1047
        %v1049 = vmul.f32 %v1048, %v1030
        %v1051 = vlaneseq
        %v1052 = vshrl.u32 %v1051, 7
        %v1053 = vsub.s32 0, %v1052
        %v1054 = vrot.slane %v1049, %v1053
        %v1055 = vlaneseq
        %v1056 = vshrl.u32 %v1055, 7
        %v1057 = vsub.s32 1, %v1056
        %v1058 = vrot.slane %v1049, %v1057
        %v1061 = vadd.f32 %v996, %v1054
        %v1062 = vadd.f32 %v997, %v1058
        %s1063 = sld [smem:[#allocation8 + $0x46]]
        %v1064 = vstv %s1063
        %v1065 = vmul.f32 %v1064, %v1030
        %v1067 = vlaneseq
        %v1068 = vshrl.u32 %v1067, 7
        %v1069 = vsub.s32 0, %v1068
        %v1070 = vrot.slane %v1065, %v1069
        %v1071 = vlaneseq
        %v1072 = vshrl.u32 %v1071, 7
        %v1073 = vsub.s32 1, %v1072
        %v1074 = vrot.slane %v1065, %v1073
        %v1077 = vadd.f32 %v1012, %v1070
        %v1078 = vadd.f32 %v1013, %v1074
        %s1079 = sld [smem:[#allocation8 + $0x47]]
        %v1080 = vstv %s1079
        %v1081 = vmul.f32 %v1080, %v1030
        %v1083 = vlaneseq
        %v1084 = vshrl.u32 %v1083, 7
        %v1085 = vsub.s32 0, %v1084
        %v1086 = vrot.slane %v1081, %v1085
        %v1087 = vlaneseq
        %v1088 = vshrl.u32 %v1087, 7
        %v1089 = vsub.s32 1, %v1088
        %v1090 = vrot.slane %v1081, %v1089
        %v1093 = vadd.f32 %v1028, %v1086
        %v1094 = vadd.f32 %v1029, %v1090
        %v1095 = vmul.f32 %v356, %v343
        %s1096 = sld [smem:[#allocation8 + $0x48]]
        %v1097 = vstv %s1096
        %v1098 = vmul.f32 %v1097, %v1095
        %v1100 = vlaneseq
        %v1101 = vshrl.u32 %v1100, 7
        %v1102 = vsub.s32 0, %v1101
        %v1103 = vrot.slane %v1098, %v1102
        %v1104 = vlaneseq
        %v1105 = vshrl.u32 %v1104, 7
        %v1106 = vsub.s32 1, %v1105
        %v1107 = vrot.slane %v1098, %v1106
        %v1110 = vadd.f32 %v1045, %v1103
        %v1111 = vadd.f32 %v1046, %v1107
        %s1112 = sld [smem:[#allocation8 + $0x49]]
        %v1113 = vstv %s1112
        %v1114 = vmul.f32 %v1113, %v1095
        %v1116 = vlaneseq
        %v1117 = vshrl.u32 %v1116, 7
        %v1118 = vsub.s32 0, %v1117
        %v1119 = vrot.slane %v1114, %v1118
        %v1120 = vlaneseq
        %v1121 = vshrl.u32 %v1120, 7
        %v1122 = vsub.s32 1, %v1121
        %v1123 = vrot.slane %v1114, %v1122
        %v1126 = vadd.f32 %v1061, %v1119
        %v1127 = vadd.f32 %v1062, %v1123
        %s1128 = sld [smem:[#allocation8 + $0x4a]]
        %v1129 = vstv %s1128
        %v1130 = vmul.f32 %v1129, %v1095
        %v1132 = vlaneseq
        %v1133 = vshrl.u32 %v1132, 7
        %v1134 = vsub.s32 0, %v1133
        %v1135 = vrot.slane %v1130, %v1134
        %v1136 = vlaneseq
        %v1137 = vshrl.u32 %v1136, 7
        %v1138 = vsub.s32 1, %v1137
        %v1139 = vrot.slane %v1130, %v1138
        %v1142 = vadd.f32 %v1077, %v1135
        %v1143 = vadd.f32 %v1078, %v1139
        %s1144 = sld [smem:[#allocation8 + $0x4b]]
        %v1145 = vstv %s1144
        %v1146 = vmul.f32 %v1145, %v1095
        %v1148 = vlaneseq
        %v1149 = vshrl.u32 %v1148, 7
        %v1150 = vsub.s32 0, %v1149
        %v1151 = vrot.slane %v1146, %v1150
        %v1152 = vlaneseq
        %v1153 = vshrl.u32 %v1152, 7
        %v1154 = vsub.s32 1, %v1153
        %v1155 = vrot.slane %v1146, %v1154
        %v1158 = vadd.f32 %v1093, %v1151
        %v1159 = vadd.f32 %v1094, %v1155
        %v1160 = vmul.f32 %v358, %v343
        %s1161 = sld [smem:[#allocation8 + $0x4c]]
        %v1162 = vstv %s1161
        %v1163 = vmul.f32 %v1162, %v1160
        %v1165 = vlaneseq
        %v1166 = vshrl.u32 %v1165, 7
        %v1167 = vsub.s32 0, %v1166
        %v1168 = vrot.slane %v1163, %v1167
        %v1169 = vlaneseq
        %v1170 = vshrl.u32 %v1169, 7
        %v1171 = vsub.s32 1, %v1170
        %v1172 = vrot.slane %v1163, %v1171
        %v1175 = vadd.f32 %v1110, %v1168
        %v1176 = vadd.f32 %v1111, %v1172
        %s1177 = sld [smem:[#allocation8 + $0x4d]]
        %v1178 = vstv %s1177
        %v1179 = vmul.f32 %v1178, %v1160
        %v1181 = vlaneseq
        %v1182 = vshrl.u32 %v1181, 7
        %v1183 = vsub.s32 0, %v1182
        %v1184 = vrot.slane %v1179, %v1183
        %v1185 = vlaneseq
        %v1186 = vshrl.u32 %v1185, 7
        %v1187 = vsub.s32 1, %v1186
        %v1188 = vrot.slane %v1179, %v1187
        %v1191 = vadd.f32 %v1126, %v1184
        %v1192 = vadd.f32 %v1127, %v1188
        %s1193 = sld [smem:[#allocation8 + $0x4e]]
        %v1194 = vstv %s1193
        %v1195 = vmul.f32 %v1194, %v1160
        %v1197 = vlaneseq
        %v1198 = vshrl.u32 %v1197, 7
        %v1199 = vsub.s32 0, %v1198
        %v1200 = vrot.slane %v1195, %v1199
        %v1201 = vlaneseq
        %v1202 = vshrl.u32 %v1201, 7
        %v1203 = vsub.s32 1, %v1202
        %v1204 = vrot.slane %v1195, %v1203
        %v1207 = vadd.f32 %v1142, %v1200
        %v1208 = vadd.f32 %v1143, %v1204
        %s1209 = sld [smem:[#allocation8 + $0x4f]]
        %v1210 = vstv %s1209
        %v1211 = vmul.f32 %v1210, %v1160
        %v1213 = vlaneseq
        %v1214 = vshrl.u32 %v1213, 7
        %v1215 = vsub.s32 0, %v1214
        %v1216 = vrot.slane %v1211, %v1215
        %v1217 = vlaneseq
        %v1218 = vshrl.u32 %v1217, 7
        %v1219 = vsub.s32 1, %v1218
        %v1220 = vrot.slane %v1211, %v1219
        %v1223 = vadd.f32 %v1158, %v1216
        %v1224 = vadd.f32 %v1159, %v1220
        %1225 = vrot.lane.b32.xlu0 %v363, 126
        %v1226 = vpop.permute.xlu0 %1225
        %1227 = vrot.lane.b32.xlu0 %v367, 126
        %v1228 = vpop.permute.xlu0 %1227
        %vm1229 = vcmp.lt.s32.totalorder %v375, 126
        %v1230 = vsel %vm1229, %v1226, %v1228
        %v1231 = vsel %vm1229, %v1228, %v1226
        %v1233 = vlaneseq
        %v1234 = vshrl.u32 %v1233, 7
        %v1235 = vsub.s32 0, %v1234
        %v1236 = vrot.slane %v345, %v1235
        %v1237 = vlaneseq
        %v1238 = vshrl.u32 %v1237, 7
        %v1239 = vsub.s32 1, %v1238
        %v1240 = vrot.slane %v345, %v1239
        %v1243 = vmul.f32 %v1230, %v1236
        %v1244 = vmul.f32 %v1231, %v1240
        %s1245 = sld [smem:[#allocation8 + $0x50]]
        %v1246 = vstv %s1245
        %v1247 = vmul.f32 %v1246, %v1243
        %v1248 = vmul.f32 %v1246, %v1244
        %v1249 = vadd.f32 %v1175, %v1247
        %v1250 = vadd.f32 %v1176, %v1248
        %s1251 = sld [smem:[#allocation8 + $0x51]]
        %v1252 = vstv %s1251
        %v1253 = vmul.f32 %v1252, %v1243
        %v1254 = vmul.f32 %v1252, %v1244
        %v1255 = vadd.f32 %v1191, %v1253
        %v1256 = vadd.f32 %v1192, %v1254
        %s1257 = sld [smem:[#allocation8 + $0x52]]
        %v1258 = vstv %s1257
        %v1259 = vmul.f32 %v1258, %v1243
        %v1260 = vmul.f32 %v1258, %v1244
        %v1261 = vadd.f32 %v1207, %v1259
        %v1262 = vadd.f32 %v1208, %v1260
        %s1263 = sld [smem:[#allocation8 + $0x53]]
        %v1264 = vstv %s1263
        %v1265 = vmul.f32 %v1264, %v1243
        %v1266 = vmul.f32 %v1264, %v1244
        %v1267 = vadd.f32 %v1223, %v1265
        %v1268 = vadd.f32 %v1224, %v1266
        %1269 = vrot.lane.b32.xlu0 %v420, 126
        %v1270 = vpop.permute.xlu0 %1269
        %1271 = vrot.lane.b32.xlu0 %v424, 126
        %v1272 = vpop.permute.xlu0 %1271
        %v1273 = vsel %vm1229, %v1270, %v1272
        %v1274 = vsel %vm1229, %v1272, %v1270
        %v1275 = vmul.f32 %v1273, %v1236
        %v1276 = vmul.f32 %v1274, %v1240
        %s1277 = sld [smem:[#allocation8 + $0x54]]
        %v1278 = vstv %s1277
        %v1279 = vmul.f32 %v1278, %v1275
        %v1280 = vmul.f32 %v1278, %v1276
        %v1281 = vadd.f32 %v1249, %v1279
        %v1282 = vadd.f32 %v1250, %v1280
        %s1283 = sld [smem:[#allocation8 + $0x55]]
        %v1284 = vstv %s1283
        %v1285 = vmul.f32 %v1284, %v1275
        %v1286 = vmul.f32 %v1284, %v1276
        %v1287 = vadd.f32 %v1255, %v1285
        %v1288 = vadd.f32 %v1256, %v1286
        %s1289 = sld [smem:[#allocation8 + $0x56]]
        %v1290 = vstv %s1289
        %v1291 = vmul.f32 %v1290, %v1275
        %v1292 = vmul.f32 %v1290, %v1276
        %v1293 = vadd.f32 %v1261, %v1291
        %v1294 = vadd.f32 %v1262, %v1292
        %s1295 = sld [smem:[#allocation8 + $0x57]]
        %v1296 = vstv %s1295
        %v1297 = vmul.f32 %v1296, %v1275
        %v1298 = vmul.f32 %v1296, %v1276
        %v1299 = vadd.f32 %v1267, %v1297
        %v1300 = vadd.f32 %v1268, %v1298
        %1301 = vrot.lane.b32.xlu0 %v463, 126
        %v1302 = vpop.permute.xlu0 %1301
        %1303 = vrot.lane.b32.xlu0 %v467, 126
        %v1304 = vpop.permute.xlu0 %1303
        %v1305 = vsel %vm1229, %v1302, %v1304
        %v1306 = vsel %vm1229, %v1304, %v1302
        %v1307 = vmul.f32 %v1305, %v1236
        %v1308 = vmul.f32 %v1306, %v1240
        %s1309 = sld [smem:[#allocation8 + $0x58]]
        %v1310 = vstv %s1309
        %v1311 = vmul.f32 %v1310, %v1307
        %v1312 = vmul.f32 %v1310, %v1308
        %v1313 = vadd.f32 %v1281, %v1311
        %v1314 = vadd.f32 %v1282, %v1312
        %s1315 = sld [smem:[#allocation8 + $0x59]]
        %v1316 = vstv %s1315
        %v1317 = vmul.f32 %v1316, %v1307
        %v1318 = vmul.f32 %v1316, %v1308
        %v1319 = vadd.f32 %v1287, %v1317
        %v1320 = vadd.f32 %v1288, %v1318
        %s1321 = sld [smem:[#allocation8 + $0x5a]]
        %v1322 = vstv %s1321
        %v1323 = vmul.f32 %v1322, %v1307
        %v1324 = vmul.f32 %v1322, %v1308
        %v1325 = vadd.f32 %v1293, %v1323
        %v1326 = vadd.f32 %v1294, %v1324
        %s1327 = sld [smem:[#allocation8 + $0x5b]]
        %v1328 = vstv %s1327
        %v1329 = vmul.f32 %v1328, %v1307
        %v1330 = vmul.f32 %v1328, %v1308
        %v1331 = vadd.f32 %v1299, %v1329
        %v1332 = vadd.f32 %v1300, %v1330
        %1333 = vrot.lane.b32.xlu0 %v506, 126
        %v1334 = vpop.permute.xlu0 %1333
        %1335 = vrot.lane.b32.xlu0 %v510, 126
        %v1336 = vpop.permute.xlu0 %1335
        %v1337 = vsel %vm1229, %v1334, %v1336
        %v1338 = vsel %vm1229, %v1336, %v1334
        %v1339 = vmul.f32 %v1337, %v1236
        %v1340 = vmul.f32 %v1338, %v1240
        %s1341 = sld [smem:[#allocation8 + $0x5c]]
        %v1342 = vstv %s1341
        %v1343 = vmul.f32 %v1342, %v1339
        %v1344 = vmul.f32 %v1342, %v1340
        %v1345 = vadd.f32 %v1313, %v1343
        %v1346 = vadd.f32 %v1314, %v1344
        %s1347 = sld [smem:[#allocation8 + $0x5d]]
        %v1348 = vstv %s1347
        %v1349 = vmul.f32 %v1348, %v1339
        %v1350 = vmul.f32 %v1348, %v1340
        %v1351 = vadd.f32 %v1319, %v1349
        %v1352 = vadd.f32 %v1320, %v1350
        %s1353 = sld [smem:[#allocation8 + $0x5e]]
        %v1354 = vstv %s1353
        %v1355 = vmul.f32 %v1354, %v1339
        %v1356 = vmul.f32 %v1354, %v1340
        %v1357 = vadd.f32 %v1325, %v1355
        %v1358 = vadd.f32 %v1326, %v1356
        %s1359 = sld [smem:[#allocation8 + $0x5f]]
        %v1360 = vstv %s1359
        %v1361 = vmul.f32 %v1360, %v1339
        %v1362 = vmul.f32 %v1360, %v1340
        %v1363 = vadd.f32 %v1331, %v1361
        %v1364 = vadd.f32 %v1332, %v1362
        %1365 = vrot.lane.b32.xlu0 %v363, 98
        %v1366 = vpop.permute.xlu0 %1365
        %1367 = vrot.lane.b32.xlu0 %v367, 98
        %v1368 = vpop.permute.xlu0 %1367
        %vm1369 = vcmp.lt.s32.totalorder %v375, 98
        %v1370 = vsel %vm1369, %v1366, %v1368
        %v1371 = vsel %vm1369, %v1368, %v1366
        %v1373 = vlaneseq
        %v1374 = vshrl.u32 %v1373, 7
        %v1375 = vsub.s32 0, %v1374
        %v1376 = vrot.slane %v347, %v1375
        %v1377 = vlaneseq
        %v1378 = vshrl.u32 %v1377, 7
        %v1379 = vsub.s32 1, %v1378
        %v1380 = vrot.slane %v347, %v1379
        %v1383 = vmul.f32 %v1370, %v1376
        %v1384 = vmul.f32 %v1371, %v1380
        %s1385 = sld [smem:[#allocation8 + $0x60]]
        %v1386 = vstv %s1385
        %v1387 = vmul.f32 %v1386, %v1383
        %v1388 = vmul.f32 %v1386, %v1384
        %v1389 = vadd.f32 %v1345, %v1387
        %v1390 = vadd.f32 %v1346, %v1388
        %s1391 = sld [smem:[#allocation8 + $0x61]]
        %v1392 = vstv %s1391
        %v1393 = vmul.f32 %v1392, %v1383
        %v1394 = vmul.f32 %v1392, %v1384
        %v1395 = vadd.f32 %v1351, %v1393
        %v1396 = vadd.f32 %v1352, %v1394
        %s1397 = sld [smem:[#allocation8 + $0x62]]
        %v1398 = vstv %s1397
        %v1399 = vmul.f32 %v1398, %v1383
        %v1400 = vmul.f32 %v1398, %v1384
        %v1401 = vadd.f32 %v1357, %v1399
        %v1402 = vadd.f32 %v1358, %v1400
        %s1403 = sld [smem:[#allocation8 + $0x63]]
        %v1404 = vstv %s1403
        %v1405 = vmul.f32 %v1404, %v1383
        %v1406 = vmul.f32 %v1404, %v1384
        %v1407 = vadd.f32 %v1363, %v1405
        %v1408 = vadd.f32 %v1364, %v1406
        %1409 = vrot.lane.b32.xlu0 %v420, 98
        %v1410 = vpop.permute.xlu0 %1409
        %1411 = vrot.lane.b32.xlu0 %v424, 98
        %v1412 = vpop.permute.xlu0 %1411
        %v1413 = vsel %vm1369, %v1410, %v1412
        %v1414 = vsel %vm1369, %v1412, %v1410
        %v1415 = vmul.f32 %v1413, %v1376
        %v1416 = vmul.f32 %v1414, %v1380
        %s1417 = sld [smem:[#allocation8 + $0x64]]
        %v1418 = vstv %s1417
        %v1419 = vmul.f32 %v1418, %v1415
        %v1420 = vmul.f32 %v1418, %v1416
        %v1421 = vadd.f32 %v1389, %v1419
        %v1422 = vadd.f32 %v1390, %v1420
        %s1423 = sld [smem:[#allocation8 + $0x65]]
        %v1424 = vstv %s1423
        %v1425 = vmul.f32 %v1424, %v1415
        %v1426 = vmul.f32 %v1424, %v1416
        %v1427 = vadd.f32 %v1395, %v1425
        %v1428 = vadd.f32 %v1396, %v1426
        %s1429 = sld [smem:[#allocation8 + $0x66]]
        %v1430 = vstv %s1429
        %v1431 = vmul.f32 %v1430, %v1415
        %v1432 = vmul.f32 %v1430, %v1416
        %v1433 = vadd.f32 %v1401, %v1431
        %v1434 = vadd.f32 %v1402, %v1432
        %s1435 = sld [smem:[#allocation8 + $0x67]]
        %v1436 = vstv %s1435
        %v1437 = vmul.f32 %v1436, %v1415
        %v1438 = vmul.f32 %v1436, %v1416
        %v1439 = vadd.f32 %v1407, %v1437
        %v1440 = vadd.f32 %v1408, %v1438
        %1441 = vrot.lane.b32.xlu0 %v463, 98
        %v1442 = vpop.permute.xlu0 %1441
        %1443 = vrot.lane.b32.xlu0 %v467, 98
        %v1444 = vpop.permute.xlu0 %1443
        %v1445 = vsel %vm1369, %v1442, %v1444
        %v1446 = vsel %vm1369, %v1444, %v1442
        %v1447 = vmul.f32 %v1445, %v1376
        %v1448 = vmul.f32 %v1446, %v1380
        %s1449 = sld [smem:[#allocation8 + $0x68]]
        %v1450 = vstv %s1449
        %v1451 = vmul.f32 %v1450, %v1447
        %v1452 = vmul.f32 %v1450, %v1448
        %v1453 = vadd.f32 %v1421, %v1451
        %v1454 = vadd.f32 %v1422, %v1452
        %s1455 = sld [smem:[#allocation8 + $0x69]]
        %v1456 = vstv %s1455
        %v1457 = vmul.f32 %v1456, %v1447
        %v1458 = vmul.f32 %v1456, %v1448
        %v1459 = vadd.f32 %v1427, %v1457
        %v1460 = vadd.f32 %v1428, %v1458
        %s1461 = sld [smem:[#allocation8 + $0x6a]]
        %v1462 = vstv %s1461
        %v1463 = vmul.f32 %v1462, %v1447
        %v1464 = vmul.f32 %v1462, %v1448
        %v1465 = vadd.f32 %v1433, %v1463
        %v1466 = vadd.f32 %v1434, %v1464
        %s1467 = sld [smem:[#allocation8 + $0x6b]]
        %v1468 = vstv %s1467
        %v1469 = vmul.f32 %v1468, %v1447
        %v1470 = vmul.f32 %v1468, %v1448
        %v1471 = vadd.f32 %v1439, %v1469
        %v1472 = vadd.f32 %v1440, %v1470
        %1473 = vrot.lane.b32.xlu0 %v506, 98
        %v1474 = vpop.permute.xlu0 %1473
        %1475 = vrot.lane.b32.xlu0 %v510, 98
        %v1476 = vpop.permute.xlu0 %1475
        %v1477 = vsel %vm1369, %v1474, %v1476
        %v1478 = vsel %vm1369, %v1476, %v1474
        %v1479 = vmul.f32 %v1477, %v1376
        %v1480 = vmul.f32 %v1478, %v1380
        %s1481 = sld [smem:[#allocation8 + $0x6c]]
        %v1482 = vstv %s1481
        %v1483 = vmul.f32 %v1482, %v1479
        %v1484 = vmul.f32 %v1482, %v1480
        %v1485 = vadd.f32 %v1453, %v1483
        %v1486 = vadd.f32 %v1454, %v1484
        %s1487 = sld [smem:[#allocation8 + $0x6d]]
        %v1488 = vstv %s1487
        %v1489 = vmul.f32 %v1488, %v1479
        %v1490 = vmul.f32 %v1488, %v1480
        %v1491 = vadd.f32 %v1459, %v1489
        %v1492 = vadd.f32 %v1460, %v1490
        %s1493 = sld [smem:[#allocation8 + $0x6e]]
        %v1494 = vstv %s1493
        %v1495 = vmul.f32 %v1494, %v1479
        %v1496 = vmul.f32 %v1494, %v1480
        %v1497 = vadd.f32 %v1465, %v1495
        %v1498 = vadd.f32 %v1466, %v1496
        %s1499 = sld [smem:[#allocation8 + $0x6f]]
        %v1500 = vstv %s1499
        %v1501 = vmul.f32 %v1500, %v1479
        %v1502 = vmul.f32 %v1500, %v1480
        %v1503 = vadd.f32 %v1471, %v1501
        %v1504 = vadd.f32 %v1472, %v1502
        %1505 = vrot.lane.b32.xlu0 %v363, 96
        %v1506 = vpop.permute.xlu0 %1505
        %1507 = vrot.lane.b32.xlu0 %v367, 96
        %v1508 = vpop.permute.xlu0 %1507
        %vm1509 = vcmp.lt.s32.totalorder %v375, 96
        %v1510 = vsel %vm1509, %v1506, %v1508
        %v1511 = vsel %vm1509, %v1508, %v1506
        %v1513 = vlaneseq
        %v1514 = vshrl.u32 %v1513, 7
        %v1515 = vsub.s32 0, %v1514
        %v1516 = vrot.slane %v349, %v1515
        %v1517 = vlaneseq
        %v1518 = vshrl.u32 %v1517, 7
        %v1519 = vsub.s32 1, %v1518
        %v1520 = vrot.slane %v349, %v1519
        %v1523 = vmul.f32 %v1510, %v1516
        %v1524 = vmul.f32 %v1511, %v1520
        %s1525 = sld [smem:[#allocation8 + $0x70]]
        %v1526 = vstv %s1525
        %v1527 = vmul.f32 %v1526, %v1523
        %v1528 = vmul.f32 %v1526, %v1524
        %v1529 = vadd.f32 %v1485, %v1527
        %v1530 = vadd.f32 %v1486, %v1528
        %s1531 = sld [smem:[#allocation8 + $0x71]]
        %v1532 = vstv %s1531
        %v1533 = vmul.f32 %v1532, %v1523
        %v1534 = vmul.f32 %v1532, %v1524
        %v1535 = vadd.f32 %v1491, %v1533
        %v1536 = vadd.f32 %v1492, %v1534
        %s1537 = sld [smem:[#allocation8 + $0x72]]
        %v1538 = vstv %s1537
        %v1539 = vmul.f32 %v1538, %v1523
        %v1540 = vmul.f32 %v1538, %v1524
        %v1541 = vadd.f32 %v1497, %v1539
        %v1542 = vadd.f32 %v1498, %v1540
        %s1543 = sld [smem:[#allocation8 + $0x73]]
        %v1544 = vstv %s1543
        %v1545 = vmul.f32 %v1544, %v1523
        %v1546 = vmul.f32 %v1544, %v1524
        %v1547 = vadd.f32 %v1503, %v1545
        %v1548 = vadd.f32 %v1504, %v1546
        %1549 = vrot.lane.b32.xlu0 %v420, 96
        %v1550 = vpop.permute.xlu0 %1549
        %1551 = vrot.lane.b32.xlu0 %v424, 96
        %v1552 = vpop.permute.xlu0 %1551
        %v1553 = vsel %vm1509, %v1550, %v1552
        %v1554 = vsel %vm1509, %v1552, %v1550
        %v1555 = vmul.f32 %v1553, %v1516
        %v1556 = vmul.f32 %v1554, %v1520
        %s1557 = sld [smem:[#allocation8 + $0x74]]
        %v1558 = vstv %s1557
        %v1559 = vmul.f32 %v1558, %v1555
        %v1560 = vmul.f32 %v1558, %v1556
        %v1561 = vadd.f32 %v1529, %v1559
        %v1562 = vadd.f32 %v1530, %v1560
        %s1563 = sld [smem:[#allocation8 + $0x75]]
        %v1564 = vstv %s1563
        %v1565 = vmul.f32 %v1564, %v1555
        %v1566 = vmul.f32 %v1564, %v1556
        %v1567 = vadd.f32 %v1535, %v1565
        %v1568 = vadd.f32 %v1536, %v1566
        %s1569 = sld [smem:[#allocation8 + $0x76]]
        %v1570 = vstv %s1569
        %v1571 = vmul.f32 %v1570, %v1555
        %v1572 = vmul.f32 %v1570, %v1556
        %v1573 = vadd.f32 %v1541, %v1571
        %v1574 = vadd.f32 %v1542, %v1572
        %s1575 = sld [smem:[#allocation8 + $0x77]]
        %v1576 = vstv %s1575
        %v1577 = vmul.f32 %v1576, %v1555
        %v1578 = vmul.f32 %v1576, %v1556
        %v1579 = vadd.f32 %v1547, %v1577
        %v1580 = vadd.f32 %v1548, %v1578
        %1581 = vrot.lane.b32.xlu0 %v463, 96
        %v1582 = vpop.permute.xlu0 %1581
        %1583 = vrot.lane.b32.xlu0 %v467, 96
        %v1584 = vpop.permute.xlu0 %1583
        %v1585 = vsel %vm1509, %v1582, %v1584
        %v1586 = vsel %vm1509, %v1584, %v1582
        %v1587 = vmul.f32 %v1585, %v1516
        %v1588 = vmul.f32 %v1586, %v1520
        %s1589 = sld [smem:[#allocation8 + $0x78]]
        %v1590 = vstv %s1589
        %v1591 = vmul.f32 %v1590, %v1587
        %v1592 = vmul.f32 %v1590, %v1588
        %v1593 = vadd.f32 %v1561, %v1591
        %v1594 = vadd.f32 %v1562, %v1592
        %s1595 = sld [smem:[#allocation8 + $0x79]]
        %v1596 = vstv %s1595
        %v1597 = vmul.f32 %v1596, %v1587
        %v1598 = vmul.f32 %v1596, %v1588
        %v1599 = vadd.f32 %v1567, %v1597
        %v1600 = vadd.f32 %v1568, %v1598
        %s1601 = sld [smem:[#allocation8 + $0x7a]]
        %v1602 = vstv %s1601
        %v1603 = vmul.f32 %v1602, %v1587
        %v1604 = vmul.f32 %v1602, %v1588
        %v1605 = vadd.f32 %v1573, %v1603
        %v1606 = vadd.f32 %v1574, %v1604
        %s1607 = sld [smem:[#allocation8 + $0x7b]]
        %v1608 = vstv %s1607
        %v1609 = vmul.f32 %v1608, %v1587
        %v1610 = vmul.f32 %v1608, %v1588
        %v1611 = vadd.f32 %v1579, %v1609
        %v1612 = vadd.f32 %v1580, %v1610
        %1613 = vrot.lane.b32.xlu0 %v506, 96
        %v1614 = vpop.permute.xlu0 %1613
        %1615 = vrot.lane.b32.xlu0 %v510, 96
        %v1616 = vpop.permute.xlu0 %1615
        %v1617 = vsel %vm1509, %v1614, %v1616
        %v1618 = vsel %vm1509, %v1616, %v1614
        %v1619 = vmul.f32 %v1617, %v1516
        %v1620 = vmul.f32 %v1618, %v1520
        %s1621 = sld [smem:[#allocation8 + $0x7c]]
        %v1622 = vstv %s1621
        %v1623 = vmul.f32 %v1622, %v1619
        %v1624 = vmul.f32 %v1622, %v1620
        %v1625 = vadd.f32 %v1593, %v1623
        %v1626 = vadd.f32 %v1594, %v1624
        %s1627 = sld [smem:[#allocation8 + $0x7d]]
        %v1628 = vstv %s1627
        %v1629 = vmul.f32 %v1628, %v1619
        %v1630 = vmul.f32 %v1628, %v1620
        %v1631 = vadd.f32 %v1599, %v1629
        %v1632 = vadd.f32 %v1600, %v1630
        %s1633 = sld [smem:[#allocation8 + $0x7e]]
        %v1634 = vstv %s1633
        %v1635 = vmul.f32 %v1634, %v1619
        %v1636 = vmul.f32 %v1634, %v1620
        %v1637 = vadd.f32 %v1605, %v1635
        %v1638 = vadd.f32 %v1606, %v1636
        %s1639 = sld [smem:[#allocation8 + $0x7f]]
        %v1640 = vstv %s1639
        %v1641 = vmul.f32 %v1640, %v1619
        %v1642 = vmul.f32 %v1640, %v1620
        %v1643 = vadd.f32 %v1611, %v1641
        %v1644 = vadd.f32 %v1612, %v1642
        %1645 = vrot.lane.b32.xlu0 %v363, 94
        %v1646 = vpop.permute.xlu0 %1645
        %1647 = vrot.lane.b32.xlu0 %v367, 94
        %v1648 = vpop.permute.xlu0 %1647
        %vm1649 = vcmp.lt.s32.totalorder %v375, 94
        %v1650 = vsel %vm1649, %v1646, %v1648
        %v1651 = vsel %vm1649, %v1648, %v1646
        %v1653 = vlaneseq
        %v1654 = vshrl.u32 %v1653, 7
        %v1655 = vsub.s32 0, %v1654
        %v1656 = vrot.slane %v351, %v1655
        %v1657 = vlaneseq
        %v1658 = vshrl.u32 %v1657, 7
        %v1659 = vsub.s32 1, %v1658
        %v1660 = vrot.slane %v351, %v1659
        %v1663 = vmul.f32 %v1650, %v1656
        %v1664 = vmul.f32 %v1651, %v1660
        %s1665 = sld [smem:[#allocation8 + $0x80]]
        %v1666 = vstv %s1665
        %v1667 = vmul.f32 %v1666, %v1663
        %v1668 = vmul.f32 %v1666, %v1664
        %v1669 = vadd.f32 %v1625, %v1667
        %v1670 = vadd.f32 %v1626, %v1668
        %s1671 = sld [smem:[#allocation8 + $0x81]]
        %v1672 = vstv %s1671
        %v1673 = vmul.f32 %v1672, %v1663
        %v1674 = vmul.f32 %v1672, %v1664
        %v1675 = vadd.f32 %v1631, %v1673
        %v1676 = vadd.f32 %v1632, %v1674
        %s1677 = sld [smem:[#allocation8 + $0x82]]
        %v1678 = vstv %s1677
        %v1679 = vmul.f32 %v1678, %v1663
        %v1680 = vmul.f32 %v1678, %v1664
        %v1681 = vadd.f32 %v1637, %v1679
        %v1682 = vadd.f32 %v1638, %v1680
        %s1683 = sld [smem:[#allocation8 + $0x83]]
        %v1684 = vstv %s1683
        %v1685 = vmul.f32 %v1684, %v1663
        %v1686 = vmul.f32 %v1684, %v1664
        %v1687 = vadd.f32 %v1643, %v1685
        %v1688 = vadd.f32 %v1644, %v1686
        %1689 = vrot.lane.b32.xlu0 %v420, 94
        %v1690 = vpop.permute.xlu0 %1689
        %1691 = vrot.lane.b32.xlu0 %v424, 94
        %v1692 = vpop.permute.xlu0 %1691
        %v1693 = vsel %vm1649, %v1690, %v1692
        %v1694 = vsel %vm1649, %v1692, %v1690
        %v1695 = vmul.f32 %v1693, %v1656
        %v1696 = vmul.f32 %v1694, %v1660
        %s1697 = sld [smem:[#allocation8 + $0x84]]
        %v1698 = vstv %s1697
        %v1699 = vmul.f32 %v1698, %v1695
        %v1700 = vmul.f32 %v1698, %v1696
        %v1701 = vadd.f32 %v1669, %v1699
        %v1702 = vadd.f32 %v1670, %v1700
        %s1703 = sld [smem:[#allocation8 + $0x85]]
        %v1704 = vstv %s1703
        %v1705 = vmul.f32 %v1704, %v1695
        %v1706 = vmul.f32 %v1704, %v1696
        %v1707 = vadd.f32 %v1675, %v1705
        %v1708 = vadd.f32 %v1676, %v1706
        %s1709 = sld [smem:[#allocation8 + $0x86]]
        %v1710 = vstv %s1709
        %v1711 = vmul.f32 %v1710, %v1695
        %v1712 = vmul.f32 %v1710, %v1696
        %v1713 = vadd.f32 %v1681, %v1711
        %v1714 = vadd.f32 %v1682, %v1712
        %s1715 = sld [smem:[#allocation8 + $0x87]]
        %v1716 = vstv %s1715
        %v1717 = vmul.f32 %v1716, %v1695
        %v1718 = vmul.f32 %v1716, %v1696
        %v1719 = vadd.f32 %v1687, %v1717
        %v1720 = vadd.f32 %v1688, %v1718
        %1721 = vrot.lane.b32.xlu0 %v463, 94
        %v1722 = vpop.permute.xlu0 %1721
        %1723 = vrot.lane.b32.xlu0 %v467, 94
        %v1724 = vpop.permute.xlu0 %1723
        %v1725 = vsel %vm1649, %v1722, %v1724
        %v1726 = vsel %vm1649, %v1724, %v1722
        %v1727 = vmul.f32 %v1725, %v1656
        %v1728 = vmul.f32 %v1726, %v1660
        %s1729 = sld [smem:[#allocation8 + $0x88]]
        %v1730 = vstv %s1729
        %v1731 = vmul.f32 %v1730, %v1727
        %v1732 = vmul.f32 %v1730, %v1728
        %v1733 = vadd.f32 %v1701, %v1731
        %v1734 = vadd.f32 %v1702, %v1732
        %s1735 = sld [smem:[#allocation8 + $0x89]]
        %v1736 = vstv %s1735
        %v1737 = vmul.f32 %v1736, %v1727
        %v1738 = vmul.f32 %v1736, %v1728
        %v1739 = vadd.f32 %v1707, %v1737
        %v1740 = vadd.f32 %v1708, %v1738
        %s1741 = sld [smem:[#allocation8 + $0x8a]]
        %v1742 = vstv %s1741
        %v1743 = vmul.f32 %v1742, %v1727
        %v1744 = vmul.f32 %v1742, %v1728
        %v1745 = vadd.f32 %v1713, %v1743
        %v1746 = vadd.f32 %v1714, %v1744
        %s1747 = sld [smem:[#allocation8 + $0x8b]]
        %v1748 = vstv %s1747
        %v1749 = vmul.f32 %v1748, %v1727
        %v1750 = vmul.f32 %v1748, %v1728
        %v1751 = vadd.f32 %v1719, %v1749
        %v1752 = vadd.f32 %v1720, %v1750
        %1753 = vrot.lane.b32.xlu0 %v506, 94
        %v1754 = vpop.permute.xlu0 %1753
        %1755 = vrot.lane.b32.xlu0 %v510, 94
        %v1756 = vpop.permute.xlu0 %1755
        %v1757 = vsel %vm1649, %v1754, %v1756
        %v1758 = vsel %vm1649, %v1756, %v1754
        %v1759 = vmul.f32 %v1757, %v1656
        %v1760 = vmul.f32 %v1758, %v1660
        %s1761 = sld [smem:[#allocation8 + $0x8c]]
        %v1762 = vstv %s1761
        %v1763 = vmul.f32 %v1762, %v1759
        %v1764 = vmul.f32 %v1762, %v1760
        %v1765 = vadd.f32 %v1733, %v1763
        %v1766 = vadd.f32 %v1734, %v1764
        %s1767 = sld [smem:[#allocation8 + $0x8d]]
        %v1768 = vstv %s1767
        %v1769 = vmul.f32 %v1768, %v1759
        %v1770 = vmul.f32 %v1768, %v1760
        %v1771 = vadd.f32 %v1739, %v1769
        %v1772 = vadd.f32 %v1740, %v1770
        %s1773 = sld [smem:[#allocation8 + $0x8e]]
        %v1774 = vstv %s1773
        %v1775 = vmul.f32 %v1774, %v1759
        %v1776 = vmul.f32 %v1774, %v1760
        %v1777 = vadd.f32 %v1745, %v1775
        %v1778 = vadd.f32 %v1746, %v1776
        %s1779 = sld [smem:[#allocation8 + $0x8f]]
        %v1780 = vstv %s1779
        %v1781 = vmul.f32 %v1780, %v1759
        %v1782 = vmul.f32 %v1780, %v1760
        %v1783 = vadd.f32 %v1751, %v1781
        %v1784 = vadd.f32 %v1752, %v1782
        %s1785 = sld [smem:[#allocation9]]
        %v1786 = vstv %s1785
        %v1787 = vadd.f32 %v1765, %v1786
        %v1788 = vadd.f32 %v1766, %v1786
        %v1789 = vmax.f32 %v1787, 0.0
        %v1790 = vmax.f32 %v1788, 0.0
        %s1791 = sld [smem:[#allocation9 + $0x1]]
        %v1792 = vstv %s1791
        %v1793 = vadd.f32 %v1771, %v1792
        %v1794 = vadd.f32 %v1772, %v1792
        %v1795 = vmax.f32 %v1793, 0.0
        %v1796 = vmax.f32 %v1794, 0.0
        %s1797 = sld [smem:[#allocation9 + $0x2]]
        %v1798 = vstv %s1797
        %v1799 = vadd.f32 %v1777, %v1798
        %v1800 = vadd.f32 %v1778, %v1798
        %v1801 = vmax.f32 %v1799, 0.0
        %v1802 = vmax.f32 %v1800, 0.0
        %s1803 = sld [smem:[#allocation9 + $0x3]]
        %v1804 = vstv %s1803
        %v1805 = vadd.f32 %v1783, %v1804
        %v1806 = vadd.f32 %v1784, %v1804
        %v1807 = vmax.f32 %v1805, 0.0
        %v1808 = vmax.f32 %v1806, 0.0
        %1809 = vrot.lane.b32.xlu0 %v1789, 34
        %v1810 = vpop.permute.xlu0 %1809
        %1811 = vrot.lane.b32.xlu0 %v1790, 34
        %v1812 = vpop.permute.xlu0 %1811
        %v1813 = vsel %vm376, %v1810, %v1812
        %v1814 = vsel %vm376, %v1812, %v1810
        %v1815 = vmul.f32 %v1814, %v383
        %v1816 = vmul.f32 %v1813, %v387
        %s1817 = sld [smem:[#allocation11]]
        %v1818 = vstv %s1817
        %v1819 = vmul.f32 %v1818, %v1815
        %v1820 = vmul.f32 %v1818, %v1816
        %v1821 = vadd.f32 %v1819, 0.0
        %v1822 = vadd.f32 %v1820, 0.0
        %s1823 = sld [smem:[#allocation11 + $0x1]]
        %v1824 = vstv %s1823
        %v1825 = vmul.f32 %v1824, %v1815
        %v1826 = vmul.f32 %v1824, %v1816
        %v1827 = vadd.f32 %v1825, 0.0
        %v1828 = vadd.f32 %v1826, 0.0
        %s1829 = sld [smem:[#allocation11 + $0x2]]
        %v1830 = vstv %s1829
        %v1831 = vmul.f32 %v1830, %v1815
        %v1832 = vmul.f32 %v1830, %v1816
        %v1833 = vadd.f32 %v1831, 0.0
        %v1834 = vadd.f32 %v1832, 0.0
        %s1835 = sld [smem:[#allocation11 + $0x3]]
        %v1836 = vstv %s1835
        %v1837 = vmul.f32 %v1836, %v1815
        %v1838 = vmul.f32 %v1836, %v1816
        %v1839 = vadd.f32 %v1837, 0.0
        %v1840 = vadd.f32 %v1838, 0.0
        %1841 = vrot.lane.b32.xlu0 %v1795, 34
        %v1842 = vpop.permute.xlu0 %1841
        %1843 = vrot.lane.b32.xlu0 %v1796, 34
        %v1844 = vpop.permute.xlu0 %1843
        %v1845 = vsel %vm376, %v1842, %v1844
        %v1846 = vsel %vm376, %v1844, %v1842
        %v1847 = vmul.f32 %v1846, %v383
        %v1848 = vmul.f32 %v1845, %v387
        %s1849 = sld [smem:[#allocation11 + $0x4]]
        %v1850 = vstv %s1849
        %v1851 = vmul.f32 %v1850, %v1847
        %v1852 = vmul.f32 %v1850, %v1848
        %v1853 = vadd.f32 %v1821, %v1851
        %v1854 = vadd.f32 %v1822, %v1852
        %s1855 = sld [smem:[#allocation11 + $0x5]]
        %v1856 = vstv %s1855
        %v1857 = vmul.f32 %v1856, %v1847
        %v1858 = vmul.f32 %v1856, %v1848
        %v1859 = vadd.f32 %v1827, %v1857
        %v1860 = vadd.f32 %v1828, %v1858
        %s1861 = sld [smem:[#allocation11 + $0x6]]
        %v1862 = vstv %s1861
        %v1863 = vmul.f32 %v1862, %v1847
        %v1864 = vmul.f32 %v1862, %v1848
        %v1865 = vadd.f32 %v1833, %v1863
        %v1866 = vadd.f32 %v1834, %v1864
        %s1867 = sld [smem:[#allocation11 + $0x7]]
        %v1868 = vstv %s1867
        %v1869 = vmul.f32 %v1868, %v1847
        %v1870 = vmul.f32 %v1868, %v1848
        %v1871 = vadd.f32 %v1839, %v1869
        %v1872 = vadd.f32 %v1840, %v1870
        %1873 = vrot.lane.b32.xlu0 %v1801, 34
        %v1874 = vpop.permute.xlu0 %1873
        %1875 = vrot.lane.b32.xlu0 %v1802, 34
        %v1876 = vpop.permute.xlu0 %1875
        %v1877 = vsel %vm376, %v1874, %v1876
        %v1878 = vsel %vm376, %v1876, %v1874
        %v1879 = vmul.f32 %v1878, %v383
        %v1880 = vmul.f32 %v1877, %v387
        %s1881 = sld [smem:[#allocation11 + $0x8]]
        %v1882 = vstv %s1881
        %v1883 = vmul.f32 %v1882, %v1879
        %v1884 = vmul.f32 %v1882, %v1880
        %v1885 = vadd.f32 %v1853, %v1883
        %v1886 = vadd.f32 %v1854, %v1884
        %s1887 = sld [smem:[#allocation11 + $0x9]]
        %v1888 = vstv %s1887
        %v1889 = vmul.f32 %v1888, %v1879
        %v1890 = vmul.f32 %v1888, %v1880
        %v1891 = vadd.f32 %v1859, %v1889
        %v1892 = vadd.f32 %v1860, %v1890
        %s1893 = sld [smem:[#allocation11 + $0xa]]
        %v1894 = vstv %s1893
        %v1895 = vmul.f32 %v1894, %v1879
        %v1896 = vmul.f32 %v1894, %v1880
        %v1897 = vadd.f32 %v1865, %v1895
        %v1898 = vadd.f32 %v1866, %v1896
        %s1899 = sld [smem:[#allocation11 + $0xb]]
        %v1900 = vstv %s1899
        %v1901 = vmul.f32 %v1900, %v1879
        %v1902 = vmul.f32 %v1900, %v1880
        %v1903 = vadd.f32 %v1871, %v1901
        %v1904 = vadd.f32 %v1872, %v1902
        %1905 = vrot.lane.b32.xlu0 %v1807, 34
        %v1906 = vpop.permute.xlu0 %1905
        %1907 = vrot.lane.b32.xlu0 %v1808, 34
        %v1908 = vpop.permute.xlu0 %1907
        %v1909 = vsel %vm376, %v1906, %v1908
        %v1910 = vsel %vm376, %v1908, %v1906
        %v1911 = vmul.f32 %v1910, %v383
        %v1912 = vmul.f32 %v1909, %v387
        %s1913 = sld [smem:[#allocation11 + $0xc]]
        %v1914 = vstv %s1913
        %v1915 = vmul.f32 %v1914, %v1911
        %v1916 = vmul.f32 %v1914, %v1912
        %v1917 = vadd.f32 %v1885, %v1915
        %v1918 = vadd.f32 %v1886, %v1916
        %s1919 = sld [smem:[#allocation11 + $0xd]]
        %v1920 = vstv %s1919
        %v1921 = vmul.f32 %v1920, %v1911
        %v1922 = vmul.f32 %v1920, %v1912
        %v1923 = vadd.f32 %v1891, %v1921
        %v1924 = vadd.f32 %v1892, %v1922
        %s1925 = sld [smem:[#allocation11 + $0xe]]
        %v1926 = vstv %s1925
        %v1927 = vmul.f32 %v1926, %v1911
        %v1928 = vmul.f32 %v1926, %v1912
        %v1929 = vadd.f32 %v1897, %v1927
        %v1930 = vadd.f32 %v1898, %v1928
        %s1931 = sld [smem:[#allocation11 + $0xf]]
        %v1932 = vstv %s1931
        %v1933 = vmul.f32 %v1932, %v1911
        %v1934 = vmul.f32 %v1932, %v1912
        %v1935 = vadd.f32 %v1903, %v1933
        %v1936 = vadd.f32 %v1904, %v1934
        %1937 = vrot.lane.b32.xlu0 %v1789, 32
        %v1938 = vpop.permute.xlu0 %1937
        %1939 = vrot.lane.b32.xlu0 %v1790, 32
        %v1940 = vpop.permute.xlu0 %1939
        %v1941 = vsel %vm549, %v1938, %v1940
        %v1942 = vsel %vm549, %v1940, %v1938
        %v1943 = vmul.f32 %v1942, %v556
        %v1944 = vmul.f32 %v1941, %v560
        %s1945 = sld [smem:[#allocation11 + $0x10]]
        %v1946 = vstv %s1945
        %v1947 = vmul.f32 %v1946, %v1943
        %v1948 = vmul.f32 %v1946, %v1944
        %v1949 = vadd.f32 %v1917, %v1947
        %v1950 = vadd.f32 %v1918, %v1948
        %s1951 = sld [smem:[#allocation11 + $0x11]]
        %v1952 = vstv %s1951
        %v1953 = vmul.f32 %v1952, %v1943
        %v1954 = vmul.f32 %v1952, %v1944
        %v1955 = vadd.f32 %v1923, %v1953
        %v1956 = vadd.f32 %v1924, %v1954
        %s1957 = sld [smem:[#allocation11 + $0x12]]
        %v1958 = vstv %s1957
        %v1959 = vmul.f32 %v1958, %v1943
        %v1960 = vmul.f32 %v1958, %v1944
        %v1961 = vadd.f32 %v1929, %v1959
        %v1962 = vadd.f32 %v1930, %v1960
        %s1963 = sld [smem:[#allocation11 + $0x13]]
        %v1964 = vstv %s1963
        %v1965 = vmul.f32 %v1964, %v1943
        %v1966 = vmul.f32 %v1964, %v1944
        %v1967 = vadd.f32 %v1935, %v1965
        %v1968 = vadd.f32 %v1936, %v1966
        %1969 = vrot.lane.b32.xlu0 %v1795, 32
        %v1970 = vpop.permute.xlu0 %1969
        %1971 = vrot.lane.b32.xlu0 %v1796, 32
        %v1972 = vpop.permute.xlu0 %1971
        %v1973 = vsel %vm549, %v1970, %v1972
        %v1974 = vsel %vm549, %v1972, %v1970
        %v1975 = vmul.f32 %v1974, %v556
        %v1976 = vmul.f32 %v1973, %v560
        %s1977 = sld [smem:[#allocation11 + $0x14]]
        %v1978 = vstv %s1977
        %v1979 = vmul.f32 %v1978, %v1975
        %v1980 = vmul.f32 %v1978, %v1976
        %v1981 = vadd.f32 %v1949, %v1979
        %v1982 = vadd.f32 %v1950, %v1980
        %s1983 = sld [smem:[#allocation11 + $0x15]]
        %v1984 = vstv %s1983
        %v1985 = vmul.f32 %v1984, %v1975
        %v1986 = vmul.f32 %v1984, %v1976
        %v1987 = vadd.f32 %v1955, %v1985
        %v1988 = vadd.f32 %v1956, %v1986
        %s1989 = sld [smem:[#allocation11 + $0x16]]
        %v1990 = vstv %s1989
        %v1991 = vmul.f32 %v1990, %v1975
        %v1992 = vmul.f32 %v1990, %v1976
        %v1993 = vadd.f32 %v1961, %v1991
        %v1994 = vadd.f32 %v1962, %v1992
        %s1995 = sld [smem:[#allocation11 + $0x17]]
        %v1996 = vstv %s1995
        %v1997 = vmul.f32 %v1996, %v1975
        %v1998 = vmul.f32 %v1996, %v1976
        %v1999 = vadd.f32 %v1967, %v1997
        %v2000 = vadd.f32 %v1968, %v1998
        %2001 = vrot.lane.b32.xlu0 %v1801, 32
        %v2002 = vpop.permute.xlu0 %2001
        %2003 = vrot.lane.b32.xlu0 %v1802, 32
        %v2004 = vpop.permute.xlu0 %2003
        %v2005 = vsel %vm549, %v2002, %v2004
        %v2006 = vsel %vm549, %v2004, %v2002
        %v2007 = vmul.f32 %v2006, %v556
        %v2008 = vmul.f32 %v2005, %v560
        %s2009 = sld [smem:[#allocation11 + $0x18]]
        %v2010 = vstv %s2009
        %v2011 = vmul.f32 %v2010, %v2007
        %v2012 = vmul.f32 %v2010, %v2008
        %v2013 = vadd.f32 %v1981, %v2011
        %v2014 = vadd.f32 %v1982, %v2012
        %s2015 = sld [smem:[#allocation11 + $0x19]]
        %v2016 = vstv %s2015
        %v2017 = vmul.f32 %v2016, %v2007
        %v2018 = vmul.f32 %v2016, %v2008
        %v2019 = vadd.f32 %v1987, %v2017
        %v2020 = vadd.f32 %v1988, %v2018
        %s2021 = sld [smem:[#allocation11 + $0x1a]]
        %v2022 = vstv %s2021
        %v2023 = vmul.f32 %v2022, %v2007
        %v2024 = vmul.f32 %v2022, %v2008
        %v2025 = vadd.f32 %v1993, %v2023
        %v2026 = vadd.f32 %v1994, %v2024
        %s2027 = sld [smem:[#allocation11 + $0x1b]]
        %v2028 = vstv %s2027
        %v2029 = vmul.f32 %v2028, %v2007
        %v2030 = vmul.f32 %v2028, %v2008
        %v2031 = vadd.f32 %v1999, %v2029
        %v2032 = vadd.f32 %v2000, %v2030
        %2033 = vrot.lane.b32.xlu0 %v1807, 32
        %v2034 = vpop.permute.xlu0 %2033
        %2035 = vrot.lane.b32.xlu0 %v1808, 32
        %v2036 = vpop.permute.xlu0 %2035
        %v2037 = vsel %vm549, %v2034, %v2036
        %v2038 = vsel %vm549, %v2036, %v2034
        %v2039 = vmul.f32 %v2038, %v556
        %v2040 = vmul.f32 %v2037, %v560
        %s2041 = sld [smem:[#allocation11 + $0x1c]]
        %v2042 = vstv %s2041
        %v2043 = vmul.f32 %v2042, %v2039
        %v2044 = vmul.f32 %v2042, %v2040
        %v2045 = vadd.f32 %v2013, %v2043
        %v2046 = vadd.f32 %v2014, %v2044
        %s2047 = sld [smem:[#allocation11 + $0x1d]]
        %v2048 = vstv %s2047
        %v2049 = vmul.f32 %v2048, %v2039
        %v2050 = vmul.f32 %v2048, %v2040
        %v2051 = vadd.f32 %v2019, %v2049
        %v2052 = vadd.f32 %v2020, %v2050
        %s2053 = sld [smem:[#allocation11 + $0x1e]]
        %v2054 = vstv %s2053
        %v2055 = vmul.f32 %v2054, %v2039
        %v2056 = vmul.f32 %v2054, %v2040
        %v2057 = vadd.f32 %v2025, %v2055
        %v2058 = vadd.f32 %v2026, %v2056
        %s2059 = sld [smem:[#allocation11 + $0x1f]]
        %v2060 = vstv %s2059
        %v2061 = vmul.f32 %v2060, %v2039
        %v2062 = vmul.f32 %v2060, %v2040
        %v2063 = vadd.f32 %v2031, %v2061
        %v2064 = vadd.f32 %v2032, %v2062
        %2065 = vrot.lane.b32.xlu0 %v1789, 30
        %v2066 = vpop.permute.xlu0 %2065
        %2067 = vrot.lane.b32.xlu0 %v1790, 30
        %v2068 = vpop.permute.xlu0 %2067
        %v2069 = vsel %vm689, %v2066, %v2068
        %v2070 = vsel %vm689, %v2068, %v2066
        %v2071 = vmul.f32 %v2070, %v696
        %v2072 = vmul.f32 %v2069, %v700
        %s2073 = sld [smem:[#allocation11 + $0x20]]
        %v2074 = vstv %s2073
        %v2075 = vmul.f32 %v2074, %v2071
        %v2076 = vmul.f32 %v2074, %v2072
        %v2077 = vadd.f32 %v2045, %v2075
        %v2078 = vadd.f32 %v2046, %v2076
        %s2079 = sld [smem:[#allocation11 + $0x21]]
        %v2080 = vstv %s2079
        %v2081 = vmul.f32 %v2080, %v2071
        %v2082 = vmul.f32 %v2080, %v2072
        %v2083 = vadd.f32 %v2051, %v2081
        %v2084 = vadd.f32 %v2052, %v2082
        %s2085 = sld [smem:[#allocation11 + $0x22]]
        %v2086 = vstv %s2085
        %v2087 = vmul.f32 %v2086, %v2071
        %v2088 = vmul.f32 %v2086, %v2072
        %v2089 = vadd.f32 %v2057, %v2087
        %v2090 = vadd.f32 %v2058, %v2088
        %s2091 = sld [smem:[#allocation11 + $0x23]]
        %v2092 = vstv %s2091
        %v2093 = vmul.f32 %v2092, %v2071
        %v2094 = vmul.f32 %v2092, %v2072
        %v2095 = vadd.f32 %v2063, %v2093
        %v2096 = vadd.f32 %v2064, %v2094
        %2097 = vrot.lane.b32.xlu0 %v1795, 30
        %v2098 = vpop.permute.xlu0 %2097
        %2099 = vrot.lane.b32.xlu0 %v1796, 30
        %v2100 = vpop.permute.xlu0 %2099
        %v2101 = vsel %vm689, %v2098, %v2100
        %v2102 = vsel %vm689, %v2100, %v2098
        %v2103 = vmul.f32 %v2102, %v696
        %v2104 = vmul.f32 %v2101, %v700
        %s2105 = sld [smem:[#allocation11 + $0x24]]
        %v2106 = vstv %s2105
        %v2107 = vmul.f32 %v2106, %v2103
        %v2108 = vmul.f32 %v2106, %v2104
        %v2109 = vadd.f32 %v2077, %v2107
        %v2110 = vadd.f32 %v2078, %v2108
        %s2111 = sld [smem:[#allocation11 + $0x25]]
        %v2112 = vstv %s2111
        %v2113 = vmul.f32 %v2112, %v2103
        %v2114 = vmul.f32 %v2112, %v2104
        %v2115 = vadd.f32 %v2083, %v2113
        %v2116 = vadd.f32 %v2084, %v2114
        %s2117 = sld [smem:[#allocation11 + $0x26]]
        %v2118 = vstv %s2117
        %v2119 = vmul.f32 %v2118, %v2103
        %v2120 = vmul.f32 %v2118, %v2104
        %v2121 = vadd.f32 %v2089, %v2119
        %v2122 = vadd.f32 %v2090, %v2120
        %s2123 = sld [smem:[#allocation11 + $0x27]]
        %v2124 = vstv %s2123
        %v2125 = vmul.f32 %v2124, %v2103
        %v2126 = vmul.f32 %v2124, %v2104
        %v2127 = vadd.f32 %v2095, %v2125
        %v2128 = vadd.f32 %v2096, %v2126
        %2129 = vrot.lane.b32.xlu0 %v1801, 30
        %v2130 = vpop.permute.xlu0 %2129
        %2131 = vrot.lane.b32.xlu0 %v1802, 30
        %v2132 = vpop.permute.xlu0 %2131
        %v2133 = vsel %vm689, %v2130, %v2132
        %v2134 = vsel %vm689, %v2132, %v2130
        %v2135 = vmul.f32 %v2134, %v696
        %v2136 = vmul.f32 %v2133, %v700
        %s2137 = sld [smem:[#allocation11 + $0x28]]
        %v2138 = vstv %s2137
        %v2139 = vmul.f32 %v2138, %v2135
        %v2140 = vmul.f32 %v2138, %v2136
        %v2141 = vadd.f32 %v2109, %v2139
        %v2142 = vadd.f32 %v2110, %v2140
        %s2143 = sld [smem:[#allocation11 + $0x29]]
        %v2144 = vstv %s2143
        %v2145 = vmul.f32 %v2144, %v2135
        %v2146 = vmul.f32 %v2144, %v2136
        %v2147 = vadd.f32 %v2115, %v2145
        %v2148 = vadd.f32 %v2116, %v2146
        %s2149 = sld [smem:[#allocation11 + $0x2a]]
        %v2150 = vstv %s2149
        %v2151 = vmul.f32 %v2150, %v2135
        %v2152 = vmul.f32 %v2150, %v2136
        %v2153 = vadd.f32 %v2121, %v2151
        %v2154 = vadd.f32 %v2122, %v2152
        %s2155 = sld [smem:[#allocation11 + $0x2b]]
        %v2156 = vstv %s2155
        %v2157 = vmul.f32 %v2156, %v2135
        %v2158 = vmul.f32 %v2156, %v2136
        %v2159 = vadd.f32 %v2127, %v2157
        %v2160 = vadd.f32 %v2128, %v2158
        %2161 = vrot.lane.b32.xlu0 %v1807, 30
        %v2162 = vpop.permute.xlu0 %2161
        %2163 = vrot.lane.b32.xlu0 %v1808, 30
        %v2164 = vpop.permute.xlu0 %2163
        %v2165 = vsel %vm689, %v2162, %v2164
        %v2166 = vsel %vm689, %v2164, %v2162
        %v2167 = vmul.f32 %v2166, %v696
        %v2168 = vmul.f32 %v2165, %v700
        %s2169 = sld [smem:[#allocation11 + $0x2c]]
        %v2170 = vstv %s2169
        %v2171 = vmul.f32 %v2170, %v2167
        %v2172 = vmul.f32 %v2170, %v2168
        %v2173 = vadd.f32 %v2141, %v2171
        %v2174 = vadd.f32 %v2142, %v2172
        %s2175 = sld [smem:[#allocation11 + $0x2d]]
        %v2176 = vstv %s2175
        %v2177 = vmul.f32 %v2176, %v2167
        %v2178 = vmul.f32 %v2176, %v2168
        %v2179 = vadd.f32 %v2147, %v2177
        %v2180 = vadd.f32 %v2148, %v2178
        %s2181 = sld [smem:[#allocation11 + $0x2e]]
        %v2182 = vstv %s2181
        %v2183 = vmul.f32 %v2182, %v2167
        %v2184 = vmul.f32 %v2182, %v2168
        %v2185 = vadd.f32 %v2153, %v2183
        %v2186 = vadd.f32 %v2154, %v2184
        %s2187 = sld [smem:[#allocation11 + $0x2f]]
        %v2188 = vstv %s2187
        %v2189 = vmul.f32 %v2188, %v2167
        %v2190 = vmul.f32 %v2188, %v2168
        %v2191 = vadd.f32 %v2159, %v2189
        %v2192 = vadd.f32 %v2160, %v2190
        %2193 = vrot.lane.b32.xlu0 %v1789, 2
        %v2194 = vpop.permute.xlu0 %2193
        %2195 = vrot.lane.b32.xlu0 %v1790, 2
        %v2196 = vpop.permute.xlu0 %2195
        %v2197 = vsel %vm829, %v2194, %v2196
        %v2198 = vsel %vm829, %v2196, %v2194
        %v2199 = vmul.f32 %v2198, %v836
        %v2200 = vmul.f32 %v2197, %v840
        %s2201 = sld [smem:[#allocation11 + $0x30]]
        %v2202 = vstv %s2201
        %v2203 = vmul.f32 %v2202, %v2199
        %v2204 = vmul.f32 %v2202, %v2200
        %v2205 = vadd.f32 %v2173, %v2203
        %v2206 = vadd.f32 %v2174, %v2204
        %s2207 = sld [smem:[#allocation11 + $0x31]]
        %v2208 = vstv %s2207
        %v2209 = vmul.f32 %v2208, %v2199
        %v2210 = vmul.f32 %v2208, %v2200
        %v2211 = vadd.f32 %v2179, %v2209
        %v2212 = vadd.f32 %v2180, %v2210
        %s2213 = sld [smem:[#allocation11 + $0x32]]
        %v2214 = vstv %s2213
        %v2215 = vmul.f32 %v2214, %v2199
        %v2216 = vmul.f32 %v2214, %v2200
        %v2217 = vadd.f32 %v2185, %v2215
        %v2218 = vadd.f32 %v2186, %v2216
        %s2219 = sld [smem:[#allocation11 + $0x33]]
        %v2220 = vstv %s2219
        %v2221 = vmul.f32 %v2220, %v2199
        %v2222 = vmul.f32 %v2220, %v2200
        %v2223 = vadd.f32 %v2191, %v2221
        %v2224 = vadd.f32 %v2192, %v2222
        %2225 = vrot.lane.b32.xlu0 %v1795, 2
        %v2226 = vpop.permute.xlu0 %2225
        %2227 = vrot.lane.b32.xlu0 %v1796, 2
        %v2228 = vpop.permute.xlu0 %2227
        %v2229 = vsel %vm829, %v2226, %v2228
        %v2230 = vsel %vm829, %v2228, %v2226
        %v2231 = vmul.f32 %v2230, %v836
        %v2232 = vmul.f32 %v2229, %v840
        %s2233 = sld [smem:[#allocation11 + $0x34]]
        %v2234 = vstv %s2233
        %v2235 = vmul.f32 %v2234, %v2231
        %v2236 = vmul.f32 %v2234, %v2232
        %v2237 = vadd.f32 %v2205, %v2235
        %v2238 = vadd.f32 %v2206, %v2236
        %s2239 = sld [smem:[#allocation11 + $0x35]]
        %v2240 = vstv %s2239
        %v2241 = vmul.f32 %v2240, %v2231
        %v2242 = vmul.f32 %v2240, %v2232
        %v2243 = vadd.f32 %v2211, %v2241
        %v2244 = vadd.f32 %v2212, %v2242
        %s2245 = sld [smem:[#allocation11 + $0x36]]
        %v2246 = vstv %s2245
        %v2247 = vmul.f32 %v2246, %v2231
        %v2248 = vmul.f32 %v2246, %v2232
        %v2249 = vadd.f32 %v2217, %v2247
        %v2250 = vadd.f32 %v2218, %v2248
        %s2251 = sld [smem:[#allocation11 + $0x37]]
        %v2252 = vstv %s2251
        %v2253 = vmul.f32 %v2252, %v2231
        %v2254 = vmul.f32 %v2252, %v2232
        %v2255 = vadd.f32 %v2223, %v2253
        %v2256 = vadd.f32 %v2224, %v2254
        %2257 = vrot.lane.b32.xlu0 %v1801, 2
        %v2258 = vpop.permute.xlu0 %2257
        %2259 = vrot.lane.b32.xlu0 %v1802, 2
        %v2260 = vpop.permute.xlu0 %2259
        %v2261 = vsel %vm829, %v2258, %v2260
        %v2262 = vsel %vm829, %v2260, %v2258
        %v2263 = vmul.f32 %v2262, %v836
        %v2264 = vmul.f32 %v2261, %v840
        %s2265 = sld [smem:[#allocation11 + $0x38]]
        %v2266 = vstv %s2265
        %v2267 = vmul.f32 %v2266, %v2263
        %v2268 = vmul.f32 %v2266, %v2264
        %v2269 = vadd.f32 %v2237, %v2267
        %v2270 = vadd.f32 %v2238, %v2268
        %s2271 = sld [smem:[#allocation11 + $0x39]]
        %v2272 = vstv %s2271
        %v2273 = vmul.f32 %v2272, %v2263
        %v2274 = vmul.f32 %v2272, %v2264
        %v2275 = vadd.f32 %v2243, %v2273
        %v2276 = vadd.f32 %v2244, %v2274
        %s2277 = sld [smem:[#allocation11 + $0x3a]]
        %v2278 = vstv %s2277
        %v2279 = vmul.f32 %v2278, %v2263
        %v2280 = vmul.f32 %v2278, %v2264
        %v2281 = vadd.f32 %v2249, %v2279
        %v2282 = vadd.f32 %v2250, %v2280
        %s2283 = sld [smem:[#allocation11 + $0x3b]]
        %v2284 = vstv %s2283
        %v2285 = vmul.f32 %v2284, %v2263
        %v2286 = vmul.f32 %v2284, %v2264
        %v2287 = vadd.f32 %v2255, %v2285
        %v2288 = vadd.f32 %v2256, %v2286
        %2289 = vrot.lane.b32.xlu0 %v1807, 2
        %v2290 = vpop.permute.xlu0 %2289
        %2291 = vrot.lane.b32.xlu0 %v1808, 2
        %v2292 = vpop.permute.xlu0 %2291
        %v2293 = vsel %vm829, %v2290, %v2292
        %v2294 = vsel %vm829, %v2292, %v2290
        %v2295 = vmul.f32 %v2294, %v836
        %v2296 = vmul.f32 %v2293, %v840
        %s2297 = sld [smem:[#allocation11 + $0x3c]]
        %v2298 = vstv %s2297
        %v2299 = vmul.f32 %v2298, %v2295
        %v2300 = vmul.f32 %v2298, %v2296
        %v2301 = vadd.f32 %v2269, %v2299
        %v2302 = vadd.f32 %v2270, %v2300
        %s2303 = sld [smem:[#allocation11 + $0x3d]]
        %v2304 = vstv %s2303
        %v2305 = vmul.f32 %v2304, %v2295
        %v2306 = vmul.f32 %v2304, %v2296
        %v2307 = vadd.f32 %v2275, %v2305
        %v2308 = vadd.f32 %v2276, %v2306
        %s2309 = sld [smem:[#allocation11 + $0x3e]]
        %v2310 = vstv %s2309
        %v2311 = vmul.f32 %v2310, %v2295
        %v2312 = vmul.f32 %v2310, %v2296
        %v2313 = vadd.f32 %v2281, %v2311
        %v2314 = vadd.f32 %v2282, %v2312
        %s2315 = sld [smem:[#allocation11 + $0x3f]]
        %v2316 = vstv %s2315
        %v2317 = vmul.f32 %v2316, %v2295
        %v2318 = vmul.f32 %v2316, %v2296
        %v2319 = vadd.f32 %v2287, %v2317
        %v2320 = vadd.f32 %v2288, %v2318
        %v2322 = vlaneseq
        %v2323 = vshrl.u32 %v2322, 7
        %v2324 = vsub.s32 0, %v2323
        %v2325 = vrot.slane %v343, %v2324
        %v2326 = vlaneseq
        %v2327 = vshrl.u32 %v2326, 7
        %v2328 = vsub.s32 1, %v2327
        %v2329 = vrot.slane %v343, %v2328
        %v2332 = vmul.f32 %v1789, %v2325
        %v2333 = vmul.f32 %v1790, %v2329
        %s2334 = sld [smem:[#allocation11 + $0x40]]
        %v2335 = vstv %s2334
        %v2336 = vmul.f32 %v2335, %v2332
        %v2337 = vmul.f32 %v2335, %v2333
        %v2338 = vadd.f32 %v2301, %v2336
        %v2339 = vadd.f32 %v2302, %v2337
        %s2340 = sld [smem:[#allocation11 + $0x41]]
        %v2341 = vstv %s2340
        %v2342 = vmul.f32 %v2341, %v2332
        %v2343 = vmul.f32 %v2341, %v2333
        %v2344 = vadd.f32 %v2307, %v2342
        %v2345 = vadd.f32 %v2308, %v2343
        %s2346 = sld [smem:[#allocation11 + $0x42]]
        %v2347 = vstv %s2346
        %v2348 = vmul.f32 %v2347, %v2332
        %v2349 = vmul.f32 %v2347, %v2333
        %v2350 = vadd.f32 %v2313, %v2348
        %v2351 = vadd.f32 %v2314, %v2349
        %s2352 = sld [smem:[#allocation11 + $0x43]]
        %v2353 = vstv %s2352
        %v2354 = vmul.f32 %v2353, %v2332
        %v2355 = vmul.f32 %v2353, %v2333
        %v2356 = vadd.f32 %v2319, %v2354
        %v2357 = vadd.f32 %v2320, %v2355
        %v2358 = vmul.f32 %v1795, %v2325
        %v2359 = vmul.f32 %v1796, %v2329
        %s2360 = sld [smem:[#allocation11 + $0x44]]
        %v2361 = vstv %s2360
        %v2362 = vmul.f32 %v2361, %v2358
        %v2363 = vmul.f32 %v2361, %v2359
        %v2364 = vadd.f32 %v2338, %v2362
        %v2365 = vadd.f32 %v2339, %v2363
        %s2366 = sld [smem:[#allocation11 + $0x45]]
        %v2367 = vstv %s2366
        %v2368 = vmul.f32 %v2367, %v2358
        %v2369 = vmul.f32 %v2367, %v2359
        %v2370 = vadd.f32 %v2344, %v2368
        %v2371 = vadd.f32 %v2345, %v2369
        %s2372 = sld [smem:[#allocation11 + $0x46]]
        %v2373 = vstv %s2372
        %v2374 = vmul.f32 %v2373, %v2358
        %v2375 = vmul.f32 %v2373, %v2359
        %v2376 = vadd.f32 %v2350, %v2374
        %v2377 = vadd.f32 %v2351, %v2375
        %s2378 = sld [smem:[#allocation11 + $0x47]]
        %v2379 = vstv %s2378
        %v2380 = vmul.f32 %v2379, %v2358
        %v2381 = vmul.f32 %v2379, %v2359
        %v2382 = vadd.f32 %v2356, %v2380
        %v2383 = vadd.f32 %v2357, %v2381
        %v2384 = vmul.f32 %v1801, %v2325
        %v2385 = vmul.f32 %v1802, %v2329
        %s2386 = sld [smem:[#allocation11 + $0x48]]
        %v2387 = vstv %s2386
        %v2388 = vmul.f32 %v2387, %v2384
        %v2389 = vmul.f32 %v2387, %v2385
        %v2390 = vadd.f32 %v2364, %v2388
        %v2391 = vadd.f32 %v2365, %v2389
        %s2392 = sld [smem:[#allocation11 + $0x49]]
        %v2393 = vstv %s2392
        %v2394 = vmul.f32 %v2393, %v2384
        %v2395 = vmul.f32 %v2393, %v2385
        %v2396 = vadd.f32 %v2370, %v2394
        %v2397 = vadd.f32 %v2371, %v2395
        %s2398 = sld [smem:[#allocation11 + $0x4a]]
        %v2399 = vstv %s2398
        %v2400 = vmul.f32 %v2399, %v2384
        %v2401 = vmul.f32 %v2399, %v2385
        %v2402 = vadd.f32 %v2376, %v2400
        %v2403 = vadd.f32 %v2377, %v2401
        %s2404 = sld [smem:[#allocation11 + $0x4b]]
        %v2405 = vstv %s2404
        %v2406 = vmul.f32 %v2405, %v2384
        %v2407 = vmul.f32 %v2405, %v2385
        %v2408 = vadd.f32 %v2382, %v2406
        %v2409 = vadd.f32 %v2383, %v2407
        %v2410 = vmul.f32 %v1807, %v2325
        %v2411 = vmul.f32 %v1808, %v2329
        %s2412 = sld [smem:[#allocation11 + $0x4c]]
        %v2413 = vstv %s2412
        %v2414 = vmul.f32 %v2413, %v2410
        %v2415 = vmul.f32 %v2413, %v2411
        %v2416 = vadd.f32 %v2390, %v2414
        %v2417 = vadd.f32 %v2391, %v2415
        %s2418 = sld [smem:[#allocation11 + $0x4d]]
        %v2419 = vstv %s2418
        %v2420 = vmul.f32 %v2419, %v2410
        %v2421 = vmul.f32 %v2419, %v2411
        %v2422 = vadd.f32 %v2396, %v2420
        %v2423 = vadd.f32 %v2397, %v2421
        %s2424 = sld [smem:[#allocation11 + $0x4e]]
        %v2425 = vstv %s2424
        %v2426 = vmul.f32 %v2425, %v2410
        %v2427 = vmul.f32 %v2425, %v2411
        %v2428 = vadd.f32 %v2402, %v2426
        %v2429 = vadd.f32 %v2403, %v2427
        %s2430 = sld [smem:[#allocation11 + $0x4f]]
        %v2431 = vstv %s2430
        %v2432 = vmul.f32 %v2431, %v2410
        %v2433 = vmul.f32 %v2431, %v2411
        %v2434 = vadd.f32 %v2408, %v2432
        %v2435 = vadd.f32 %v2409, %v2433
        %2436 = vrot.lane.b32.xlu0 %v1789, 126
        %v2437 = vpop.permute.xlu0 %2436
        %2438 = vrot.lane.b32.xlu0 %v1790, 126
        %v2439 = vpop.permute.xlu0 %2438
        %v2440 = vsel %vm1229, %v2437, %v2439
        %v2441 = vsel %vm1229, %v2439, %v2437
        %v2442 = vmul.f32 %v2440, %v1236
        %v2443 = vmul.f32 %v2441, %v1240
        %s2444 = sld [smem:[#allocation11 + $0x50]]
        %v2445 = vstv %s2444
        %v2446 = vmul.f32 %v2445, %v2442
        %v2447 = vmul.f32 %v2445, %v2443
        %v2448 = vadd.f32 %v2416, %v2446
        %v2449 = vadd.f32 %v2417, %v2447
        %s2450 = sld [smem:[#allocation11 + $0x51]]
        %v2451 = vstv %s2450
        %v2452 = vmul.f32 %v2451, %v2442
        %v2453 = vmul.f32 %v2451, %v2443
        %v2454 = vadd.f32 %v2422, %v2452
        %v2455 = vadd.f32 %v2423, %v2453
        %s2456 = sld [smem:[#allocation11 + $0x52]]
        %v2457 = vstv %s2456
        %v2458 = vmul.f32 %v2457, %v2442
        %v2459 = vmul.f32 %v2457, %v2443
        %v2460 = vadd.f32 %v2428, %v2458
        %v2461 = vadd.f32 %v2429, %v2459
        %s2462 = sld [smem:[#allocation11 + $0x53]]
        %v2463 = vstv %s2462
        %v2464 = vmul.f32 %v2463, %v2442
        %v2465 = vmul.f32 %v2463, %v2443
        %v2466 = vadd.f32 %v2434, %v2464
        %v2467 = vadd.f32 %v2435, %v2465
        %2468 = vrot.lane.b32.xlu0 %v1795, 126
        %v2469 = vpop.permute.xlu0 %2468
        %2470 = vrot.lane.b32.xlu0 %v1796, 126
        %v2471 = vpop.permute.xlu0 %2470
        %v2472 = vsel %vm1229, %v2469, %v2471
        %v2473 = vsel %vm1229, %v2471, %v2469
        %v2474 = vmul.f32 %v2472, %v1236
        %v2475 = vmul.f32 %v2473, %v1240
        %s2476 = sld [smem:[#allocation11 + $0x54]]
        %v2477 = vstv %s2476
        %v2478 = vmul.f32 %v2477, %v2474
        %v2479 = vmul.f32 %v2477, %v2475
        %v2480 = vadd.f32 %v2448, %v2478
        %v2481 = vadd.f32 %v2449, %v2479
        %s2482 = sld [smem:[#allocation11 + $0x55]]
        %v2483 = vstv %s2482
        %v2484 = vmul.f32 %v2483, %v2474
        %v2485 = vmul.f32 %v2483, %v2475
        %v2486 = vadd.f32 %v2454, %v2484
        %v2487 = vadd.f32 %v2455, %v2485
        %s2488 = sld [smem:[#allocation11 + $0x56]]
        %v2489 = vstv %s2488
        %v2490 = vmul.f32 %v2489, %v2474
        %v2491 = vmul.f32 %v2489, %v2475
        %v2492 = vadd.f32 %v2460, %v2490
        %v2493 = vadd.f32 %v2461, %v2491
        %s2494 = sld [smem:[#allocation11 + $0x57]]
        %v2495 = vstv %s2494
        %v2496 = vmul.f32 %v2495, %v2474
        %v2497 = vmul.f32 %v2495, %v2475
        %v2498 = vadd.f32 %v2466, %v2496
        %v2499 = vadd.f32 %v2467, %v2497
        %2500 = vrot.lane.b32.xlu0 %v1801, 126
        %v2501 = vpop.permute.xlu0 %2500
        %2502 = vrot.lane.b32.xlu0 %v1802, 126
        %v2503 = vpop.permute.xlu0 %2502
        %v2504 = vsel %vm1229, %v2501, %v2503
        %v2505 = vsel %vm1229, %v2503, %v2501
        %v2506 = vmul.f32 %v2504, %v1236
        %v2507 = vmul.f32 %v2505, %v1240
        %s2508 = sld [smem:[#allocation11 + $0x58]]
        %v2509 = vstv %s2508
        %v2510 = vmul.f32 %v2509, %v2506
        %v2511 = vmul.f32 %v2509, %v2507
        %v2512 = vadd.f32 %v2480, %v2510
        %v2513 = vadd.f32 %v2481, %v2511
        %s2514 = sld [smem:[#allocation11 + $0x59]]
        %v2515 = vstv %s2514
        %v2516 = vmul.f32 %v2515, %v2506
        %v2517 = vmul.f32 %v2515, %v2507
        %v2518 = vadd.f32 %v2486, %v2516
        %v2519 = vadd.f32 %v2487, %v2517
        %s2520 = sld [smem:[#allocation11 + $0x5a]]
        %v2521 = vstv %s2520
        %v2522 = vmul.f32 %v2521, %v2506
        %v2523 = vmul.f32 %v2521, %v2507
        %v2524 = vadd.f32 %v2492, %v2522
        %v2525 = vadd.f32 %v2493, %v2523
        %s2526 = sld [smem:[#allocation11 + $0x5b]]
        %v2527 = vstv %s2526
        %v2528 = vmul.f32 %v2527, %v2506
        %v2529 = vmul.f32 %v2527, %v2507
        %v2530 = vadd.f32 %v2498, %v2528
        %v2531 = vadd.f32 %v2499, %v2529
        %2532 = vrot.lane.b32.xlu0 %v1807, 126
        %v2533 = vpop.permute.xlu0 %2532
        %2534 = vrot.lane.b32.xlu0 %v1808, 126
        %v2535 = vpop.permute.xlu0 %2534
        %v2536 = vsel %vm1229, %v2533, %v2535
        %v2537 = vsel %vm1229, %v2535, %v2533
        %v2538 = vmul.f32 %v2536, %v1236
        %v2539 = vmul.f32 %v2537, %v1240
        %s2540 = sld [smem:[#allocation11 + $0x5c]]
        %v2541 = vstv %s2540
        %v2542 = vmul.f32 %v2541, %v2538
        %v2543 = vmul.f32 %v2541, %v2539
        %v2544 = vadd.f32 %v2512, %v2542
        %v2545 = vadd.f32 %v2513, %v2543
        %s2546 = sld [smem:[#allocation11 + $0x5d]]
        %v2547 = vstv %s2546
        %v2548 = vmul.f32 %v2547, %v2538
        %v2549 = vmul.f32 %v2547, %v2539
        %v2550 = vadd.f32 %v2518, %v2548
        %v2551 = vadd.f32 %v2519, %v2549
        %s2552 = sld [smem:[#allocation11 + $0x5e]]
        %v2553 = vstv %s2552
        %v2554 = vmul.f32 %v2553, %v2538
        %v2555 = vmul.f32 %v2553, %v2539
        %v2556 = vadd.f32 %v2524, %v2554
        %v2557 = vadd.f32 %v2525, %v2555
        %s2558 = sld [smem:[#allocation11 + $0x5f]]
        %v2559 = vstv %s2558
        %v2560 = vmul.f32 %v2559, %v2538
        %v2561 = vmul.f32 %v2559, %v2539
        %v2562 = vadd.f32 %v2530, %v2560
        %v2563 = vadd.f32 %v2531, %v2561
        %2564 = vrot.lane.b32.xlu0 %v1789, 98
        %v2565 = vpop.permute.xlu0 %2564
        %2566 = vrot.lane.b32.xlu0 %v1790, 98
        %v2567 = vpop.permute.xlu0 %2566
        %v2568 = vsel %vm1369, %v2565, %v2567
        %v2569 = vsel %vm1369, %v2567, %v2565
        %v2570 = vmul.f32 %v2568, %v1376
        %v2571 = vmul.f32 %v2569, %v1380
        %s2572 = sld [smem:[#allocation11 + $0x60]]
        %v2573 = vstv %s2572
        %v2574 = vmul.f32 %v2573, %v2570
        %v2575 = vmul.f32 %v2573, %v2571
        %v2576 = vadd.f32 %v2544, %v2574
        %v2577 = vadd.f32 %v2545, %v2575
        %s2578 = sld [smem:[#allocation11 + $0x61]]
        %v2579 = vstv %s2578
        %v2580 = vmul.f32 %v2579, %v2570
        %v2581 = vmul.f32 %v2579, %v2571
        %v2582 = vadd.f32 %v2550, %v2580
        %v2583 = vadd.f32 %v2551, %v2581
        %s2584 = sld [smem:[#allocation11 + $0x62]]
        %v2585 = vstv %s2584
        %v2586 = vmul.f32 %v2585, %v2570
        %v2587 = vmul.f32 %v2585, %v2571
        %v2588 = vadd.f32 %v2556, %v2586
        %v2589 = vadd.f32 %v2557, %v2587
        %s2590 = sld [smem:[#allocation11 + $0x63]]
        %v2591 = vstv %s2590
        %v2592 = vmul.f32 %v2591, %v2570
        %v2593 = vmul.f32 %v2591, %v2571
        %v2594 = vadd.f32 %v2562, %v2592
        %v2595 = vadd.f32 %v2563, %v2593
        %2596 = vrot.lane.b32.xlu0 %v1795, 98
        %v2597 = vpop.permute.xlu0 %2596
        %2598 = vrot.lane.b32.xlu0 %v1796, 98
        %v2599 = vpop.permute.xlu0 %2598
        %v2600 = vsel %vm1369, %v2597, %v2599
        %v2601 = vsel %vm1369, %v2599, %v2597
        %v2602 = vmul.f32 %v2600, %v1376
        %v2603 = vmul.f32 %v2601, %v1380
        %s2604 = sld [smem:[#allocation11 + $0x64]]
        %v2605 = vstv %s2604
        %v2606 = vmul.f32 %v2605, %v2602
        %v2607 = vmul.f32 %v2605, %v2603
        %v2608 = vadd.f32 %v2576, %v2606
        %v2609 = vadd.f32 %v2577, %v2607
        %s2610 = sld [smem:[#allocation11 + $0x65]]
        %v2611 = vstv %s2610
        %v2612 = vmul.f32 %v2611, %v2602
        %v2613 = vmul.f32 %v2611, %v2603
        %v2614 = vadd.f32 %v2582, %v2612
        %v2615 = vadd.f32 %v2583, %v2613
        %s2616 = sld [smem:[#allocation11 + $0x66]]
        %v2617 = vstv %s2616
        %v2618 = vmul.f32 %v2617, %v2602
        %v2619 = vmul.f32 %v2617, %v2603
        %v2620 = vadd.f32 %v2588, %v2618
        %v2621 = vadd.f32 %v2589, %v2619
        %s2622 = sld [smem:[#allocation11 + $0x67]]
        %v2623 = vstv %s2622
        %v2624 = vmul.f32 %v2623, %v2602
        %v2625 = vmul.f32 %v2623, %v2603
        %v2626 = vadd.f32 %v2594, %v2624
        %v2627 = vadd.f32 %v2595, %v2625
        %2628 = vrot.lane.b32.xlu0 %v1801, 98
        %v2629 = vpop.permute.xlu0 %2628
        %2630 = vrot.lane.b32.xlu0 %v1802, 98
        %v2631 = vpop.permute.xlu0 %2630
        %v2632 = vsel %vm1369, %v2629, %v2631
        %v2633 = vsel %vm1369, %v2631, %v2629
        %v2634 = vmul.f32 %v2632, %v1376
        %v2635 = vmul.f32 %v2633, %v1380
        %s2636 = sld [smem:[#allocation11 + $0x68]]
        %v2637 = vstv %s2636
        %v2638 = vmul.f32 %v2637, %v2634
        %v2639 = vmul.f32 %v2637, %v2635
        %v2640 = vadd.f32 %v2608, %v2638
        %v2641 = vadd.f32 %v2609, %v2639
        %s2642 = sld [smem:[#allocation11 + $0x69]]
        %v2643 = vstv %s2642
        %v2644 = vmul.f32 %v2643, %v2634
        %v2645 = vmul.f32 %v2643, %v2635
        %v2646 = vadd.f32 %v2614, %v2644
        %v2647 = vadd.f32 %v2615, %v2645
        %s2648 = sld [smem:[#allocation11 + $0x6a]]
        %v2649 = vstv %s2648
        %v2650 = vmul.f32 %v2649, %v2634
        %v2651 = vmul.f32 %v2649, %v2635
        %v2652 = vadd.f32 %v2620, %v2650
        %v2653 = vadd.f32 %v2621, %v2651
        %s2654 = sld [smem:[#allocation11 + $0x6b]]
        %v2655 = vstv %s2654
        %v2656 = vmul.f32 %v2655, %v2634
        %v2657 = vmul.f32 %v2655, %v2635
        %v2658 = vadd.f32 %v2626, %v2656
        %v2659 = vadd.f32 %v2627, %v2657
        %2660 = vrot.lane.b32.xlu0 %v1807, 98
        %v2661 = vpop.permute.xlu0 %2660
        %2662 = vrot.lane.b32.xlu0 %v1808, 98
        %v2663 = vpop.permute.xlu0 %2662
        %v2664 = vsel %vm1369, %v2661, %v2663
        %v2665 = vsel %vm1369, %v2663, %v2661
        %v2666 = vmul.f32 %v2664, %v1376
        %v2667 = vmul.f32 %v2665, %v1380
        %s2668 = sld [smem:[#allocation11 + $0x6c]]
        %v2669 = vstv %s2668
        %v2670 = vmul.f32 %v2669, %v2666
        %v2671 = vmul.f32 %v2669, %v2667
        %v2672 = vadd.f32 %v2640, %v2670
        %v2673 = vadd.f32 %v2641, %v2671
        %s2674 = sld [smem:[#allocation11 + $0x6d]]
        %v2675 = vstv %s2674
        %v2676 = vmul.f32 %v2675, %v2666
        %v2677 = vmul.f32 %v2675, %v2667
        %v2678 = vadd.f32 %v2646, %v2676
        %v2679 = vadd.f32 %v2647, %v2677
        %s2680 = sld [smem:[#allocation11 + $0x6e]]
        %v2681 = vstv %s2680
        %v2682 = vmul.f32 %v2681, %v2666
        %v2683 = vmul.f32 %v2681, %v2667
        %v2684 = vadd.f32 %v2652, %v2682
        %v2685 = vadd.f32 %v2653, %v2683
        %s2686 = sld [smem:[#allocation11 + $0x6f]]
        %v2687 = vstv %s2686
        %v2688 = vmul.f32 %v2687, %v2666
        %v2689 = vmul.f32 %v2687, %v2667
        %v2690 = vadd.f32 %v2658, %v2688
        %v2691 = vadd.f32 %v2659, %v2689
        %2692 = vrot.lane.b32.xlu0 %v1789, 96
        %v2693 = vpop.permute.xlu0 %2692
        %2694 = vrot.lane.b32.xlu0 %v1790, 96
        %v2695 = vpop.permute.xlu0 %2694
        %v2696 = vsel %vm1509, %v2693, %v2695
        %v2697 = vsel %vm1509, %v2695, %v2693
        %v2698 = vmul.f32 %v2696, %v1516
        %v2699 = vmul.f32 %v2697, %v1520
        %s2700 = sld [smem:[#allocation11 + $0x70]]
        %v2701 = vstv %s2700
        %v2702 = vmul.f32 %v2701, %v2698
        %v2703 = vmul.f32 %v2701, %v2699
        %v2704 = vadd.f32 %v2672, %v2702
        %v2705 = vadd.f32 %v2673, %v2703
        %s2706 = sld [smem:[#allocation11 + $0x71]]
        %v2707 = vstv %s2706
        %v2708 = vmul.f32 %v2707, %v2698
        %v2709 = vmul.f32 %v2707, %v2699
        %v2710 = vadd.f32 %v2678, %v2708
        %v2711 = vadd.f32 %v2679, %v2709
        %s2712 = sld [smem:[#allocation11 + $0x72]]
        %v2713 = vstv %s2712
        %v2714 = vmul.f32 %v2713, %v2698
        %v2715 = vmul.f32 %v2713, %v2699
        %v2716 = vadd.f32 %v2684, %v2714
        %v2717 = vadd.f32 %v2685, %v2715
        %s2718 = sld [smem:[#allocation11 + $0x73]]
        %v2719 = vstv %s2718
        %v2720 = vmul.f32 %v2719, %v2698
        %v2721 = vmul.f32 %v2719, %v2699
        %v2722 = vadd.f32 %v2690, %v2720
        %v2723 = vadd.f32 %v2691, %v2721
        %2724 = vrot.lane.b32.xlu0 %v1795, 96
        %v2725 = vpop.permute.xlu0 %2724
        %2726 = vrot.lane.b32.xlu0 %v1796, 96
        %v2727 = vpop.permute.xlu0 %2726
        %v2728 = vsel %vm1509, %v2725, %v2727
        %v2729 = vsel %vm1509, %v2727, %v2725
        %v2730 = vmul.f32 %v2728, %v1516
        %v2731 = vmul.f32 %v2729, %v1520
        %s2732 = sld [smem:[#allocation11 + $0x74]]
        %v2733 = vstv %s2732
        %v2734 = vmul.f32 %v2733, %v2730
        %v2735 = vmul.f32 %v2733, %v2731
        %v2736 = vadd.f32 %v2704, %v2734
        %v2737 = vadd.f32 %v2705, %v2735
        %s2738 = sld [smem:[#allocation11 + $0x75]]
        %v2739 = vstv %s2738
        %v2740 = vmul.f32 %v2739, %v2730
        %v2741 = vmul.f32 %v2739, %v2731
        %v2742 = vadd.f32 %v2710, %v2740
        %v2743 = vadd.f32 %v2711, %v2741
        %s2744 = sld [smem:[#allocation11 + $0x76]]
        %v2745 = vstv %s2744
        %v2746 = vmul.f32 %v2745, %v2730
        %v2747 = vmul.f32 %v2745, %v2731
        %v2748 = vadd.f32 %v2716, %v2746
        %v2749 = vadd.f32 %v2717, %v2747
        %s2750 = sld [smem:[#allocation11 + $0x77]]
        %v2751 = vstv %s2750
        %v2752 = vmul.f32 %v2751, %v2730
        %v2753 = vmul.f32 %v2751, %v2731
        %v2754 = vadd.f32 %v2722, %v2752
        %v2755 = vadd.f32 %v2723, %v2753
        %2756 = vrot.lane.b32.xlu0 %v1801, 96
        %v2757 = vpop.permute.xlu0 %2756
        %2758 = vrot.lane.b32.xlu0 %v1802, 96
        %v2759 = vpop.permute.xlu0 %2758
        %v2760 = vsel %vm1509, %v2757, %v2759
        %v2761 = vsel %vm1509, %v2759, %v2757
        %v2762 = vmul.f32 %v2760, %v1516
        %v2763 = vmul.f32 %v2761, %v1520
        %s2764 = sld [smem:[#allocation11 + $0x78]]
        %v2765 = vstv %s2764
        %v2766 = vmul.f32 %v2765, %v2762
        %v2767 = vmul.f32 %v2765, %v2763
        %v2768 = vadd.f32 %v2736, %v2766
        %v2769 = vadd.f32 %v2737, %v2767
        %s2770 = sld [smem:[#allocation11 + $0x79]]
        %v2771 = vstv %s2770
        %v2772 = vmul.f32 %v2771, %v2762
        %v2773 = vmul.f32 %v2771, %v2763
        %v2774 = vadd.f32 %v2742, %v2772
        %v2775 = vadd.f32 %v2743, %v2773
        %s2776 = sld [smem:[#allocation11 + $0x7a]]
        %v2777 = vstv %s2776
        %v2778 = vmul.f32 %v2777, %v2762
        %v2779 = vmul.f32 %v2777, %v2763
        %v2780 = vadd.f32 %v2748, %v2778
        %v2781 = vadd.f32 %v2749, %v2779
        %s2782 = sld [smem:[#allocation11 + $0x7b]]
        %v2783 = vstv %s2782
        %v2784 = vmul.f32 %v2783, %v2762
        %v2785 = vmul.f32 %v2783, %v2763
        %v2786 = vadd.f32 %v2754, %v2784
        %v2787 = vadd.f32 %v2755, %v2785
        %2788 = vrot.lane.b32.xlu0 %v1807, 96
        %v2789 = vpop.permute.xlu0 %2788
        %2790 = vrot.lane.b32.xlu0 %v1808, 96
        %v2791 = vpop.permute.xlu0 %2790
        %v2792 = vsel %vm1509, %v2789, %v2791
        %v2793 = vsel %vm1509, %v2791, %v2789
        %v2794 = vmul.f32 %v2792, %v1516
        %v2795 = vmul.f32 %v2793, %v1520
        %s2796 = sld [smem:[#allocation11 + $0x7c]]
        %v2797 = vstv %s2796
        %v2798 = vmul.f32 %v2797, %v2794
        %v2799 = vmul.f32 %v2797, %v2795
        %v2800 = vadd.f32 %v2768, %v2798
        %v2801 = vadd.f32 %v2769, %v2799
        %s2802 = sld [smem:[#allocation11 + $0x7d]]
        %v2803 = vstv %s2802
        %v2804 = vmul.f32 %v2803, %v2794
        %v2805 = vmul.f32 %v2803, %v2795
        %v2806 = vadd.f32 %v2774, %v2804
        %v2807 = vadd.f32 %v2775, %v2805
        %s2808 = sld [smem:[#allocation11 + $0x7e]]
        %v2809 = vstv %s2808
        %v2810 = vmul.f32 %v2809, %v2794
        %v2811 = vmul.f32 %v2809, %v2795
        %v2812 = vadd.f32 %v2780, %v2810
        %v2813 = vadd.f32 %v2781, %v2811
        %s2814 = sld [smem:[#allocation11 + $0x7f]]
        %v2815 = vstv %s2814
        %v2816 = vmul.f32 %v2815, %v2794
        %v2817 = vmul.f32 %v2815, %v2795
        %v2818 = vadd.f32 %v2786, %v2816
        %v2819 = vadd.f32 %v2787, %v2817
        %2820 = vrot.lane.b32.xlu0 %v1789, 94
        %v2821 = vpop.permute.xlu0 %2820
        %2822 = vrot.lane.b32.xlu0 %v1790, 94
        %v2823 = vpop.permute.xlu0 %2822
        %v2824 = vsel %vm1649, %v2821, %v2823
        %v2825 = vsel %vm1649, %v2823, %v2821
        %v2826 = vmul.f32 %v2824, %v1656
        %v2827 = vmul.f32 %v2825, %v1660
        %s2828 = sld [smem:[#allocation11 + $0x80]]
        %v2829 = vstv %s2828
        %v2830 = vmul.f32 %v2829, %v2826
        %v2831 = vmul.f32 %v2829, %v2827
        %v2832 = vadd.f32 %v2800, %v2830
        %v2833 = vadd.f32 %v2801, %v2831
        %s2834 = sld [smem:[#allocation11 + $0x81]]
        %v2835 = vstv %s2834
        %v2836 = vmul.f32 %v2835, %v2826
        %v2837 = vmul.f32 %v2835, %v2827
        %v2838 = vadd.f32 %v2806, %v2836
        %v2839 = vadd.f32 %v2807, %v2837
        %s2840 = sld [smem:[#allocation11 + $0x82]]
        %v2841 = vstv %s2840
        %v2842 = vmul.f32 %v2841, %v2826
        %v2843 = vmul.f32 %v2841, %v2827
        %v2844 = vadd.f32 %v2812, %v2842
        %v2845 = vadd.f32 %v2813, %v2843
        %s2846 = sld [smem:[#allocation11 + $0x83]]
        %v2847 = vstv %s2846
        %v2848 = vmul.f32 %v2847, %v2826
        %v2849 = vmul.f32 %v2847, %v2827
        %v2850 = vadd.f32 %v2818, %v2848
        %v2851 = vadd.f32 %v2819, %v2849
        %2852 = vrot.lane.b32.xlu0 %v1795, 94
        %v2853 = vpop.permute.xlu0 %2852
        %2854 = vrot.lane.b32.xlu0 %v1796, 94
        %v2855 = vpop.permute.xlu0 %2854
        %v2856 = vsel %vm1649, %v2853, %v2855
        %v2857 = vsel %vm1649, %v2855, %v2853
        %v2858 = vmul.f32 %v2856, %v1656
        %v2859 = vmul.f32 %v2857, %v1660
        %s2860 = sld [smem:[#allocation11 + $0x84]]
        %v2861 = vstv %s2860
        %v2862 = vmul.f32 %v2861, %v2858
        %v2863 = vmul.f32 %v2861, %v2859
        %v2864 = vadd.f32 %v2832, %v2862
        %v2865 = vadd.f32 %v2833, %v2863
        %s2866 = sld [smem:[#allocation11 + $0x85]]
        %v2867 = vstv %s2866
        %v2868 = vmul.f32 %v2867, %v2858
        %v2869 = vmul.f32 %v2867, %v2859
        %v2870 = vadd.f32 %v2838, %v2868
        %v2871 = vadd.f32 %v2839, %v2869
        %s2872 = sld [smem:[#allocation11 + $0x86]]
        %v2873 = vstv %s2872
        %v2874 = vmul.f32 %v2873, %v2858
        %v2875 = vmul.f32 %v2873, %v2859
        %v2876 = vadd.f32 %v2844, %v2874
        %v2877 = vadd.f32 %v2845, %v2875
        %s2878 = sld [smem:[#allocation11 + $0x87]]
        %v2879 = vstv %s2878
        %v2880 = vmul.f32 %v2879, %v2858
        %v2881 = vmul.f32 %v2879, %v2859
        %v2882 = vadd.f32 %v2850, %v2880
        %v2883 = vadd.f32 %v2851, %v2881
        %2884 = vrot.lane.b32.xlu0 %v1801, 94
        %v2885 = vpop.permute.xlu0 %2884
        %2886 = vrot.lane.b32.xlu0 %v1802, 94
        %v2887 = vpop.permute.xlu0 %2886
        %v2888 = vsel %vm1649, %v2885, %v2887
        %v2889 = vsel %vm1649, %v2887, %v2885
        %v2890 = vmul.f32 %v2888, %v1656
        %v2891 = vmul.f32 %v2889, %v1660
        %s2892 = sld [smem:[#allocation11 + $0x88]]
        %v2893 = vstv %s2892
        %v2894 = vmul.f32 %v2893, %v2890
        %v2895 = vmul.f32 %v2893, %v2891
        %v2896 = vadd.f32 %v2864, %v2894
        %v2897 = vadd.f32 %v2865, %v2895
        %s2898 = sld [smem:[#allocation11 + $0x89]]
        %v2899 = vstv %s2898
        %v2900 = vmul.f32 %v2899, %v2890
        %v2901 = vmul.f32 %v2899, %v2891
        %v2902 = vadd.f32 %v2870, %v2900
        %v2903 = vadd.f32 %v2871, %v2901
        %s2904 = sld [smem:[#allocation11 + $0x8a]]
        %v2905 = vstv %s2904
        %v2906 = vmul.f32 %v2905, %v2890
        %v2907 = vmul.f32 %v2905, %v2891
        %v2908 = vadd.f32 %v2876, %v2906
        %v2909 = vadd.f32 %v2877, %v2907
        %s2910 = sld [smem:[#allocation11 + $0x8b]]
        %v2911 = vstv %s2910
        %v2912 = vmul.f32 %v2911, %v2890
        %v2913 = vmul.f32 %v2911, %v2891
        %v2914 = vadd.f32 %v2882, %v2912
        %v2915 = vadd.f32 %v2883, %v2913
        %2916 = vrot.lane.b32.xlu0 %v1807, 94
        %v2917 = vpop.permute.xlu0 %2916
        %2918 = vrot.lane.b32.xlu0 %v1808, 94
        %v2919 = vpop.permute.xlu0 %2918
        %v2920 = vsel %vm1649, %v2917, %v2919
        %v2921 = vsel %vm1649, %v2919, %v2917
        %v2922 = vmul.f32 %v2920, %v1656
        %v2923 = vmul.f32 %v2921, %v1660
        %s2924 = sld [smem:[#allocation11 + $0x8c]]
        %v2925 = vstv %s2924
        %v2926 = vmul.f32 %v2925, %v2922
        %v2927 = vmul.f32 %v2925, %v2923
        %v2928 = vadd.f32 %v2896, %v2926
        %v2929 = vadd.f32 %v2897, %v2927
        %s2930 = sld [smem:[#allocation11 + $0x8d]]
        %v2931 = vstv %s2930
        %v2932 = vmul.f32 %v2931, %v2922
        %v2933 = vmul.f32 %v2931, %v2923
        %v2934 = vadd.f32 %v2902, %v2932
        %v2935 = vadd.f32 %v2903, %v2933
        %s2936 = sld [smem:[#allocation11 + $0x8e]]
        %v2937 = vstv %s2936
        %v2938 = vmul.f32 %v2937, %v2922
        %v2939 = vmul.f32 %v2937, %v2923
        %v2940 = vadd.f32 %v2908, %v2938
        %v2941 = vadd.f32 %v2909, %v2939
        %s2942 = sld [smem:[#allocation11 + $0x8f]]
        %v2943 = vstv %s2942
        %v2944 = vmul.f32 %v2943, %v2922
        %v2945 = vmul.f32 %v2943, %v2923
        %v2946 = vadd.f32 %v2914, %v2944
        %v2947 = vadd.f32 %v2915, %v2945
        %s2948 = sld [smem:[#allocation12]]
        %v2949 = vstv %s2948
        %v2950 = vadd.f32 %v2928, %v2949
        %v2951 = vadd.f32 %v2929, %v2949
        %v2952 = vmax.f32 %v2950, 0.0
        %v2953 = vmax.f32 %v2951, 0.0
        %s2954 = sld [smem:[#allocation12 + $0x1]]
        %v2955 = vstv %s2954
        %v2956 = vadd.f32 %v2934, %v2955
        %v2957 = vadd.f32 %v2935, %v2955
        %v2958 = vmax.f32 %v2956, 0.0
        %v2959 = vmax.f32 %v2957, 0.0
        %s2960 = sld [smem:[#allocation12 + $0x2]]
        %v2961 = vstv %s2960
        %v2962 = vadd.f32 %v2940, %v2961
        %v2963 = vadd.f32 %v2941, %v2961
        %v2964 = vmax.f32 %v2962, 0.0
        %v2965 = vmax.f32 %v2963, 0.0
        %s2966 = sld [smem:[#allocation12 + $0x3]]
        %v2967 = vstv %s2966
        %v2968 = vadd.f32 %v2946, %v2967
        %v2969 = vadd.f32 %v2947, %v2967
        %v2970 = vmax.f32 %v2968, 0.0
        %v2971 = vmax.f32 %v2969, 0.0
        %v2974 = vcombine.low %v2952, %v2953
        %v2976 = vunpack.c.l.s4 1966171168
        %v2977 = vunpack.c.0.s8 %v2976
        %v2978 = vlaneseq
        %v2979 = vshrl.u32 %v2978, 7
        %v2980 = vsub.s32 %v2977, %v2979
        %v2981 = vrot.slane %v2974, %v2980
        %v2983 = vunpack.c.l.s4 1966171168
        %v2984 = vunpack.c.0.s8 %v2983
        %v2985 = vlaneseq
        %v2986 = vshrl.u32 %v2985, 7
        %v2987 = vsub.s32 %v2984, %v2986
        %v2988 = vrot.slane %v2981, %v2987
        %v2990 = vlaneseq
        %vm2991 = vcmp.ge.s32.totalorder %v2990, 0
        %vm2992 = vcmp.lt.s32.totalorder %v2990, 256
        %vm2993 = vmand %vm2991, %vm2992
        %2994 = vst.msk [vmem:[%s334] ss:$4 sm:$0x3] %vm2993, %v2988
        %v2997 = vcombine.low %v2958, %v2959
        %v2999 = vunpack.c.l.s4 1966171168
        %v3000 = vunpack.c.0.s8 %v2999
        %v3001 = vlaneseq
        %v3002 = vshrl.u32 %v3001, 7
        %v3003 = vsub.s32 %v3000, %v3002
        %v3004 = vrot.slane %v2997, %v3003
        %v3006 = vunpack.c.l.s4 1966171168
        %v3007 = vunpack.c.0.s8 %v3006
        %v3008 = vlaneseq
        %v3009 = vshrl.u32 %v3008, 7
        %v3010 = vsub.s32 %v3007, %v3009
        %v3011 = vrot.slane %v3004, %v3010
        %s3013 = scalar_lea.vmem %s334, 1 [#allocation14]
        %3014 = vst.msk [vmem:[%s3013] ss:$4 sm:$0x3] %vm2993, %v3011
        %v3017 = vcombine.low %v2964, %v2965
        %v3019 = vunpack.c.l.s4 1966171168
        %v3020 = vunpack.c.0.s8 %v3019
        %v3021 = vlaneseq
        %v3022 = vshrl.u32 %v3021, 7
        %v3023 = vsub.s32 %v3020, %v3022
        %v3024 = vrot.slane %v3017, %v3023
        %v3026 = vunpack.c.l.s4 1966171168
        %v3027 = vunpack.c.0.s8 %v3026
        %v3028 = vlaneseq
        %v3029 = vshrl.u32 %v3028, 7
        %v3030 = vsub.s32 %v3027, %v3029
        %v3031 = vrot.slane %v3024, %v3030
        %s3033 = scalar_lea.vmem %s334, 2 [#allocation14]
        %3034 = vst.msk [vmem:[%s3033] ss:$4 sm:$0x3] %vm2993, %v3031
        %v3037 = vcombine.low %v2970, %v2971
        %v3039 = vunpack.c.l.s4 1966171168
        %v3040 = vunpack.c.0.s8 %v3039
        %v3041 = vlaneseq
        %v3042 = vshrl.u32 %v3041, 7
        %v3043 = vsub.s32 %v3040, %v3042
        %v3044 = vrot.slane %v3037, %v3043
        %v3046 = vunpack.c.l.s4 1966171168
        %v3047 = vunpack.c.0.s8 %v3046
        %v3048 = vlaneseq
        %v3049 = vshrl.u32 %v3048, 7
        %v3050 = vsub.s32 %v3047, %v3049
        %v3051 = vrot.slane %v3044, %v3050
        %s3053 = scalar_lea.vmem %s334, 3 [#allocation14]
        %3054 = vst.msk [vmem:[%s3053] ss:$4 sm:$0x3] %vm2993, %v3051
        %s3055 = sand.u32 %s166, 1
        %s3056 = scalar_lea.sflag [#allocation4], %s3055
        %s3057 = sand.u32 %s166, 1
        %s3058 = smul.addr %s3057, 8
        %s3059 = scalar_lea.vmem [#allocation14], %s3058
        // Predicated region
        $region69: #{tpu_custom_call.1} parent=43 // pred_check
          %p3060 = pneg %p176
        $region70: #{tpu_custom_call.1} parent=43 // pred_check_branch
          %3062 = sbr.rel (%p3060) target = $region72
        $region71: #{tpu_custom_call.1} parent=43 // pred_region
          %s3064 = ssub.s32 128, 128
          %3065 = vsyncadd %s3056, %s3064
          %s3066 = smul.addr %s27, 2
          %s3067 = smul.addr %s3066, 64
          %s3068 = scalar_lea.hbm %s6, %s3067
          %s3070 = sshll.u32 %s3059, 4
          %s3071 = int_to_ptr.vmem [resolvable:$true] %s3070
          %3073 = dma.vmem_to_hbm [thread:$0]  %s3071, 128, %s3068, %s3056
        $region72: #{tpu_custom_call.1} parent=43 // pred_fallthru
          _
      $region44: #{tpu_custom_call.1} parent=5 // pred_fallthru
        _
      %p3074 = scmp.le.s32.totalorder 2, %s22
      // Predicated region
      $region73: #{tpu_custom_call.1} parent=5 // pred_check
        %p3075 = pneg %p3074
      $region74: #{tpu_custom_call.1} parent=5 // pred_check_branch
        %3077 = sbr.rel (%p3075) target = $region76
      $region75: #{tpu_custom_call.1} parent=5 // pred_region
        %s3078 = ssub.s32 %s22, 2
        // Predicated region
        $region77: #{tpu_custom_call.1} parent=75 // pred_check
          %p3079 = pneg %p182
        $region78: #{tpu_custom_call.1} parent=75 // pred_check_branch
          %3081 = sbr.rel (%p3079) target = $region80
        $region79: #{tpu_custom_call.1} parent=75 // pred_region
          %s3082 = sand.u32 %s167, 1
          %s3083 = scalar_lea.sflag [#allocation4], %s3082
          %s3084 = sand.u32 %s167, 1
          %s3085 = smul.addr %s3084, 8
          %s3086 = scalar_lea.vmem [#allocation14], %s3085
          %3087 = dma.done %s3083, 128
        $region80: #{tpu_custom_call.1} parent=75 // pred_fallthru
          _
      $region76: #{tpu_custom_call.1} parent=5 // pred_fallthru
        _
    $region6: #{tpu_custom_call.1} parent=1 // loop_footer
      %s26 = sadd.s32 1, %s22
    $region7: #{tpu_custom_call.1} parent=1 // loop_footer_branch
      %21 = sbr.rel target = $region3
    $region8: #{tpu_custom_call.1} parent=1 // loop_exit
      _
    %3088 = vsyncpa [#allocation3], 1
    %s3089 = scalar_lea.sflag [#allocation3], 1
    %3090 = vsyncpa %s3089, 1
    %3091 = vsyncpa [#allocation7], 1
    %3092 = vsyncpa [#allocation4], 1
    %s3093 = scalar_lea.sflag [#allocation4], 1
    %3094 = vsyncpa %s3093, 1
    %3095 = vsyncpa [#allocation5], 1
    %s3096 = scalar_lea.sflag [#allocation5], 1
    %3097 = vsyncpa %s3096, 1
    %3098 = vsyncpa [#allocation10], 1
    %3099 = vsyncpa [#allocation13], 1

</llo_original>
